<compile_context>
chip_gen: v7x
topology: tpu7x:2x2x1
jax: 0.10.0
libtpu: 0.0.40
codegen_flags: <defaults>
</compile_context>

<pallas_src>
import functools

import numpy as np
import jax
import jax.numpy as jnp
from jax import lax
from jax.experimental import pallas as pl
from jax.experimental.pallas import tpu as pltpu

EPS = 1e-5      # PyTorch BatchNorm2d default
SUB = 8         # sublane granule
LANE = 128      # lane granule
N_TAPS = 9      # 3x3 conv taps


def _round_up(x, m):
    return (x + m - 1) // m * m


# ------------------------------ fused Pallas kernel -----------------------------------


def _make_fused_kernel(m_valid, mp):
    """conv1+BN1+ReLU -> conv2+BN2 -> (+ 1x1 shortcut) -> ReLU, all resident in VMEM."""
    inv_m = np.float32(1.0 / m_valid)

    def kernel(p1_ref, w1_ref, g1_ref, be1_ref,          # stage 1
               s_ref, w2_ref, g2_ref, be2_ref,           # stage 2 (main branch)
               p3_ref, w3_ref, b3_ref,                   # shortcut (1x1 conv)
               o_ref):
        # Rows >= m_valid are zero padding (M=60 padded to MP=64); keep them out of the
        # BatchNorm batch statistics.
        rm = (lax.broadcasted_iota(jnp.int32, (mp, 1), 0) < m_valid).astype(jnp.float32)

        # ---- stage 1: conv1 (bias dropped: BN cancels it) + BN1(batch) + ReLU --------
        y1 = jnp.dot(p1_ref[...], w1_ref[...], preferred_element_type=jnp.float32)
        mean1 = jnp.sum(y1 * rm, axis=0, keepdims=True) * inv_m
        d1 = (y1 - mean1) * rm
        var1 = jnp.sum(d1 * d1, axis=0, keepdims=True) * inv_m        # biased (train)
        inv1 = g1_ref[...] * lax.rsqrt(var1 + EPS)                    # gamma folded in
        y1p = jnp.maximum((y1 - mean1) * inv1 + be1_ref[...], 0.0)    # (MP, C1P)

        # ---- stage 2 main: conv2 built in-register from y1p ---------------------------
        # 3x3 / pad-1 conv over the flattened (N,Ho,Wo) rows: for tap t the constant 0/1
        # matrix S_t shifts rows by (dh*Wo + dw) and zeroes rows whose source would fall
        # outside the image (conv zero padding) or into another batch element.
        def tap(t):
            piece = jnp.dot(s_ref[t], y1p, preferred_element_type=jnp.float32)
            return jnp.dot(piece, w2_ref[t], preferred_element_type=jnp.float32)

        y2 = tap(0)
        for t in range(1, N_TAPS):
            y2 = y2 + tap(t)                                          # (MP, COP)

        # BN2 (batch statistics over the valid rows)
        mean2 = jnp.sum(y2 * rm, axis=0, keepdims=True) * inv_m
        d2 = (y2 - mean2) * rm
        var2 = jnp.sum(d2 * d2, axis=0, keepdims=True) * inv_m
        inv2 = g2_ref[...] * lax.rsqrt(var2 + EPS)
        y2n = (y2 - mean2) * inv2 + be2_ref[...]

        # ---- shortcut: 1x1 strided conv (bias kept: no BN follows it) -----------------
        sc = jnp.dot(p3_ref[...], w3_ref[...],
                     preferred_element_type=jnp.float32) + b3_ref[...]

        o_ref[...] = jnp.maximum(y2n + sc, 0.0)

    return kernel


# --------------------------------- JAX-side glue --------------------------------------


def _im2col_3x3(x_nhwc, stride):
    """3x3 / pad=1 im2col.  (N,H,W,C) -> (N*Ho*Wo, 9*C), columns ordered (kh, kw, cin)."""
    n, h, w, c = x_nhwc.shape
    xp = jnp.pad(x_nhwc, ((0, 0), (1, 1), (1, 1), (0, 0)))
    ho = (h + 2 - 3) // stride + 1
    wo = (w + 2 - 3) // stride + 1
    cols = []
    for kh in range(3):
        for kw in range(3):
            cols.append(xp[:, kh:kh + ho * stride:stride, kw:kw + wo * stride:stride, :])
    patches = jnp.stack(cols, axis=3)                        # (N, Ho, Wo, 9, C)
    return patches.reshape(n * ho * wo, 9 * c), ho, wo


def _shift_matrices(n, ho, wo, mp):
    """Constant 0/1 matrices S (9, mp, mp): conv2's per-tap row shift + boundary mask.

    S[t, m, src] = 1  iff flattened row m = b*Ho*Wo + i*Wo + j (m < N*Ho*Wo) has a valid
    in-image source row src = m + dh*Wo + dw for tap t = (dh+1)*3 + (dw+1).  All-zero
    rows implement both the conv's zero padding and the M -> MP row padding.
    """
    m_valid = n * ho * wo
    idx = np.arange(m_valid)
    i = (idx // wo) % ho
    j = idx % wo
    s = np.zeros((N_TAPS, mp, mp), np.float32)
    t = 0
    for dh in (-1, 0, 1):
        for dw in (-1, 0, 1):
            src = idx + dh * wo + dw
            valid = (i + dh >= 0) & (i + dh < ho) & (j + dw >= 0) & (j + dw < wo)
            s[t, idx[valid], src[valid]] = 1.0
            t += 1
    return s


@functools.partial(jax.jit, static_argnames=("stride",))
def residual_forward(x_nchw, params, stride):
    """Residual(cin, cout, use_1x1conv=True, stride) forward (training-mode BN), NCHW->NCHW."""
    # TODO(synk): training-mode BatchNorm also updates running_mean/var as a stateful
    # side effect; that bookkeeping does not affect the returned tensor and is omitted.
    w1, b1, g1, be1, w2, b2, g2, be2, w3, b3 = params
    del b1, b2          # conv bias directly before training-mode BN cancels exactly
    n, cin, h, w = x_nchw.shape
    cout = w1.shape[0]
    f32 = jnp.float32

    x_nhwc = jnp.transpose(x_nchw, (0, 2, 3, 1)).astype(f32)

    # im2col for conv1 (3x3, pad 1, stride) and the strided 1x1-shortcut patches
    p1, ho, wo = _im2col_3x3(x_nhwc, stride)
    p3 = x_nhwc[:, ::stride, ::stride, :].reshape(n * ho * wo, cin)

    # padded / aligned sizes
    m = n * ho * wo
    mp = _round_up(m, SUB)              # rows:   60 -> 64
    k1p = _round_up(9 * cin, SUB)       # conv1 K: 27 -> 32
    c1p = _round_up(cout, SUB)          # conv1 out channels / conv2 per-tap K: 6 -> 8
    cinp = _round_up(cin, SUB)          # shortcut K: 3 -> 8
    cop = _round_up(cout, LANE)         # output lanes: 6 -> 128 (lane-dense store)

    pad2 = lambda a, r, c: jnp.pad(a.astype(f32),
                                   ((0, r - a.shape[0]), (0, c - a.shape[1])))
    row = lambda v, width: jnp.pad(v.astype(f32).reshape(1, -1),
                                   ((0, 0), (0, width - v.shape[0])))

    p1p = pad2(p1, mp, k1p)
    p3p = pad2(p3, mp, cinp)

    # conv1 weights -> (K1P, C1P) matmul form, rows ordered (kh, kw, cin) like the im2col
    w1m = jnp.transpose(w1, (2, 3, 1, 0)).reshape(9 * cin, cout)
    w1p = pad2(w1m, k1p, c1p)

    # conv2 weights -> per-tap slabs (9, C1P, COP), same tap order as the shift matrices
    w2m = jnp.transpose(w2, (2, 3, 1, 0)).astype(f32)                 # (3, 3, cout, cout)
    w2p = jnp.pad(w2m, ((0, 0), (0, 0), (0, c1p - cout), (0, cop - cout)))
    w2p = w2p.reshape(N_TAPS, c1p, cop)

    # shortcut 1x1 conv (bias kept)
    w3p = pad2(w3.reshape(cout, cin).T, cinp, cop)
    b3p = row(b3, cop)

    g1p, be1p = row(g1, c1p), row(be1, c1p)
    g2p, be2p = row(g2, cop), row(be2, cop)

    s = jnp.asarray(_shift_matrices(n, ho, wo, mp))                   # compile-time const

    kernel = _make_fused_kernel(m, mp)
    vmem = pl.BlockSpec(memory_space=pltpu.MemorySpace.VMEM)
    out = pl.pallas_call(
        kernel,
        out_shape=jax.ShapeDtypeStruct((mp, cop), f32),
        in_specs=[vmem] * 11,
        out_specs=vmem,
    )(p1p, w1p, g1p, be1p, s, w2p, g2p, be2p, p3p, w3p, b3p)

    y = out[:m, :cout].reshape(n, ho, wo, cout)
    return jnp.transpose(y, (0, 3, 1, 2))


# ------------------------------ pure-JAX reference ------------------------------------


def _ref_conv(x, w, b, stride, pad):
    y = lax.conv_general_dilated(
        x, w, window_strides=(stride, stride), padding=((pad, pad), (pad, pad)),
        dimension_numbers=("NCHW", "OIHW", "NCHW"))
    return y + b[None, :, None, None]


def _ref_bn_train(y, gamma, beta):
    mean = y.mean(axis=(0, 2, 3), keepdims=True)
    var = ((y - mean) ** 2).mean(axis=(0, 2, 3), keepdims=True)
    return (y - mean) / jnp.sqrt(var + EPS) * gamma[None, :, None, None] \
        + beta[None, :, None, None]


def residual_reference(x, params, stride):
    w1, b1, g1, be1, w2, b2, g2, be2, w3, b3 = params
    y = jnp.maximum(_ref_bn_train(_ref_conv(x, w1, b1, stride, 1), g1, be1), 0.0)
    y = _ref_bn_train(_ref_conv(y, w2, b2, 1, 1), g2, be2)
    sc = _ref_conv(x, w3, b3, stride, 0)
    return jnp.maximum(sc + y, 0.0)


# ------------------------------------ main ---------------------------------------------

if __name__ == "__main__":
    in_channels, out_channels, stride = 3, 6, 2
    key = jax.random.PRNGKey(0)
    kx, k1, k2, k3, kb1, kb2, kb3 = jax.random.split(key, 7)

    # Residual(3, 6, use_1x1conv=True, stride=2), input x = rand(4, 3, 10, 6)
    x = jax.random.uniform(kx, (4, in_channels, 10, 6), dtype=jnp.float32)

    def u(k, shape, fan_in):
        bound = 1.0 / float(np.sqrt(fan_in))
        return jax.random.uniform(k, shape, jnp.float32, -bound, bound)

    w1 = u(k1, (out_channels, in_channels, 3, 3), in_channels * 9)
    b1 = u(kb1, (out_channels,), in_channels * 9)
    w2 = u(k2, (out_channels, out_channels, 3, 3), out_channels * 9)
    b2 = u(kb2, (out_channels,), out_channels * 9)
    w3 = u(k3, (out_channels, in_channels, 1, 1), in_channels)
    b3 = u(kb3, (out_channels,), in_channels)
    g1 = jnp.ones((out_channels,), jnp.float32)    # BatchNorm2d default affine init
    be1 = jnp.zeros((out_channels,), jnp.float32)
    g2 = jnp.ones((out_channels,), jnp.float32)
    be2 = jnp.zeros((out_channels,), jnp.float32)
    params = (w1, b1, g1, be1, w2, b2, g2, be2, w3, b3)

    y = jax.block_until_ready(residual_forward(x, params, stride=stride))
    y_ref = jax.block_until_ready(residual_reference(x, params, stride))

    assert y.shape == (4, out_channels, 5, 3), y.shape
    err = float(jnp.max(jnp.abs(y - y_ref)))
    assert jnp.allclose(y, y_ref, atol=1e-4, rtol=1e-4), err
    print("KERNEL_OK")
</pallas_src>

<mosaic_0001>
module attributes {stable_mosaic.version = 11 : i64} {
  func.func @kernel(%arg0: memref<64x32xf32, #tpu.memory_space<vmem>>, %arg1: memref<32x8xf32, #tpu.memory_space<vmem>>, %arg2: memref<1x8xf32, #tpu.memory_space<vmem>>, %arg3: memref<1x8xf32, #tpu.memory_space<vmem>>, %arg4: memref<9x64x64xf32, #tpu.memory_space<vmem>>, %arg5: memref<9x8x128xf32, #tpu.memory_space<vmem>>, %arg6: memref<1x128xf32, #tpu.memory_space<vmem>>, %arg7: memref<1x128xf32, #tpu.memory_space<vmem>>, %arg8: memref<64x8xf32, #tpu.memory_space<vmem>>, %arg9: memref<8x128xf32, #tpu.memory_space<vmem>>, %arg10: memref<1x128xf32, #tpu.memory_space<vmem>>, %arg11: memref<64x128xf32, #tpu.memory_space<vmem>>) attributes {dimension_semantics = [], scalar_prefetch = 0 : i64, scratch_operands = 0 : i64, tpu.core_type = #tpu.core_type<tc>} {
    %0 = tpu.iota {dimensions = array<i32: 0>} : vector<64x1xi32>
    %c60_i32 = arith.constant 60 : i32
    %1 = vector.broadcast %c60_i32 : i32 to vector<64x1xi32>
    %2 = arith.cmpi slt, %0, %1 : vector<64x1xi32>
    %3 = arith.extui %2 : vector<64x1xi1> to vector<64x1xi32>
    %4 = arith.sitofp %3 : vector<64x1xi32> to vector<64x1xf32>
    %c0 = arith.constant 0 : index
    %c0_0 = arith.constant 0 : index
    %5 = vector.load %arg0[%c0, %c0_0] : memref<64x32xf32, #tpu.memory_space<vmem>>, vector<64x32xf32>
    %c0_1 = arith.constant 0 : index
    %c0_2 = arith.constant 0 : index
    %6 = vector.load %arg1[%c0_1, %c0_2] : memref<32x8xf32, #tpu.memory_space<vmem>>, vector<32x8xf32>
    %cst = arith.constant dense<0.000000e+00> : vector<64x8xf32>
    %7 = tpu.matmul %5, %6, %cst {dimension_numbers = #tpu.dot_dimension_numbers<[1], [0], [0], [1], [0, 0, 1, 1], [], []>} : vector<64x32xf32>, vector<32x8xf32>, vector<64x8xf32> -> vector<64x8xf32>
    %8 = vector.broadcast %4 : vector<64x1xf32> to vector<64x8xf32>
    %9 = arith.mulf %7, %8 : vector<64x8xf32>
    %cst_3 = arith.constant dense<0.000000e+00> : vector<8xf32>
    %10 = vector.multi_reduction <add>, %9, %cst_3 [0] : vector<64x8xf32> to vector<8xf32>
    %11 = vector.shape_cast %10 : vector<8xf32> to vector<1x8xf32>
    %cst_4 = arith.constant 0.0166666675 : f32
    %12 = vector.broadcast %cst_4 : f32 to vector<1x8xf32>
    %13 = arith.mulf %11, %12 : vector<1x8xf32>
    %14 = vector.broadcast %13 : vector<1x8xf32> to vector<64x8xf32>
    %15 = arith.subf %7, %14 : vector<64x8xf32>
    %16 = vector.broadcast %4 : vector<64x1xf32> to vector<64x8xf32>
    %17 = arith.mulf %15, %16 : vector<64x8xf32>
    %18 = arith.mulf %17, %17 : vector<64x8xf32>
    %cst_5 = arith.constant dense<0.000000e+00> : vector<8xf32>
    %19 = vector.multi_reduction <add>, %18, %cst_5 [0] : vector<64x8xf32> to vector<8xf32>
    %20 = vector.shape_cast %19 : vector<8xf32> to vector<1x8xf32>
    %cst_6 = arith.constant 0.0166666675 : f32
    %21 = vector.broadcast %cst_6 : f32 to vector<1x8xf32>
    %22 = arith.mulf %20, %21 : vector<1x8xf32>
    %c0_7 = arith.constant 0 : index
    %c0_8 = arith.constant 0 : index
    %23 = vector.load %arg2[%c0_7, %c0_8] : memref<1x8xf32, #tpu.memory_space<vmem>>, vector<1x8xf32>
    %cst_9 = arith.constant 9.99999974E-6 : f32
    %24 = vector.broadcast %cst_9 : f32 to vector<1x8xf32>
    %25 = arith.addf %22, %24 : vector<1x8xf32>
    %26 = math.rsqrt %25 : vector<1x8xf32>
    %27 = arith.mulf %23, %26 : vector<1x8xf32>
    %28 = vector.broadcast %13 : vector<1x8xf32> to vector<64x8xf32>
    %29 = arith.subf %7, %28 : vector<64x8xf32>
    %30 = vector.broadcast %27 : vector<1x8xf32> to vector<64x8xf32>
    %31 = arith.mulf %29, %30 : vector<64x8xf32>
    %c0_10 = arith.constant 0 : index
    %c0_11 = arith.constant 0 : index
    %32 = vector.load %arg3[%c0_10, %c0_11] : memref<1x8xf32, #tpu.memory_space<vmem>>, vector<1x8xf32>
    %33 = vector.broadcast %32 : vector<1x8xf32> to vector<64x8xf32>
    %34 = arith.addf %31, %33 : vector<64x8xf32>
    %cst_12 = arith.constant 0.000000e+00 : f32
    %35 = vector.broadcast %cst_12 : f32 to vector<64x8xf32>
    %36 = arith.maximumf %34, %35 : vector<64x8xf32>
    %c0_13 = arith.constant 0 : index
    %c0_14 = arith.constant 0 : index
    %c0_15 = arith.constant 0 : index
    %37 = vector.load %arg4[%c0_13, %c0_14, %c0_15] : memref<9x64x64xf32, #tpu.memory_space<vmem>>, vector<1x64x64xf32>
    %38 = vector.shape_cast %37 : vector<1x64x64xf32> to vector<64x64xf32>
    %cst_16 = arith.constant dense<0.000000e+00> : vector<64x8xf32>
    %39 = tpu.matmul %38, %36, %cst_16 {dimension_numbers = #tpu.dot_dimension_numbers<[1], [0], [0], [1], [0, 0, 1, 1], [], []>} : vector<64x64xf32>, vector<64x8xf32>, vector<64x8xf32> -> vector<64x8xf32>
    %c0_17 = arith.constant 0 : index
    %c0_18 = arith.constant 0 : index
    %c0_19 = arith.constant 0 : index
    %40 = vector.load %arg5[%c0_17, %c0_18, %c0_19] : memref<9x8x128xf32, #tpu.memory_space<vmem>>, vector<1x8x128xf32>
    %41 = vector.shape_cast %40 : vector<1x8x128xf32> to vector<8x128xf32>
    %cst_20 = arith.constant dense<0.000000e+00> : vector<64x128xf32>
    %42 = tpu.matmul %39, %41, %cst_20 {dimension_numbers = #tpu.dot_dimension_numbers<[1], [0], [0], [1], [0, 0, 1, 1], [], []>} : vector<64x8xf32>, vector<8x128xf32>, vector<64x128xf32> -> vector<64x128xf32>
    %c1 = arith.constant 1 : index
    %c0_21 = arith.constant 0 : index
    %c0_22 = arith.constant 0 : index
    %43 = vector.load %arg4[%c1, %c0_21, %c0_22] : memref<9x64x64xf32, #tpu.memory_space<vmem>>, vector<1x64x64xf32>
    %44 = vector.shape_cast %43 : vector<1x64x64xf32> to vector<64x64xf32>
    %cst_23 = arith.constant dense<0.000000e+00> : vector<64x8xf32>
    %45 = tpu.matmul %44, %36, %cst_23 {dimension_numbers = #tpu.dot_dimension_numbers<[1], [0], [0], [1], [0, 0, 1, 1], [], []>} : vector<64x64xf32>, vector<64x8xf32>, vector<64x8xf32> -> vector<64x8xf32>
    %c1_24 = arith.constant 1 : index
    %c0_25 = arith.constant 0 : index
    %c0_26 = arith.constant 0 : index
    %46 = vector.load %arg5[%c1_24, %c0_25, %c0_26] : memref<9x8x128xf32, #tpu.memory_space<vmem>>, vector<1x8x128xf32>
    %47 = vector.shape_cast %46 : vector<1x8x128xf32> to vector<8x128xf32>
    %cst_27 = arith.constant dense<0.000000e+00> : vector<64x128xf32>
    %48 = tpu.matmul %45, %47, %cst_27 {dimension_numbers = #tpu.dot_dimension_numbers<[1], [0], [0], [1], [0, 0, 1, 1], [], []>} : vector<64x8xf32>, vector<8x128xf32>, vector<64x128xf32> -> vector<64x128xf32>
    %49 = arith.addf %42, %48 : vector<64x128xf32>
    %c2 = arith.constant 2 : index
    %c0_28 = arith.constant 0 : index
    %c0_29 = arith.constant 0 : index
    %50 = vector.load %arg4[%c2, %c0_28, %c0_29] : memref<9x64x64xf32, #tpu.memory_space<vmem>>, vector<1x64x64xf32>
    %51 = vector.shape_cast %50 : vector<1x64x64xf32> to vector<64x64xf32>
    %cst_30 = arith.constant dense<0.000000e+00> : vector<64x8xf32>
    %52 = tpu.matmul %51, %36, %cst_30 {dimension_numbers = #tpu.dot_dimension_numbers<[1], [0], [0], [1], [0, 0, 1, 1], [], []>} : vector<64x64xf32>, vector<64x8xf32>, vector<64x8xf32> -> vector<64x8xf32>
    %c2_31 = arith.constant 2 : index
    %c0_32 = arith.constant 0 : index
    %c0_33 = arith.constant 0 : index
    %53 = vector.load %arg5[%c2_31, %c0_32, %c0_33] : memref<9x8x128xf32, #tpu.memory_space<vmem>>, vector<1x8x128xf32>
    %54 = vector.shape_cast %53 : vector<1x8x128xf32> to vector<8x128xf32>
    %cst_34 = arith.constant dense<0.000000e+00> : vector<64x128xf32>
    %55 = tpu.matmul %52, %54, %cst_34 {dimension_numbers = #tpu.dot_dimension_numbers<[1], [0], [0], [1], [0, 0, 1, 1], [], []>} : vector<64x8xf32>, vector<8x128xf32>, vector<64x128xf32> -> vector<64x128xf32>
    %56 = arith.addf %49, %55 : vector<64x128xf32>
    %c3 = arith.constant 3 : index
    %c0_35 = arith.constant 0 : index
    %c0_36 = arith.constant 0 : index
    %57 = vector.load %arg4[%c3, %c0_35, %c0_36] : memref<9x64x64xf32, #tpu.memory_space<vmem>>, vector<1x64x64xf32>
    %58 = vector.shape_cast %57 : vector<1x64x64xf32> to vector<64x64xf32>
    %cst_37 = arith.constant dense<0.000000e+00> : vector<64x8xf32>
    %59 = tpu.matmul %58, %36, %cst_37 {dimension_numbers = #tpu.dot_dimension_numbers<[1], [0], [0], [1], [0, 0, 1, 1], [], []>} : vector<64x64xf32>, vector<64x8xf32>, vector<64x8xf32> -> vector<64x8xf32>
    %c3_38 = arith.constant 3 : index
    %c0_39 = arith.constant 0 : index
    %c0_40 = arith.constant 0 : index
    %60 = vector.load %arg5[%c3_38, %c0_39, %c0_40] : memref<9x8x128xf32, #tpu.memory_space<vmem>>, vector<1x8x128xf32>
    %61 = vector.shape_cast %60 : vector<1x8x128xf32> to vector<8x128xf32>
    %cst_41 = arith.constant dense<0.000000e+00> : vector<64x128xf32>
    %62 = tpu.matmul %59, %61, %cst_41 {dimension_numbers = #tpu.dot_dimension_numbers<[1], [0], [0], [1], [0, 0, 1, 1], [], []>} : vector<64x8xf32>, vector<8x128xf32>, vector<64x128xf32> -> vector<64x128xf32>
    %63 = arith.addf %56, %62 : vector<64x128xf32>
    %c4 = arith.constant 4 : index
    %c0_42 = arith.constant 0 : index
    %c0_43 = arith.constant 0 : index
    %64 = vector.load %arg4[%c4, %c0_42, %c0_43] : memref<9x64x64xf32, #tpu.memory_space<vmem>>, vector<1x64x64xf32>
    %65 = vector.shape_cast %64 : vector<1x64x64xf32> to vector<64x64xf32>
    %cst_44 = arith.constant dense<0.000000e+00> : vector<64x8xf32>
    %66 = tpu.matmul %65, %36, %cst_44 {dimension_numbers = #tpu.dot_dimension_numbers<[1], [0], [0], [1], [0, 0, 1, 1], [], []>} : vector<64x64xf32>, vector<64x8xf32>, vector<64x8xf32> -> vector<64x8xf32>
    %c4_45 = arith.constant 4 : index
    %c0_46 = arith.constant 0 : index
    %c0_47 = arith.constant 0 : index
    %67 = vector.load %arg5[%c4_45, %c0_46, %c0_47] : memref<9x8x128xf32, #tpu.memory_space<vmem>>, vector<1x8x128xf32>
    %68 = vector.shape_cast %67 : vector<1x8x128xf32> to vector<8x128xf32>
    %cst_48 = arith.constant dense<0.000000e+00> : vector<64x128xf32>
    %69 = tpu.matmul %66, %68, %cst_48 {dimension_numbers = #tpu.dot_dimension_numbers<[1], [0], [0], [1], [0, 0, 1, 1], [], []>} : vector<64x8xf32>, vector<8x128xf32>, vector<64x128xf32> -> vector<64x128xf32>
    %70 = arith.addf %63, %69 : vector<64x128xf32>
    %c5 = arith.constant 5 : index
    %c0_49 = arith.constant 0 : index
    %c0_50 = arith.constant 0 : index
    %71 = vector.load %arg4[%c5, %c0_49, %c0_50] : memref<9x64x64xf32, #tpu.memory_space<vmem>>, vector<1x64x64xf32>
    %72 = vector.shape_cast %71 : vector<1x64x64xf32> to vector<64x64xf32>
    %cst_51 = arith.constant dense<0.000000e+00> : vector<64x8xf32>
    %73 = tpu.matmul %72, %36, %cst_51 {dimension_numbers = #tpu.dot_dimension_numbers<[1], [0], [0], [1], [0, 0, 1, 1], [], []>} : vector<64x64xf32>, vector<64x8xf32>, vector<64x8xf32> -> vector<64x8xf32>
    %c5_52 = arith.constant 5 : index
    %c0_53 = arith.constant 0 : index
    %c0_54 = arith.constant 0 : index
    %74 = vector.load %arg5[%c5_52, %c0_53, %c0_54] : memref<9x8x128xf32, #tpu.memory_space<vmem>>, vector<1x8x128xf32>
    %75 = vector.shape_cast %74 : vector<1x8x128xf32> to vector<8x128xf32>
    %cst_55 = arith.constant dense<0.000000e+00> : vector<64x128xf32>
    %76 = tpu.matmul %73, %75, %cst_55 {dimension_numbers = #tpu.dot_dimension_numbers<[1], [0], [0], [1], [0, 0, 1, 1], [], []>} : vector<64x8xf32>, vector<8x128xf32>, vector<64x128xf32> -> vector<64x128xf32>
    %77 = arith.addf %70, %76 : vector<64x128xf32>
    %c6 = arith.constant 6 : index
    %c0_56 = arith.constant 0 : index
    %c0_57 = arith.constant 0 : index
    %78 = vector.load %arg4[%c6, %c0_56, %c0_57] : memref<9x64x64xf32, #tpu.memory_space<vmem>>, vector<1x64x64xf32>
    %79 = vector.shape_cast %78 : vector<1x64x64xf32> to vector<64x64xf32>
    %cst_58 = arith.constant dense<0.000000e+00> : vector<64x8xf32>
    %80 = tpu.matmul %79, %36, %cst_58 {dimension_numbers = #tpu.dot_dimension_numbers<[1], [0], [0], [1], [0, 0, 1, 1], [], []>} : vector<64x64xf32>, vector<64x8xf32>, vector<64x8xf32> -> vector<64x8xf32>
    %c6_59 = arith.constant 6 : index
    %c0_60 = arith.constant 0 : index
    %c0_61 = arith.constant 0 : index
    %81 = vector.load %arg5[%c6_59, %c0_60, %c0_61] : memref<9x8x128xf32, #tpu.memory_space<vmem>>, vector<1x8x128xf32>
    %82 = vector.shape_cast %81 : vector<1x8x128xf32> to vector<8x128xf32>
    %cst_62 = arith.constant dense<0.000000e+00> : vector<64x128xf32>
    %83 = tpu.matmul %80, %82, %cst_62 {dimension_numbers = #tpu.dot_dimension_numbers<[1], [0], [0], [1], [0, 0, 1, 1], [], []>} : vector<64x8xf32>, vector<8x128xf32>, vector<64x128xf32> -> vector<64x128xf32>
    %84 = arith.addf %77, %83 : vector<64x128xf32>
    %c7 = arith.constant 7 : index
    %c0_63 = arith.constant 0 : index
    %c0_64 = arith.constant 0 : index
    %85 = vector.load %arg4[%c7, %c0_63, %c0_64] : memref<9x64x64xf32, #tpu.memory_space<vmem>>, vector<1x64x64xf32>
    %86 = vector.shape_cast %85 : vector<1x64x64xf32> to vector<64x64xf32>
    %cst_65 = arith.constant dense<0.000000e+00> : vector<64x8xf32>
    %87 = tpu.matmul %86, %36, %cst_65 {dimension_numbers = #tpu.dot_dimension_numbers<[1], [0], [0], [1], [0, 0, 1, 1], [], []>} : vector<64x64xf32>, vector<64x8xf32>, vector<64x8xf32> -> vector<64x8xf32>
    %c7_66 = arith.constant 7 : index
    %c0_67 = arith.constant 0 : index
    %c0_68 = arith.constant 0 : index
    %88 = vector.load %arg5[%c7_66, %c0_67, %c0_68] : memref<9x8x128xf32, #tpu.memory_space<vmem>>, vector<1x8x128xf32>
    %89 = vector.shape_cast %88 : vector<1x8x128xf32> to vector<8x128xf32>
    %cst_69 = arith.constant dense<0.000000e+00> : vector<64x128xf32>
    %90 = tpu.matmul %87, %89, %cst_69 {dimension_numbers = #tpu.dot_dimension_numbers<[1], [0], [0], [1], [0, 0, 1, 1], [], []>} : vector<64x8xf32>, vector<8x128xf32>, vector<64x128xf32> -> vector<64x128xf32>
    %91 = arith.addf %84, %90 : vector<64x128xf32>
    %c8 = arith.constant 8 : index
    %c0_70 = arith.constant 0 : index
    %c0_71 = arith.constant 0 : index
    %92 = vector.load %arg4[%c8, %c0_70, %c0_71] : memref<9x64x64xf32, #tpu.memory_space<vmem>>, vector<1x64x64xf32>
    %93 = vector.shape_cast %92 : vector<1x64x64xf32> to vector<64x64xf32>
    %cst_72 = arith.constant dense<0.000000e+00> : vector<64x8xf32>
    %94 = tpu.matmul %93, %36, %cst_72 {dimension_numbers = #tpu.dot_dimension_numbers<[1], [0], [0], [1], [0, 0, 1, 1], [], []>} : vector<64x64xf32>, vector<64x8xf32>, vector<64x8xf32> -> vector<64x8xf32>
    %c8_73 = arith.constant 8 : index
    %c0_74 = arith.constant 0 : index
    %c0_75 = arith.constant 0 : index
    %95 = vector.load %arg5[%c8_73, %c0_74, %c0_75] : memref<9x8x128xf32, #tpu.memory_space<vmem>>, vector<1x8x128xf32>
    %96 = vector.shape_cast %95 : vector<1x8x128xf32> to vector<8x128xf32>
    %cst_76 = arith.constant dense<0.000000e+00> : vector<64x128xf32>
    %97 = tpu.matmul %94, %96, %cst_76 {dimension_numbers = #tpu.dot_dimension_numbers<[1], [0], [0], [1], [0, 0, 1, 1], [], []>} : vector<64x8xf32>, vector<8x128xf32>, vector<64x128xf32> -> vector<64x128xf32>
    %98 = arith.addf %91, %97 : vector<64x128xf32>
    %99 = vector.broadcast %4 : vector<64x1xf32> to vector<64x128xf32>
    %100 = arith.mulf %98, %99 : vector<64x128xf32>
    %cst_77 = arith.constant dense<0.000000e+00> : vector<128xf32>
    %101 = vector.multi_reduction <add>, %100, %cst_77 [0] : vector<64x128xf32> to vector<128xf32>
    %102 = vector.shape_cast %101 : vector<128xf32> to vector<1x128xf32>
    %cst_78 = arith.constant 0.0166666675 : f32
    %103 = vector.broadcast %cst_78 : f32 to vector<1x128xf32>
    %104 = arith.mulf %102, %103 : vector<1x128xf32>
    %105 = vector.broadcast %104 : vector<1x128xf32> to vector<64x128xf32>
    %106 = arith.subf %98, %105 : vector<64x128xf32>
    %107 = vector.broadcast %4 : vector<64x1xf32> to vector<64x128xf32>
    %108 = arith.mulf %106, %107 : vector<64x128xf32>
    %109 = arith.mulf %108, %108 : vector<64x128xf32>
    %cst_79 = arith.constant dense<0.000000e+00> : vector<128xf32>
    %110 = vector.multi_reduction <add>, %109, %cst_79 [0] : vector<64x128xf32> to vector<128xf32>
    %111 = vector.shape_cast %110 : vector<128xf32> to vector<1x128xf32>
    %cst_80 = arith.constant 0.0166666675 : f32
    %112 = vector.broadcast %cst_80 : f32 to vector<1x128xf32>
    %113 = arith.mulf %111, %112 : vector<1x128xf32>
    %c0_81 = arith.constant 0 : index
    %c0_82 = arith.constant 0 : index
    %114 = vector.load %arg6[%c0_81, %c0_82] : memref<1x128xf32, #tpu.memory_space<vmem>>, vector<1x128xf32>
    %cst_83 = arith.constant 9.99999974E-6 : f32
    %115 = vector.broadcast %cst_83 : f32 to vector<1x128xf32>
    %116 = arith.addf %113, %115 : vector<1x128xf32>
    %117 = math.rsqrt %116 : vector<1x128xf32>
    %118 = arith.mulf %114, %117 : vector<1x128xf32>
    %119 = vector.broadcast %104 : vector<1x128xf32> to vector<64x128xf32>
    %120 = arith.subf %98, %119 : vector<64x128xf32>
    %121 = vector.broadcast %118 : vector<1x128xf32> to vector<64x128xf32>
    %122 = arith.mulf %120, %121 : vector<64x128xf32>
    %c0_84 = arith.constant 0 : index
    %c0_85 = arith.constant 0 : index
    %123 = vector.load %arg7[%c0_84, %c0_85] : memref<1x128xf32, #tpu.memory_space<vmem>>, vector<1x128xf32>
    %124 = vector.broadcast %123 : vector<1x128xf32> to vector<64x128xf32>
    %125 = arith.addf %122, %124 : vector<64x128xf32>
    %c0_86 = arith.constant 0 : index
    %c0_87 = arith.constant 0 : index
    %126 = vector.load %arg8[%c0_86, %c0_87] : memref<64x8xf32, #tpu.memory_space<vmem>>, vector<64x8xf32>
    %c0_88 = arith.constant 0 : index
    %c0_89 = arith.constant 0 : index
    %127 = vector.load %arg9[%c0_88, %c0_89] : memref<8x128xf32, #tpu.memory_space<vmem>>, vector<8x128xf32>
    %cst_90 = arith.constant dense<0.000000e+00> : vector<64x128xf32>
    %128 = tpu.matmul %126, %127, %cst_90 {dimension_numbers = #tpu.dot_dimension_numbers<[1], [0], [0], [1], [0, 0, 1, 1], [], []>} : vector<64x8xf32>, vector<8x128xf32>, vector<64x128xf32> -> vector<64x128xf32>
    %c0_91 = arith.constant 0 : index
    %c0_92 = arith.constant 0 : index
    %129 = vector.load %arg10[%c0_91, %c0_92] : memref<1x128xf32, #tpu.memory_space<vmem>>, vector<1x128xf32>
    %130 = vector.broadcast %129 : vector<1x128xf32> to vector<64x128xf32>
    %131 = arith.addf %128, %130 : vector<64x128xf32>
    %132 = arith.addf %125, %131 : vector<64x128xf32>
    %cst_93 = arith.constant 0.000000e+00 : f32
    %133 = vector.broadcast %cst_93 : f32 to vector<64x128xf32>
    %134 = arith.maximumf %132, %133 : vector<64x128xf32>
    %c0_94 = arith.constant 0 : index
    %c0_95 = arith.constant 0 : index
    %135 = vector.load %arg11[%c0_94, %c0_95] : memref<64x128xf32, #tpu.memory_space<vmem>>, vector<64x128xf32>
    tpu.vector_store %arg11[%c0_94, %c0_95], %134 {strides = array<i32>} : memref<64x128xf32, #tpu.memory_space<vmem>>, vector<64x128xf32>,
    return
  }
}

</mosaic_0001>

<llo_original>
// kernel: residual_forward.1
$region0: #{residual_forward.1}
  #allocation0 [shape = 'u32[]', space=smem, size = 0x4, offset = 0x4, fixed_abs, tag = 'smem constant byte address 0x4 - core index']
  #allocation1 [shape = 'u32[144,128]{1,0:T(1,128)}', space=vmem, size = 0x12000, scoped, tag = 'internal scratch']
  %s0 = inlined_call_operand.vmem [shape: f32[64,32], index: 0, kind: input, shape index: {}]
  %s1 = inlined_call_operand.vmem [shape: f32[32,8], index: 1, kind: input, shape index: {}]
  %s2 = inlined_call_operand.vmem [shape: f32[1,8], index: 2, kind: input, shape index: {}]
  %s3 = inlined_call_operand.vmem [shape: f32[1,8], index: 3, kind: input, shape index: {}]
  %s4 = inlined_call_operand.vmem [shape: f32[9,64,64], index: 4, kind: input, shape index: {}]
  %s5 = inlined_call_operand.vmem [shape: f32[9,8,128], index: 5, kind: input, shape index: {}]
  %s6 = inlined_call_operand.vmem [shape: f32[1,128], index: 6, kind: input, shape index: {}]
  %s7 = inlined_call_operand.vmem [shape: f32[1,128], index: 7, kind: input, shape index: {}]
  %s8 = inlined_call_operand.vmem [shape: f32[64,8], index: 8, kind: input, shape index: {}]
  %s9 = inlined_call_operand.vmem [shape: f32[8,128], index: 9, kind: input, shape index: {}]
  %s10 = inlined_call_operand.vmem [shape: f32[1,128], index: 10, kind: input, shape index: {}]
  %s11 = inlined_call_operand.vmem [shape: f32[64,128], index: 11, kind: output, shape index: {}]
  %s12 = sld [smem:[#allocation0]]
  $region54: #{residual_forward.1} parent=0
    _
  %s14 = ssub.s32 1, %s12
  %s15 = scalar_select 0, %s14, %s12
  // Predicated region
  $region2: #{residual_forward.1} parent=0 // pred_check
    _
  $region3: #{residual_forward.1} parent=0 // pred_check_branch
    %17 = sbr.rel (0) target = $region5
  $region4: #{residual_forward.1} parent=0 // pred_region
    _
  $region5: #{residual_forward.1} parent=0 // pred_fallthru
    _
  // Predicated region
  $region6: #{residual_forward.1} parent=0 // pred_check
    _
  $region7: #{residual_forward.1} parent=0 // pred_check_branch
    %19 = sbr.rel (0) target = $region9
  $region8: #{residual_forward.1} parent=0 // pred_region
    _
  $region9: #{residual_forward.1} parent=0 // pred_fallthru
    _
  // Predicated region
  $region10: #{residual_forward.1} parent=0 // pred_check
    _
  $region11: #{residual_forward.1} parent=0 // pred_check_branch
    %21 = sbr.rel (0) target = $region13
  $region12: #{residual_forward.1} parent=0 // pred_region
    _
  $region13: #{residual_forward.1} parent=0 // pred_fallthru
    _
  // Predicated region
  $region14: #{residual_forward.1} parent=0 // pred_check
    _
  $region15: #{residual_forward.1} parent=0 // pred_check_branch
    %23 = sbr.rel (0) target = $region17
  $region16: #{residual_forward.1} parent=0 // pred_region
    _
  $region17: #{residual_forward.1} parent=0 // pred_fallthru
    _
  // Predicated region
  $region18: #{residual_forward.1} parent=0 // pred_check
    _
  $region19: #{residual_forward.1} parent=0 // pred_check_branch
    %25 = sbr.rel (0) target = $region21
  $region20: #{residual_forward.1} parent=0 // pred_region
    _
  $region21: #{residual_forward.1} parent=0 // pred_fallthru
    _
  // Predicated region
  $region22: #{residual_forward.1} parent=0 // pred_check
    _
  $region23: #{residual_forward.1} parent=0 // pred_check_branch
    %27 = sbr.rel (0) target = $region25
  $region24: #{residual_forward.1} parent=0 // pred_region
    _
  $region25: #{residual_forward.1} parent=0 // pred_fallthru
    _
  // Predicated region
  $region26: #{residual_forward.1} parent=0 // pred_check
    _
  $region27: #{residual_forward.1} parent=0 // pred_check_branch
    %29 = sbr.rel (0) target = $region29
  $region28: #{residual_forward.1} parent=0 // pred_region
    _
  $region29: #{residual_forward.1} parent=0 // pred_fallthru
    _
  // Predicated region
  $region30: #{residual_forward.1} parent=0 // pred_check
    _
  $region31: #{residual_forward.1} parent=0 // pred_check_branch
    %31 = sbr.rel (0) target = $region33
  $region32: #{residual_forward.1} parent=0 // pred_region
    _
  $region33: #{residual_forward.1} parent=0 // pred_fallthru
    _
  // Predicated region
  $region34: #{residual_forward.1} parent=0 // pred_check
    _
  $region35: #{residual_forward.1} parent=0 // pred_check_branch
    %33 = sbr.rel (0) target = $region37
  $region36: #{residual_forward.1} parent=0 // pred_region
    _
  $region37: #{residual_forward.1} parent=0 // pred_fallthru
    _
  // Predicated region
  $region38: #{residual_forward.1} parent=0 // pred_check
    _
  $region39: #{residual_forward.1} parent=0 // pred_check_branch
    %35 = sbr.rel (0) target = $region41
  $region40: #{residual_forward.1} parent=0 // pred_region
    _
  $region41: #{residual_forward.1} parent=0 // pred_fallthru
    _
  // Predicated region
  $region42: #{residual_forward.1} parent=0 // pred_check
    _
  $region43: #{residual_forward.1} parent=0 // pred_check_branch
    %37 = sbr.rel (0) target = $region45
  $region44: #{residual_forward.1} parent=0 // pred_region
    _
  $region45: #{residual_forward.1} parent=0 // pred_fallthru
    _
  %v38 = vlaneseq
  %v39 = vshrl.u32 %v38, 7
  %v40 = vadd.s32 %v39, 8
  %v41 = vadd.s32 %v39, 16
  %v42 = vadd.s32 %v39, 24
  %v43 = vadd.s32 %v39, 32
  %v44 = vadd.s32 %v39, 40
  %v45 = vadd.s32 %v39, 48
  %v46 = vadd.s32 %v39, 56
  %vm47 = vcmp.lt.s32.totalorder %v39, 60
  %vm48 = vcmp.lt.s32.totalorder %v40, 60
  %vm49 = vcmp.lt.s32.totalorder %v41, 60
  %vm50 = vcmp.lt.s32.totalorder %v42, 60
  %vm51 = vcmp.lt.s32.totalorder %v43, 60
  %vm52 = vcmp.lt.s32.totalorder %v44, 60
  %vm53 = vcmp.lt.s32.totalorder %v45, 60
  %vm54 = vcmp.lt.s32.totalorder %v46, 60
  %v55 = vsel %vm47, 1, 0
  %v56 = vsel %vm48, 1, 0
  %v57 = vsel %vm49, 1, 0
  %v58 = vsel %vm50, 1, 0
  %v59 = vsel %vm51, 1, 0
  %v60 = vsel %vm52, 1, 0
  %v61 = vsel %vm53, 1, 0
  %v62 = vsel %vm54, 1, 0
  %v63 = vcvt.s32.f32 %v55
  %v64 = vcvt.s32.f32 %v56
  %v65 = vcvt.s32.f32 %v57
  %v66 = vcvt.s32.f32 %v58
  %v67 = vcvt.s32.f32 %v59
  %v68 = vcvt.s32.f32 %v60
  %v69 = vcvt.s32.f32 %v61
  %v70 = vcvt.s32.f32 %v62
  %v71 = vld [vmem:[%s0] sm:$0xff]
  %v72 = vld [vmem:[%s0 + $0x8] sm:$0xff]
  %v73 = vld [vmem:[%s0 + $0x10] sm:$0xff]
  %v74 = vld [vmem:[%s0 + $0x18] sm:$0xff]
  %v75 = vld [vmem:[%s0 + $0x20] sm:$0xff]
  %v76 = vld [vmem:[%s0 + $0x28] sm:$0xff]
  %v77 = vld [vmem:[%s0 + $0x30] sm:$0xff]
  %v78 = vld [vmem:[%s0 + $0x38] sm:$0xff]
  %v79 = vld [vmem:[%s1] sm:$0xff]
  %v80 = vld [vmem:[%s1 + $0x8] sm:$0xff]
  %v81 = vld [vmem:[%s1 + $0x10] sm:$0xff]
  %v82 = vld [vmem:[%s1 + $0x18] sm:$0xff]
  %vm83 = vcmask 261120
  %v85 = vsel %vm83, %v71, 0
  %v88 = vsel %vm83, %v72, 0
  %v91 = vsel %vm83, %v73, 0
  %v94 = vsel %vm83, %v74, 0
  %v97 = vsel %vm83, %v75, 0
  %v100 = vsel %vm83, %v76, 0
  %v103 = vsel %vm83, %v77, 0
  %v106 = vsel %vm83, %v78, 0
  %108 = vmatprep.subr.mxu0 0.0
  %109 = vmatpush1.msra.mxu0 %v79
  %110 = vmatprep.subr.mxu0 0.0
  %111 = vmatpush1.msra.mxu0 %v80
  %112 = vmatprep.subr.mxu0 0.0
  %113 = vmatpush1.msra.mxu0 %v81
  %114 = vmatprep.subr.mxu0 0.0
  %115 = vmatpush1.msra.mxu0 %v82
  %116 = vmatprep.subr.mxu0 0.0
  %117 = vmatpush1.msra.mxu0 0.0
  %118 = vmatprep.subr.mxu0 0.0
  %119 = vmatpush1.msra.mxu0 0.0
  %120 = vmatprep.subr.mxu0 0.0
  %121 = vmatpush1.msra.mxu0 0.0
  %122 = vmatprep.subr.mxu0 0.0
  %123 = vmatpush1.msra.mxu0 0.0
  %124 = vmatprep.subr.mxu0 0.0
  %125 = vmatpush1.msra.mxu0 0.0
  %126 = vmatprep.subr.mxu0 0.0
  %127 = vmatpush1.msra.mxu0 0.0
  %128 = vmatprep.subr.mxu0 0.0
  %129 = vmatpush1.msra.mxu0 0.0
  %130 = vmatprep.subr.mxu0 0.0
  %131 = vmatpush1.msra.mxu0 0.0
  %132 = vmatprep.subr.mxu0 0.0
  %133 = vmatpush1.msra.mxu0 0.0
  %134 = vmatprep.subr.mxu0 0.0
  %135 = vmatpush1.msra.mxu0 0.0
  %136 = vmatprep.subr.mxu0 0.0
  %137 = vmatpush1.msra.mxu0 0.0
  %138 = vmatprep.subr.mxu0 0.0
  %139 = vmatpush1.msra.mxu0 0.0
  %140 = vmatprep.subr.mxu0 0.0
  %141 = vmatpush1.msra.mxu0 0.0
  %142 = vmatprep.subr.mxu0 0.0
  %143 = vmatpush1.msra.mxu0 0.0
  %144 = vmatprep.subr.mxu0 0.0
  %145 = vmatpush1.msra.mxu0 0.0
  %146 = vmatprep.subr.mxu0 0.0
  %147 = vmatpush1.msra.mxu0 0.0
  %148 = vmatprep.subr.mxu0 0.0
  %149 = vmatpush1.msra.mxu0 0.0
  %150 = vmatprep.subr.mxu0 0.0
  %151 = vmatpush1.msra.mxu0 0.0
  %152 = vmatprep.subr.mxu0 0.0
  %153 = vmatpush1.msra.mxu0 0.0
  %154 = vmatprep.subr.mxu0 0.0
  %155 = vmatpush1.msra.mxu0 0.0
  %156 = vmatprep.subr.mxu0 0.0
  %157 = vmatpush1.msra.mxu0 0.0
  %158 = vmatprep.subr.mxu0 0.0
  %159 = vmatpush1.msra.mxu0 0.0
  %160 = vmatprep.subr.mxu0 0.0
  %161 = vmatpush1.msra.mxu0 0.0
  %162 = vmatprep.subr.mxu0 0.0
  %163 = vmatpush1.msra.mxu0 0.0
  %164 = vmatprep.subr.mxu0 0.0
  %165 = vmatpush1.msra.mxu0 0.0
  %166 = vmatprep.subr.mxu0 0.0
  %167 = vmatpush1.msra.mxu0 0.0
  %168 = vmatprep.subr.mxu0 0.0
  %169 = vmatpush1.msra.mxu0 0.0
  %170 = vmatprep.subr.mxu0 0.0
  %171 = vmatpush1.msra.mxu0 0.0
  %172 = vmatprep.mubr.f32.mxu0 0.0
  %173 = vmatmul.mubr.f32.gmra.mrb[0].mxu0 %v85
  %v174 = vpop.f32.mrb[0].mxu0
  %v175 = vadd.f32 0.0, %v174
  %v176 = vpop.f32.mrb[0].mxu0
  %177 = vmatprep.mubr.f32.mxu0 0.0
  %178 = vmatmul.mubr.f32.gmra.mrb[0].mxu0 %v88
  %v179 = vpop.f32.mrb[0].mxu0
  %v180 = vadd.f32 0.0, %v179
  %v181 = vpop.f32.mrb[0].mxu0
  %182 = vmatprep.mubr.f32.mxu0 0.0
  %183 = vmatmul.mubr.f32.gmra.mrb[0].mxu0 %v91
  %v184 = vpop.f32.mrb[0].mxu0
  %v185 = vadd.f32 0.0, %v184
  %v186 = vpop.f32.mrb[0].mxu0
  %187 = vmatprep.mubr.f32.mxu0 0.0
  %188 = vmatmul.mubr.f32.gmra.mrb[0].mxu0 %v94
  %v189 = vpop.f32.mrb[0].mxu0
  %v190 = vadd.f32 0.0, %v189
  %v191 = vpop.f32.mrb[0].mxu0
  %192 = vmatprep.mubr.f32.mxu0 0.0
  %193 = vmatmul.mubr.f32.gmra.mrb[0].mxu0 %v97
  %v194 = vpop.f32.mrb[0].mxu0
  %v195 = vadd.f32 0.0, %v194
  %v196 = vpop.f32.mrb[0].mxu0
  %197 = vmatprep.mubr.f32.mxu0 0.0
  %198 = vmatmul.mubr.f32.gmra.mrb[0].mxu0 %v100
  %v199 = vpop.f32.mrb[0].mxu0
  %v200 = vadd.f32 0.0, %v199
  %v201 = vpop.f32.mrb[0].mxu0
  %202 = vmatprep.mubr.f32.mxu0 0.0
  %203 = vmatmul.mubr.f32.gmra.mrb[0].mxu0 %v103
  %v204 = vpop.f32.mrb[0].mxu0
  %v205 = vadd.f32 0.0, %v204
  %v206 = vpop.f32.mrb[0].mxu0
  %207 = vmatprep.mubr.f32.mxu0 0.0
  %208 = vmatmul.mubr.f32.gmra.mrb[0].mxu0 %v106
  %v209 = vpop.f32.mrb[0].mxu0
  %v210 = vadd.f32 0.0, %v209
  %v211 = vpop.f32.mrb[0].mxu0
  %212 = vdwg.mxu0
  %v213 = vmul.f32 %v175, %v63
  %v214 = vmul.f32 %v180, %v64
  %v215 = vmul.f32 %v185, %v65
  %v216 = vmul.f32 %v190, %v66
  %v217 = vmul.f32 %v195, %v67
  %v218 = vmul.f32 %v200, %v68
  %v219 = vmul.f32 %v205, %v69
  %v220 = vmul.f32 %v210, %v70
  %vm221 = vcmask 64512
  %v222 = vsel %vm221, %v213, 0.0
  %v223 = vsel %vm221, %v214, 0.0
  %v224 = vadd.f32 %v222, %v223
  %v225 = vsel %vm221, %v215, 0.0
  %v226 = vadd.f32 %v224, %v225
  %v227 = vsel %vm221, %v216, 0.0
  %v228 = vadd.f32 %v226, %v227
  %v229 = vsel %vm221, %v217, 0.0
  %v230 = vadd.f32 %v228, %v229
  %v231 = vsel %vm221, %v218, 0.0
  %v232 = vadd.f32 %v230, %v231
  %v233 = vsel %vm221, %v219, 0.0
  %v234 = vadd.f32 %v232, %v233
  %v235 = vsel %vm221, %v220, 0.0
  %v236 = vadd.f32 %v234, %v235
  %v237 = vrot.slane %v236, 4
  %v238 = vadd.f32 %v236, %v237
  %v239 = vrot.slane %v238, 2
  %v240 = vadd.f32 %v238, %v239
  %v241 = vrot.slane %v240, 1
  %v242 = vadd.f32 %v240, %v241
  %v243 = vmul.f32 %v242, 0.016666668
  %v244 = vsub.f32 %v175, %v243
  %v245 = vsub.f32 %v180, %v243
  %v246 = vsub.f32 %v185, %v243
  %v247 = vsub.f32 %v190, %v243
  %v248 = vsub.f32 %v195, %v243
  %v249 = vsub.f32 %v200, %v243
  %v250 = vsub.f32 %v205, %v243
  %v251 = vsub.f32 %v210, %v243
  %v252 = vmul.f32 %v244, %v63
  %v253 = vmul.f32 %v245, %v64
  %v254 = vmul.f32 %v246, %v65
  %v255 = vmul.f32 %v247, %v66
  %v256 = vmul.f32 %v248, %v67
  %v257 = vmul.f32 %v249, %v68
  %v258 = vmul.f32 %v250, %v69
  %v259 = vmul.f32 %v251, %v70
  %v260 = vmul.f32 %v252, %v252
  %v261 = vmul.f32 %v253, %v253
  %v262 = vmul.f32 %v254, %v254
  %v263 = vmul.f32 %v255, %v255
  %v264 = vmul.f32 %v256, %v256
  %v265 = vmul.f32 %v257, %v257
  %v266 = vmul.f32 %v258, %v258
  %v267 = vmul.f32 %v259, %v259
  %v268 = vsel %vm221, %v260, 0.0
  %v269 = vsel %vm221, %v261, 0.0
  %v270 = vadd.f32 %v268, %v269
  %v271 = vsel %vm221, %v262, 0.0
  %v272 = vadd.f32 %v270, %v271
  %v273 = vsel %vm221, %v263, 0.0
  %v274 = vadd.f32 %v272, %v273
  %v275 = vsel %vm221, %v264, 0.0
  %v276 = vadd.f32 %v274, %v275
  %v277 = vsel %vm221, %v265, 0.0
  %v278 = vadd.f32 %v276, %v277
  %v279 = vsel %vm221, %v266, 0.0
  %v280 = vadd.f32 %v278, %v279
  %v281 = vsel %vm221, %v267, 0.0
  %v282 = vadd.f32 %v280, %v281
  %v283 = vrot.slane %v282, 4
  %v284 = vadd.f32 %v282, %v283
  %v285 = vrot.slane %v284, 2
  %v286 = vadd.f32 %v284, %v285
  %v287 = vrot.slane %v286, 1
  %v288 = vadd.f32 %v286, %v287
  %v289 = vmul.f32 %v288, 0.016666668
  %v290 = vld [vmem:[%s2] sm:$0x1]
  %v291 = vadd.f32 %v289, 1e-05
  %v292 = vrsqrt.pop %v291
  %v293 = vmul.f32 %v290, %v292
  %v295 = vlaneseq
  %v296 = vshrl.u32 %v295, 7
  %v297 = vsub.s32 0, %v296
  %v298 = vrot.slane %v293, %v297
  %v300 = vmul.f32 %v244, %v298
  %v301 = vmul.f32 %v245, %v298
  %v302 = vmul.f32 %v246, %v298
  %v303 = vmul.f32 %v247, %v298
  %v304 = vmul.f32 %v248, %v298
  %v305 = vmul.f32 %v249, %v298
  %v306 = vmul.f32 %v250, %v298
  %v307 = vmul.f32 %v251, %v298
  %v308 = vld [vmem:[%s3] sm:$0x1]
  %v310 = vlaneseq
  %v311 = vshrl.u32 %v310, 7
  %v312 = vsub.s32 0, %v311
  %v313 = vrot.slane %v308, %v312
  %v315 = vadd.f32 %v300, %v313
  %v316 = vadd.f32 %v301, %v313
  %v317 = vadd.f32 %v302, %v313
  %v318 = vadd.f32 %v303, %v313
  %v319 = vadd.f32 %v304, %v313
  %v320 = vadd.f32 %v305, %v313
  %v321 = vadd.f32 %v306, %v313
  %v322 = vadd.f32 %v307, %v313
  %v323 = vmax.f32 %v315, 0.0
  %v324 = vmax.f32 %v316, 0.0
  %v325 = vmax.f32 %v317, 0.0
  %v326 = vmax.f32 %v318, 0.0
  %v327 = vmax.f32 %v319, 0.0
  %v328 = vmax.f32 %v320, 0.0
  %v329 = vmax.f32 %v321, 0.0
  %v330 = vmax.f32 %v322, 0.0
  %v331 = vld [vmem:[%s4] sm:$0xff]
  %v332 = vld [vmem:[%s4 + $0x8] sm:$0xff]
  %v333 = vld [vmem:[%s4 + $0x10] sm:$0xff]
  %v334 = vld [vmem:[%s4 + $0x18] sm:$0xff]
  %v335 = vld [vmem:[%s4 + $0x20] sm:$0xff]
  %v336 = vld [vmem:[%s4 + $0x28] sm:$0xff]
  %v337 = vld [vmem:[%s4 + $0x30] sm:$0xff]
  %v338 = vld [vmem:[%s4 + $0x38] sm:$0xff]
  %vm339 = vcmask 523264
  %v341 = vsel %vm339, %v331, 0
  %v344 = vsel %vm339, %v332, 0
  %v347 = vsel %vm339, %v333, 0
  %v350 = vsel %vm339, %v334, 0
  %v353 = vsel %vm339, %v335, 0
  %v356 = vsel %vm339, %v336, 0
  %v359 = vsel %vm339, %v337, 0
  %v362 = vsel %vm339, %v338, 0
  %364 = vmatprep.subr.mxu0 0.0
  %365 = vmatpush1.msra.mxu0 %v323
  %366 = vmatprep.subr.mxu0 0.0
  %367 = vmatpush1.msra.mxu0 %v324
  %368 = vmatprep.subr.mxu0 0.0
  %369 = vmatpush1.msra.mxu0 %v325
  %370 = vmatprep.subr.mxu0 0.0
  %371 = vmatpush1.msra.mxu0 %v326
  %372 = vmatprep.subr.mxu0 0.0
  %373 = vmatpush1.msra.mxu0 %v327
  %374 = vmatprep.subr.mxu0 0.0
  %375 = vmatpush1.msra.mxu0 %v328
  %376 = vmatprep.subr.mxu0 0.0
  %377 = vmatpush1.msra.mxu0 %v329
  %378 = vmatprep.subr.mxu0 0.0
  %379 = vmatpush1.msra.mxu0 %v330
  %380 = vmatprep.subr.mxu0 0.0
  %381 = vmatpush1.msra.mxu0 0.0
  %382 = vmatprep.subr.mxu0 0.0
  %383 = vmatpush1.msra.mxu0 0.0
  %384 = vmatprep.subr.mxu0 0.0
  %385 = vmatpush1.msra.mxu0 0.0
  %386 = vmatprep.subr.mxu0 0.0
  %387 = vmatpush1.msra.mxu0 0.0
  %388 = vmatprep.subr.mxu0 0.0
  %389 = vmatpush1.msra.mxu0 0.0
  %390 = vmatprep.subr.mxu0 0.0
  %391 = vmatpush1.msra.mxu0 0.0
  %392 = vmatprep.subr.mxu0 0.0
  %393 = vmatpush1.msra.mxu0 0.0
  %394 = vmatprep.subr.mxu0 0.0
  %395 = vmatpush1.msra.mxu0 0.0
  %396 = vmatprep.subr.mxu0 0.0
  %397 = vmatpush1.msra.mxu0 0.0
  %398 = vmatprep.subr.mxu0 0.0
  %399 = vmatpush1.msra.mxu0 0.0
  %400 = vmatprep.subr.mxu0 0.0
  %401 = vmatpush1.msra.mxu0 0.0
  %402 = vmatprep.subr.mxu0 0.0
  %403 = vmatpush1.msra.mxu0 0.0
  %404 = vmatprep.subr.mxu0 0.0
  %405 = vmatpush1.msra.mxu0 0.0
  %406 = vmatprep.subr.mxu0 0.0
  %407 = vmatpush1.msra.mxu0 0.0
  %408 = vmatprep.subr.mxu0 0.0
  %409 = vmatpush1.msra.mxu0 0.0
  %410 = vmatprep.subr.mxu0 0.0
  %411 = vmatpush1.msra.mxu0 0.0
  %412 = vmatprep.subr.mxu0 0.0
  %413 = vmatpush1.msra.mxu0 0.0
  %414 = vmatprep.subr.mxu0 0.0
  %415 = vmatpush1.msra.mxu0 0.0
  %416 = vmatprep.subr.mxu0 0.0
  %417 = vmatpush1.msra.mxu0 0.0
  %418 = vmatprep.subr.mxu0 0.0
  %419 = vmatpush1.msra.mxu0 0.0
  %420 = vmatprep.subr.mxu0 0.0
  %421 = vmatpush1.msra.mxu0 0.0
  %422 = vmatprep.subr.mxu0 0.0
  %423 = vmatpush1.msra.mxu0 0.0
  %424 = vmatprep.subr.mxu0 0.0
  %425 = vmatpush1.msra.mxu0 0.0
  %426 = vmatprep.subr.mxu0 0.0
  %427 = vmatpush1.msra.mxu0 0.0
  %428 = vmatprep.mubr.f32.mxu0 0.0
  %429 = vmatmul.mubr.f32.gmra.mrb[0].mxu0 %v341
  %v430 = vpop.f32.mrb[0].mxu0
  %v431 = vadd.f32 0.0, %v430
  %v432 = vpop.f32.mrb[0].mxu0
  %433 = vmatprep.mubr.f32.mxu0 0.0
  %434 = vmatmul.mubr.f32.gmra.mrb[0].mxu0 %v344
  %v435 = vpop.f32.mrb[0].mxu0
  %v436 = vadd.f32 0.0, %v435
  %v437 = vpop.f32.mrb[0].mxu0
  %438 = vmatprep.mubr.f32.mxu0 0.0
  %439 = vmatmul.mubr.f32.gmra.mrb[0].mxu0 %v347
  %v440 = vpop.f32.mrb[0].mxu0
  %v441 = vadd.f32 0.0, %v440
  %v442 = vpop.f32.mrb[0].mxu0
  %443 = vmatprep.mubr.f32.mxu0 0.0
  %444 = vmatmul.mubr.f32.gmra.mrb[0].mxu0 %v350
  %v445 = vpop.f32.mrb[0].mxu0
  %v446 = vadd.f32 0.0, %v445
  %v447 = vpop.f32.mrb[0].mxu0
  %448 = vmatprep.mubr.f32.mxu0 0.0
  %449 = vmatmul.mubr.f32.gmra.mrb[0].mxu0 %v353
  %v450 = vpop.f32.mrb[0].mxu0
  %v451 = vadd.f32 0.0, %v450
  %v452 = vpop.f32.mrb[0].mxu0
  %453 = vmatprep.mubr.f32.mxu0 0.0
  %454 = vmatmul.mubr.f32.gmra.mrb[0].mxu0 %v356
  %v455 = vpop.f32.mrb[0].mxu0
  %v456 = vadd.f32 0.0, %v455
  %v457 = vpop.f32.mrb[0].mxu0
  %458 = vmatprep.mubr.f32.mxu0 0.0
  %459 = vmatmul.mubr.f32.gmra.mrb[0].mxu0 %v359
  %v460 = vpop.f32.mrb[0].mxu0
  %v461 = vadd.f32 0.0, %v460
  %v462 = vpop.f32.mrb[0].mxu0
  %463 = vmatprep.mubr.f32.mxu0 0.0
  %464 = vmatmul.mubr.f32.gmra.mrb[0].mxu0 %v362
  %v465 = vpop.f32.mrb[0].mxu0
  %v466 = vadd.f32 0.0, %v465
  %v467 = vpop.f32.mrb[0].mxu0
  %468 = vdwg.mxu0
  %v469 = vld [vmem:[%s5] sm:$0xff]
  %s470 = scalar_lea.vmem %s4, 64
  %v471 = vld [vmem:[%s470] sm:$0xff]
  %v472 = vld [vmem:[%s470 + $0x8] sm:$0xff]
  %v473 = vld [vmem:[%s470 + $0x10] sm:$0xff]
  %v474 = vld [vmem:[%s470 + $0x18] sm:$0xff]
  %v475 = vld [vmem:[%s470 + $0x20] sm:$0xff]
  %v476 = vld [vmem:[%s470 + $0x28] sm:$0xff]
  %v477 = vld [vmem:[%s470 + $0x30] sm:$0xff]
  %v478 = vld [vmem:[%s470 + $0x38] sm:$0xff]
  %v480 = vsel %vm339, %v471, 0
  %v483 = vsel %vm339, %v472, 0
  %v486 = vsel %vm339, %v473, 0
  %v489 = vsel %vm339, %v474, 0
  %v492 = vsel %vm339, %v475, 0
  %v495 = vsel %vm339, %v476, 0
  %v498 = vsel %vm339, %v477, 0
  %v501 = vsel %vm339, %v478, 0
  %503 = vmatprep.subr.mxu0 0.0
  %504 = vmatpush1.msra.mxu0 %v323
  %505 = vmatprep.subr.mxu0 0.0
  %506 = vmatpush1.msra.mxu0 %v324
  %507 = vmatprep.subr.mxu0 0.0
  %508 = vmatpush1.msra.mxu0 %v325
  %509 = vmatprep.subr.mxu0 0.0
  %510 = vmatpush1.msra.mxu0 %v326
  %511 = vmatprep.subr.mxu0 0.0
  %512 = vmatpush1.msra.mxu0 %v327
  %513 = vmatprep.subr.mxu0 0.0
  %514 = vmatpush1.msra.mxu0 %v328
  %515 = vmatprep.subr.mxu0 0.0
  %516 = vmatpush1.msra.mxu0 %v329
  %517 = vmatprep.subr.mxu0 0.0
  %518 = vmatpush1.msra.mxu0 %v330
  %519 = vmatprep.subr.mxu0 0.0
  %520 = vmatpush1.msra.mxu0 0.0
  %521 = vmatprep.subr.mxu0 0.0
  %522 = vmatpush1.msra.mxu0 0.0
  %523 = vmatprep.subr.mxu0 0.0
  %524 = vmatpush1.msra.mxu0 0.0
  %525 = vmatprep.subr.mxu0 0.0
  %526 = vmatpush1.msra.mxu0 0.0
  %527 = vmatprep.subr.mxu0 0.0
  %528 = vmatpush1.msra.mxu0 0.0
  %529 = vmatprep.subr.mxu0 0.0
  %530 = vmatpush1.msra.mxu0 0.0
  %531 = vmatprep.subr.mxu0 0.0
  %532 = vmatpush1.msra.mxu0 0.0
  %533 = vmatprep.subr.mxu0 0.0
  %534 = vmatpush1.msra.mxu0 0.0
  %535 = vmatprep.subr.mxu0 0.0
  %536 = vmatpush1.msra.mxu0 0.0
  %537 = vmatprep.subr.mxu0 0.0
  %538 = vmatpush1.msra.mxu0 0.0
  %539 = vmatprep.subr.mxu0 0.0
  %540 = vmatpush1.msra.mxu0 0.0
  %541 = vmatprep.subr.mxu0 0.0
  %542 = vmatpush1.msra.mxu0 0.0
  %543 = vmatprep.subr.mxu0 0.0
  %544 = vmatpush1.msra.mxu0 0.0
  %545 = vmatprep.subr.mxu0 0.0
  %546 = vmatpush1.msra.mxu0 0.0
  %547 = vmatprep.subr.mxu0 0.0
  %548 = vmatpush1.msra.mxu0 0.0
  %549 = vmatprep.subr.mxu0 0.0
  %550 = vmatpush1.msra.mxu0 0.0
  %551 = vmatprep.subr.mxu0 0.0
  %552 = vmatpush1.msra.mxu0 0.0
  %553 = vmatprep.subr.mxu0 0.0
  %554 = vmatpush1.msra.mxu0 0.0
  %555 = vmatprep.subr.mxu0 0.0
  %556 = vmatpush1.msra.mxu0 0.0
  %557 = vmatprep.subr.mxu0 0.0
  %558 = vmatpush1.msra.mxu0 0.0
  %559 = vmatprep.subr.mxu0 0.0
  %560 = vmatpush1.msra.mxu0 0.0
  %561 = vmatprep.subr.mxu0 0.0
  %562 = vmatpush1.msra.mxu0 0.0
  %563 = vmatprep.subr.mxu0 0.0
  %564 = vmatpush1.msra.mxu0 0.0
  %565 = vmatprep.subr.mxu0 0.0
  %566 = vmatpush1.msra.mxu0 0.0
  %567 = vmatprep.mubr.f32.mxu0 0.0
  %568 = vmatmul.mubr.f32.gmra.mrb[0].mxu0 %v480
  %v569 = vpop.f32.mrb[0].mxu0
  %v570 = vadd.f32 0.0, %v569
  %v571 = vpop.f32.mrb[0].mxu0
  %572 = vmatprep.mubr.f32.mxu0 0.0
  %573 = vmatmul.mubr.f32.gmra.mrb[0].mxu0 %v483
  %v574 = vpop.f32.mrb[0].mxu0
  %v575 = vadd.f32 0.0, %v574
  %v576 = vpop.f32.mrb[0].mxu0
  %577 = vmatprep.mubr.f32.mxu0 0.0
  %578 = vmatmul.mubr.f32.gmra.mrb[0].mxu0 %v486
  %v579 = vpop.f32.mrb[0].mxu0
  %v580 = vadd.f32 0.0, %v579
  %v581 = vpop.f32.mrb[0].mxu0
  %582 = vmatprep.mubr.f32.mxu0 0.0
  %583 = vmatmul.mubr.f32.gmra.mrb[0].mxu0 %v489
  %v584 = vpop.f32.mrb[0].mxu0
  %v585 = vadd.f32 0.0, %v584
  %v586 = vpop.f32.mrb[0].mxu0
  %587 = vmatprep.mubr.f32.mxu0 0.0
  %588 = vmatmul.mubr.f32.gmra.mrb[0].mxu0 %v492
  %v589 = vpop.f32.mrb[0].mxu0
  %v590 = vadd.f32 0.0, %v589
  %v591 = vpop.f32.mrb[0].mxu0
  %592 = vmatprep.mubr.f32.mxu0 0.0
  %593 = vmatmul.mubr.f32.gmra.mrb[0].mxu0 %v495
  %v594 = vpop.f32.mrb[0].mxu0
  %v595 = vadd.f32 0.0, %v594
  %v596 = vpop.f32.mrb[0].mxu0
  %597 = vmatprep.mubr.f32.mxu0 0.0
  %598 = vmatmul.mubr.f32.gmra.mrb[0].mxu0 %v498
  %v599 = vpop.f32.mrb[0].mxu0
  %v600 = vadd.f32 0.0, %v599
  %v601 = vpop.f32.mrb[0].mxu0
  %602 = vmatprep.mubr.f32.mxu0 0.0
  %603 = vmatmul.mubr.f32.gmra.mrb[0].mxu0 %v501
  %v604 = vpop.f32.mrb[0].mxu0
  %v605 = vadd.f32 0.0, %v604
  %v606 = vpop.f32.mrb[0].mxu0
  %607 = vdwg.mxu0
  %s608 = scalar_lea.vmem %s5, 8
  %v609 = vld [vmem:[%s608] sm:$0xff]
  %v611 = vsel %vm221, %v570, 0
  %v614 = vsel %vm221, %v575, 0
  %v617 = vsel %vm221, %v580, 0
  %v620 = vsel %vm221, %v585, 0
  %v623 = vsel %vm221, %v590, 0
  %v626 = vsel %vm221, %v595, 0
  %v629 = vsel %vm221, %v600, 0
  %v632 = vsel %vm221, %v605, 0
  %634 = vmatprep.subr.mxu0 0.0
  %635 = vmatpush1.msra.mxu0 %v609
  %636 = vmatprep.subr.mxu0 0.0
  %637 = vmatpush1.msra.mxu0 0.0
  %638 = vmatprep.subr.mxu0 0.0
  %639 = vmatpush1.msra.mxu0 0.0
  %640 = vmatprep.subr.mxu0 0.0
  %641 = vmatpush1.msra.mxu0 0.0
  %642 = vmatprep.subr.mxu0 0.0
  %643 = vmatpush1.msra.mxu0 0.0
  %644 = vmatprep.subr.mxu0 0.0
  %645 = vmatpush1.msra.mxu0 0.0
  %646 = vmatprep.subr.mxu0 0.0
  %647 = vmatpush1.msra.mxu0 0.0
  %648 = vmatprep.subr.mxu0 0.0
  %649 = vmatpush1.msra.mxu0 0.0
  %650 = vmatprep.subr.mxu0 0.0
  %651 = vmatpush1.msra.mxu0 0.0
  %652 = vmatprep.subr.mxu0 0.0
  %653 = vmatpush1.msra.mxu0 0.0
  %654 = vmatprep.subr.mxu0 0.0
  %655 = vmatpush1.msra.mxu0 0.0
  %656 = vmatprep.subr.mxu0 0.0
  %657 = vmatpush1.msra.mxu0 0.0
  %658 = vmatprep.subr.mxu0 0.0
  %659 = vmatpush1.msra.mxu0 0.0
  %660 = vmatprep.subr.mxu0 0.0
  %661 = vmatpush1.msra.mxu0 0.0
  %662 = vmatprep.subr.mxu0 0.0
  %663 = vmatpush1.msra.mxu0 0.0
  %664 = vmatprep.subr.mxu0 0.0
  %665 = vmatpush1.msra.mxu0 0.0
  %666 = vmatprep.subr.mxu0 0.0
  %667 = vmatpush1.msra.mxu0 0.0
  %668 = vmatprep.subr.mxu0 0.0
  %669 = vmatpush1.msra.mxu0 0.0
  %670 = vmatprep.subr.mxu0 0.0
  %671 = vmatpush1.msra.mxu0 0.0
  %672 = vmatprep.subr.mxu0 0.0
  %673 = vmatpush1.msra.mxu0 0.0
  %674 = vmatprep.subr.mxu0 0.0
  %675 = vmatpush1.msra.mxu0 0.0
  %676 = vmatprep.subr.mxu0 0.0
  %677 = vmatpush1.msra.mxu0 0.0
  %678 = vmatprep.subr.mxu0 0.0
  %679 = vmatpush1.msra.mxu0 0.0
  %680 = vmatprep.subr.mxu0 0.0
  %681 = vmatpush1.msra.mxu0 0.0
  %682 = vmatprep.subr.mxu0 0.0
  %683 = vmatpush1.msra.mxu0 0.0
  %684 = vmatprep.subr.mxu0 0.0
  %685 = vmatpush1.msra.mxu0 0.0
  %686 = vmatprep.subr.mxu0 0.0
  %687 = vmatpush1.msra.mxu0 0.0
  %688 = vmatprep.subr.mxu0 0.0
  %689 = vmatpush1.msra.mxu0 0.0
  %690 = vmatprep.subr.mxu0 0.0
  %691 = vmatpush1.msra.mxu0 0.0
  %692 = vmatprep.subr.mxu0 0.0
  %693 = vmatpush1.msra.mxu0 0.0
  %694 = vmatprep.subr.mxu0 0.0
  %695 = vmatpush1.msra.mxu0 0.0
  %696 = vmatprep.subr.mxu0 0.0
  %697 = vmatpush1.msra.mxu0 0.0
  %698 = vmatprep.mubr.f32.mxu0 0.0
  %699 = vmatmul.mubr.f32.gmra.mrb[0].mxu0 %v611
  %v700 = vpop.f32.mrb[0].mxu0
  %v701 = vadd.f32 0.0, %v700
  %v702 = vpop.f32.mrb[0].mxu0
  %703 = vmatprep.mubr.f32.mxu0 0.0
  %704 = vmatmul.mubr.f32.gmra.mrb[0].mxu0 %v614
  %v705 = vpop.f32.mrb[0].mxu0
  %v706 = vadd.f32 0.0, %v705
  %v707 = vpop.f32.mrb[0].mxu0
  %708 = vmatprep.mubr.f32.mxu0 0.0
  %709 = vmatmul.mubr.f32.gmra.mrb[0].mxu0 %v617
  %v710 = vpop.f32.mrb[0].mxu0
  %v711 = vadd.f32 0.0, %v710
  %v712 = vpop.f32.mrb[0].mxu0
  %713 = vmatprep.mubr.f32.mxu0 0.0
  %714 = vmatmul.mubr.f32.gmra.mrb[0].mxu0 %v620
  %v715 = vpop.f32.mrb[0].mxu0
  %v716 = vadd.f32 0.0, %v715
  %v717 = vpop.f32.mrb[0].mxu0
  %718 = vmatprep.mubr.f32.mxu0 0.0
  %719 = vmatmul.mubr.f32.gmra.mrb[0].mxu0 %v623
  %v720 = vpop.f32.mrb[0].mxu0
  %v721 = vadd.f32 0.0, %v720
  %v722 = vpop.f32.mrb[0].mxu0
  %723 = vmatprep.mubr.f32.mxu0 0.0
  %724 = vmatmul.mubr.f32.gmra.mrb[0].mxu0 %v626
  %v725 = vpop.f32.mrb[0].mxu0
  %v726 = vadd.f32 0.0, %v725
  %v727 = vpop.f32.mrb[0].mxu0
  %728 = vmatprep.mubr.f32.mxu0 0.0
  %729 = vmatmul.mubr.f32.gmra.mrb[0].mxu0 %v629
  %v730 = vpop.f32.mrb[0].mxu0
  %v731 = vadd.f32 0.0, %v730
  %v732 = vpop.f32.mrb[0].mxu0
  %733 = vmatprep.mubr.f32.mxu0 0.0
  %734 = vmatmul.mubr.f32.gmra.mrb[0].mxu0 %v632
  %v735 = vpop.f32.mrb[0].mxu0
  %v736 = vadd.f32 0.0, %v735
  %v737 = vpop.f32.mrb[0].mxu0
  %738 = vdwg.mxu0
  %v740 = vsel %vm221, %v431, 0
  %v743 = vsel %vm221, %v436, 0
  %v746 = vsel %vm221, %v441, 0
  %v749 = vsel %vm221, %v446, 0
  %v752 = vsel %vm221, %v451, 0
  %v755 = vsel %vm221, %v456, 0
  %v758 = vsel %vm221, %v461, 0
  %v761 = vsel %vm221, %v466, 0
  %763 = vmatprep.subr.mxu0 0.0
  %764 = vmatpush1.msra.mxu0 %v469
  %765 = vmatprep.subr.mxu0 0.0
  %766 = vmatpush1.msra.mxu0 0.0
  %767 = vmatprep.subr.mxu0 0.0
  %768 = vmatpush1.msra.mxu0 0.0
  %769 = vmatprep.subr.mxu0 0.0
  %770 = vmatpush1.msra.mxu0 0.0
  %771 = vmatprep.subr.mxu0 0.0
  %772 = vmatpush1.msra.mxu0 0.0
  %773 = vmatprep.subr.mxu0 0.0
  %774 = vmatpush1.msra.mxu0 0.0
  %775 = vmatprep.subr.mxu0 0.0
  %776 = vmatpush1.msra.mxu0 0.0
  %777 = vmatprep.subr.mxu0 0.0
  %778 = vmatpush1.msra.mxu0 0.0
  %779 = vmatprep.subr.mxu0 0.0
  %780 = vmatpush1.msra.mxu0 0.0
  %781 = vmatprep.subr.mxu0 0.0
  %782 = vmatpush1.msra.mxu0 0.0
  %783 = vmatprep.subr.mxu0 0.0
  %784 = vmatpush1.msra.mxu0 0.0
  %785 = vmatprep.subr.mxu0 0.0
  %786 = vmatpush1.msra.mxu0 0.0
  %787 = vmatprep.subr.mxu0 0.0
  %788 = vmatpush1.msra.mxu0 0.0
  %789 = vmatprep.subr.mxu0 0.0
  %790 = vmatpush1.msra.mxu0 0.0
  %791 = vmatprep.subr.mxu0 0.0
  %792 = vmatpush1.msra.mxu0 0.0
  %793 = vmatprep.subr.mxu0 0.0
  %794 = vmatpush1.msra.mxu0 0.0
  %795 = vmatprep.subr.mxu0 0.0
  %796 = vmatpush1.msra.mxu0 0.0
  %797 = vmatprep.subr.mxu0 0.0
  %798 = vmatpush1.msra.mxu0 0.0
  %799 = vmatprep.subr.mxu0 0.0
  %800 = vmatpush1.msra.mxu0 0.0
  %801 = vmatprep.subr.mxu0 0.0
  %802 = vmatpush1.msra.mxu0 0.0
  %803 = vmatprep.subr.mxu0 0.0
  %804 = vmatpush1.msra.mxu0 0.0
  %805 = vmatprep.subr.mxu0 0.0
  %806 = vmatpush1.msra.mxu0 0.0
  %807 = vmatprep.subr.mxu0 0.0
  %808 = vmatpush1.msra.mxu0 0.0
  %809 = vmatprep.subr.mxu0 0.0
  %810 = vmatpush1.msra.mxu0 0.0
  %811 = vmatprep.subr.mxu0 0.0
  %812 = vmatpush1.msra.mxu0 0.0
  %813 = vmatprep.subr.mxu0 0.0
  %814 = vmatpush1.msra.mxu0 0.0
  %815 = vmatprep.subr.mxu0 0.0
  %816 = vmatpush1.msra.mxu0 0.0
  %817 = vmatprep.subr.mxu0 0.0
  %818 = vmatpush1.msra.mxu0 0.0
  %819 = vmatprep.subr.mxu0 0.0
  %820 = vmatpush1.msra.mxu0 0.0
  %821 = vmatprep.subr.mxu0 0.0
  %822 = vmatpush1.msra.mxu0 0.0
  %823 = vmatprep.subr.mxu0 0.0
  %824 = vmatpush1.msra.mxu0 0.0
  %825 = vmatprep.subr.mxu0 0.0
  %826 = vmatpush1.msra.mxu0 0.0
  %827 = vmatprep.mubr.f32.mxu0 0.0
  %828 = vmatmul.mubr.f32.gmra.mrb[0].mxu0 %v740
  %v829 = vpop.f32.mrb[0].mxu0
  %v830 = vadd.f32 %v701, %v829
  %v831 = vpop.f32.mrb[0].mxu0
  %832 = vmatprep.mubr.f32.mxu0 0.0
  %833 = vmatmul.mubr.f32.gmra.mrb[0].mxu0 %v743
  %v834 = vpop.f32.mrb[0].mxu0
  %v835 = vadd.f32 %v706, %v834
  %v836 = vpop.f32.mrb[0].mxu0
  %837 = vmatprep.mubr.f32.mxu0 0.0
  %838 = vmatmul.mubr.f32.gmra.mrb[0].mxu0 %v746
  %v839 = vpop.f32.mrb[0].mxu0
  %v840 = vadd.f32 %v711, %v839
  %v841 = vpop.f32.mrb[0].mxu0
  %842 = vmatprep.mubr.f32.mxu0 0.0
  %843 = vmatmul.mubr.f32.gmra.mrb[0].mxu0 %v749
  %v844 = vpop.f32.mrb[0].mxu0
  %v845 = vadd.f32 %v716, %v844
  %v846 = vpop.f32.mrb[0].mxu0
  %847 = vmatprep.mubr.f32.mxu0 0.0
  %848 = vmatmul.mubr.f32.gmra.mrb[0].mxu0 %v752
  %v849 = vpop.f32.mrb[0].mxu0
  %v850 = vadd.f32 %v721, %v849
  %v851 = vpop.f32.mrb[0].mxu0
  %852 = vmatprep.mubr.f32.mxu0 0.0
  %853 = vmatmul.mubr.f32.gmra.mrb[0].mxu0 %v755
  %v854 = vpop.f32.mrb[0].mxu0
  %v855 = vadd.f32 %v726, %v854
  %v856 = vpop.f32.mrb[0].mxu0
  %857 = vmatprep.mubr.f32.mxu0 0.0
  %858 = vmatmul.mubr.f32.gmra.mrb[0].mxu0 %v758
  %v859 = vpop.f32.mrb[0].mxu0
  %v860 = vadd.f32 %v731, %v859
  %v861 = vpop.f32.mrb[0].mxu0
  %862 = vmatprep.mubr.f32.mxu0 0.0
  %863 = vmatmul.mubr.f32.gmra.mrb[0].mxu0 %v761
  %v864 = vpop.f32.mrb[0].mxu0
  %v865 = vadd.f32 %v736, %v864
  %v866 = vpop.f32.mrb[0].mxu0
  %867 = vdwg.mxu0
  %s868 = scalar_lea.vmem %s4, 128
  %v869 = vld [vmem:[%s868] sm:$0xff]
  %v870 = vld [vmem:[%s868 + $0x8] sm:$0xff]
  %v871 = vld [vmem:[%s868 + $0x10] sm:$0xff]
  %v872 = vld [vmem:[%s868 + $0x18] sm:$0xff]
  %v873 = vld [vmem:[%s868 + $0x20] sm:$0xff]
  %v874 = vld [vmem:[%s868 + $0x28] sm:$0xff]
  %v875 = vld [vmem:[%s868 + $0x30] sm:$0xff]
  %v876 = vld [vmem:[%s868 + $0x38] sm:$0xff]
  %v878 = vsel %vm339, %v869, 0
  %v881 = vsel %vm339, %v870, 0
  %v884 = vsel %vm339, %v871, 0
  %v887 = vsel %vm339, %v872, 0
  %v890 = vsel %vm339, %v873, 0
  %v893 = vsel %vm339, %v874, 0
  %v896 = vsel %vm339, %v875, 0
  %v899 = vsel %vm339, %v876, 0
  %901 = vmatprep.subr.mxu0 0.0
  %902 = vmatpush1.msra.mxu0 %v323
  %903 = vmatprep.subr.mxu0 0.0
  %904 = vmatpush1.msra.mxu0 %v324
  %905 = vmatprep.subr.mxu0 0.0
  %906 = vmatpush1.msra.mxu0 %v325
  %907 = vmatprep.subr.mxu0 0.0
  %908 = vmatpush1.msra.mxu0 %v326
  %909 = vmatprep.subr.mxu0 0.0
  %910 = vmatpush1.msra.mxu0 %v327
  %911 = vmatprep.subr.mxu0 0.0
  %912 = vmatpush1.msra.mxu0 %v328
  %913 = vmatprep.subr.mxu0 0.0
  %914 = vmatpush1.msra.mxu0 %v329
  %915 = vmatprep.subr.mxu0 0.0
  %916 = vmatpush1.msra.mxu0 %v330
  %917 = vmatprep.subr.mxu0 0.0
  %918 = vmatpush1.msra.mxu0 0.0
  %919 = vmatprep.subr.mxu0 0.0
  %920 = vmatpush1.msra.mxu0 0.0
  %921 = vmatprep.subr.mxu0 0.0
  %922 = vmatpush1.msra.mxu0 0.0
  %923 = vmatprep.subr.mxu0 0.0
  %924 = vmatpush1.msra.mxu0 0.0
  %925 = vmatprep.subr.mxu0 0.0
  %926 = vmatpush1.msra.mxu0 0.0
  %927 = vmatprep.subr.mxu0 0.0
  %928 = vmatpush1.msra.mxu0 0.0
  %929 = vmatprep.subr.mxu0 0.0
  %930 = vmatpush1.msra.mxu0 0.0
  %931 = vmatprep.subr.mxu0 0.0
  %932 = vmatpush1.msra.mxu0 0.0
  %933 = vmatprep.subr.mxu0 0.0
  %934 = vmatpush1.msra.mxu0 0.0
  %935 = vmatprep.subr.mxu0 0.0
  %936 = vmatpush1.msra.mxu0 0.0
  %937 = vmatprep.subr.mxu0 0.0
  %938 = vmatpush1.msra.mxu0 0.0
  %939 = vmatprep.subr.mxu0 0.0
  %940 = vmatpush1.msra.mxu0 0.0
  %941 = vmatprep.subr.mxu0 0.0
  %942 = vmatpush1.msra.mxu0 0.0
  %943 = vmatprep.subr.mxu0 0.0
  %944 = vmatpush1.msra.mxu0 0.0
  %945 = vmatprep.subr.mxu0 0.0
  %946 = vmatpush1.msra.mxu0 0.0
  %947 = vmatprep.subr.mxu0 0.0
  %948 = vmatpush1.msra.mxu0 0.0
  %949 = vmatprep.subr.mxu0 0.0
  %950 = vmatpush1.msra.mxu0 0.0
  %951 = vmatprep.subr.mxu0 0.0
  %952 = vmatpush1.msra.mxu0 0.0
  %953 = vmatprep.subr.mxu0 0.0
  %954 = vmatpush1.msra.mxu0 0.0
  %955 = vmatprep.subr.mxu0 0.0
  %956 = vmatpush1.msra.mxu0 0.0
  %957 = vmatprep.subr.mxu0 0.0
  %958 = vmatpush1.msra.mxu0 0.0
  %959 = vmatprep.subr.mxu0 0.0
  %960 = vmatpush1.msra.mxu0 0.0
  %961 = vmatprep.subr.mxu0 0.0
  %962 = vmatpush1.msra.mxu0 0.0
  %963 = vmatprep.subr.mxu0 0.0
  %964 = vmatpush1.msra.mxu0 0.0
  %965 = vmatprep.mubr.f32.mxu0 0.0
  %966 = vmatmul.mubr.f32.gmra.mrb[0].mxu0 %v878
  %v967 = vpop.f32.mrb[0].mxu0
  %v968 = vadd.f32 0.0, %v967
  %v969 = vpop.f32.mrb[0].mxu0
  %970 = vmatprep.mubr.f32.mxu0 0.0
  %971 = vmatmul.mubr.f32.gmra.mrb[0].mxu0 %v881
  %v972 = vpop.f32.mrb[0].mxu0
  %v973 = vadd.f32 0.0, %v972
  %v974 = vpop.f32.mrb[0].mxu0
  %975 = vmatprep.mubr.f32.mxu0 0.0
  %976 = vmatmul.mubr.f32.gmra.mrb[0].mxu0 %v884
  %v977 = vpop.f32.mrb[0].mxu0
  %v978 = vadd.f32 0.0, %v977
  %v979 = vpop.f32.mrb[0].mxu0
  %980 = vmatprep.mubr.f32.mxu0 0.0
  %981 = vmatmul.mubr.f32.gmra.mrb[0].mxu0 %v887
  %v982 = vpop.f32.mrb[0].mxu0
  %v983 = vadd.f32 0.0, %v982
  %v984 = vpop.f32.mrb[0].mxu0
  %985 = vmatprep.mubr.f32.mxu0 0.0
  %986 = vmatmul.mubr.f32.gmra.mrb[0].mxu0 %v890
  %v987 = vpop.f32.mrb[0].mxu0
  %v988 = vadd.f32 0.0, %v987
  %v989 = vpop.f32.mrb[0].mxu0
  %990 = vmatprep.mubr.f32.mxu0 0.0
  %991 = vmatmul.mubr.f32.gmra.mrb[0].mxu0 %v893
  %v992 = vpop.f32.mrb[0].mxu0
  %v993 = vadd.f32 0.0, %v992
  %v994 = vpop.f32.mrb[0].mxu0
  %995 = vmatprep.mubr.f32.mxu0 0.0
  %996 = vmatmul.mubr.f32.gmra.mrb[0].mxu0 %v896
  %v997 = vpop.f32.mrb[0].mxu0
  %v998 = vadd.f32 0.0, %v997
  %v999 = vpop.f32.mrb[0].mxu0
  %1000 = vmatprep.mubr.f32.mxu0 0.0
  %1001 = vmatmul.mubr.f32.gmra.mrb[0].mxu0 %v899
  %v1002 = vpop.f32.mrb[0].mxu0
  %v1003 = vadd.f32 0.0, %v1002
  %v1004 = vpop.f32.mrb[0].mxu0
  %1005 = vdwg.mxu0
  %s1006 = scalar_lea.vmem %s5, 16
  %v1007 = vld [vmem:[%s1006] sm:$0xff]
  %v1009 = vsel %vm221, %v968, 0
  %v1012 = vsel %vm221, %v973, 0
  %v1015 = vsel %vm221, %v978, 0
  %v1018 = vsel %vm221, %v983, 0
  %v1021 = vsel %vm221, %v988, 0
  %v1024 = vsel %vm221, %v993, 0
  %v1027 = vsel %vm221, %v998, 0
  %v1030 = vsel %vm221, %v1003, 0
  %1032 = vmatprep.subr.mxu0 0.0
  %1033 = vmatpush1.msra.mxu0 %v1007
  %1034 = vmatprep.subr.mxu0 0.0
  %1035 = vmatpush1.msra.mxu0 0.0
  %1036 = vmatprep.subr.mxu0 0.0
  %1037 = vmatpush1.msra.mxu0 0.0
  %1038 = vmatprep.subr.mxu0 0.0
  %1039 = vmatpush1.msra.mxu0 0.0
  %1040 = vmatprep.subr.mxu0 0.0
  %1041 = vmatpush1.msra.mxu0 0.0
  %1042 = vmatprep.subr.mxu0 0.0
  %1043 = vmatpush1.msra.mxu0 0.0
  %1044 = vmatprep.subr.mxu0 0.0
  %1045 = vmatpush1.msra.mxu0 0.0
  %1046 = vmatprep.subr.mxu0 0.0
  %1047 = vmatpush1.msra.mxu0 0.0
  %1048 = vmatprep.subr.mxu0 0.0
  %1049 = vmatpush1.msra.mxu0 0.0
  %1050 = vmatprep.subr.mxu0 0.0
  %1051 = vmatpush1.msra.mxu0 0.0
  %1052 = vmatprep.subr.mxu0 0.0
  %1053 = vmatpush1.msra.mxu0 0.0
  %1054 = vmatprep.subr.mxu0 0.0
  %1055 = vmatpush1.msra.mxu0 0.0
  %1056 = vmatprep.subr.mxu0 0.0
  %1057 = vmatpush1.msra.mxu0 0.0
  %1058 = vmatprep.subr.mxu0 0.0
  %1059 = vmatpush1.msra.mxu0 0.0
  %1060 = vmatprep.subr.mxu0 0.0
  %1061 = vmatpush1.msra.mxu0 0.0
  %1062 = vmatprep.subr.mxu0 0.0
  %1063 = vmatpush1.msra.mxu0 0.0
  %1064 = vmatprep.subr.mxu0 0.0
  %1065 = vmatpush1.msra.mxu0 0.0
  %1066 = vmatprep.subr.mxu0 0.0
  %1067 = vmatpush1.msra.mxu0 0.0
  %1068 = vmatprep.subr.mxu0 0.0
  %1069 = vmatpush1.msra.mxu0 0.0
  %1070 = vmatprep.subr.mxu0 0.0
  %1071 = vmatpush1.msra.mxu0 0.0
  %1072 = vmatprep.subr.mxu0 0.0
  %1073 = vmatpush1.msra.mxu0 0.0
  %1074 = vmatprep.subr.mxu0 0.0
  %1075 = vmatpush1.msra.mxu0 0.0
  %1076 = vmatprep.subr.mxu0 0.0
  %1077 = vmatpush1.msra.mxu0 0.0
  %1078 = vmatprep.subr.mxu0 0.0
  %1079 = vmatpush1.msra.mxu0 0.0
  %1080 = vmatprep.subr.mxu0 0.0
  %1081 = vmatpush1.msra.mxu0 0.0
  %1082 = vmatprep.subr.mxu0 0.0
  %1083 = vmatpush1.msra.mxu0 0.0
  %1084 = vmatprep.subr.mxu0 0.0
  %1085 = vmatpush1.msra.mxu0 0.0
  %1086 = vmatprep.subr.mxu0 0.0
  %1087 = vmatpush1.msra.mxu0 0.0
  %1088 = vmatprep.subr.mxu0 0.0
  %1089 = vmatpush1.msra.mxu0 0.0
  %1090 = vmatprep.subr.mxu0 0.0
  %1091 = vmatpush1.msra.mxu0 0.0
  %1092 = vmatprep.subr.mxu0 0.0
  %1093 = vmatpush1.msra.mxu0 0.0
  %1094 = vmatprep.subr.mxu0 0.0
  %1095 = vmatpush1.msra.mxu0 0.0
  %1096 = vmatprep.mubr.f32.mxu0 0.0
  %1097 = vmatmul.mubr.f32.gmra.mrb[0].mxu0 %v1009
  %v1098 = vpop.f32.mrb[0].mxu0
  %v1099 = vadd.f32 0.0, %v1098
  %v1100 = vpop.f32.mrb[0].mxu0
  %1101 = vmatprep.mubr.f32.mxu0 0.0
  %1102 = vmatmul.mubr.f32.gmra.mrb[0].mxu0 %v1012
  %v1103 = vpop.f32.mrb[0].mxu0
  %v1104 = vadd.f32 0.0, %v1103
  %v1105 = vpop.f32.mrb[0].mxu0
  %1106 = vmatprep.mubr.f32.mxu0 0.0
  %1107 = vmatmul.mubr.f32.gmra.mrb[0].mxu0 %v1015
  %v1108 = vpop.f32.mrb[0].mxu0
  %v1109 = vadd.f32 0.0, %v1108
  %v1110 = vpop.f32.mrb[0].mxu0
  %1111 = vmatprep.mubr.f32.mxu0 0.0
  %1112 = vmatmul.mubr.f32.gmra.mrb[0].mxu0 %v1018
  %v1113 = vpop.f32.mrb[0].mxu0
  %v1114 = vadd.f32 0.0, %v1113
  %v1115 = vpop.f32.mrb[0].mxu0
  %1116 = vmatprep.mubr.f32.mxu0 0.0
  %1117 = vmatmul.mubr.f32.gmra.mrb[0].mxu0 %v1021
  %v1118 = vpop.f32.mrb[0].mxu0
  %v1119 = vadd.f32 0.0, %v1118
  %v1120 = vpop.f32.mrb[0].mxu0
  %1121 = vmatprep.mubr.f32.mxu0 0.0
  %1122 = vmatmul.mubr.f32.gmra.mrb[0].mxu0 %v1024
  %v1123 = vpop.f32.mrb[0].mxu0
  %v1124 = vadd.f32 0.0, %v1123
  %v1125 = vpop.f32.mrb[0].mxu0
  %1126 = vmatprep.mubr.f32.mxu0 0.0
  %1127 = vmatmul.mubr.f32.gmra.mrb[0].mxu0 %v1027
  %v1128 = vpop.f32.mrb[0].mxu0
  %v1129 = vadd.f32 0.0, %v1128
  %v1130 = vpop.f32.mrb[0].mxu0
  %1131 = vmatprep.mubr.f32.mxu0 0.0
  %1132 = vmatmul.mubr.f32.gmra.mrb[0].mxu0 %v1030
  %v1133 = vpop.f32.mrb[0].mxu0
  %v1134 = vadd.f32 0.0, %v1133
  %v1135 = vpop.f32.mrb[0].mxu0
  %1136 = vdwg.mxu0
  %v1137 = vadd.f32 %v830, %v1099
  %v1138 = vadd.f32 %v835, %v1104
  %v1139 = vadd.f32 %v840, %v1109
  %v1140 = vadd.f32 %v845, %v1114
  %v1141 = vadd.f32 %v850, %v1119
  %v1142 = vadd.f32 %v855, %v1124
  %v1143 = vadd.f32 %v860, %v1129
  %v1144 = vadd.f32 %v865, %v1134
  %s1145 = scalar_lea.vmem %s4, 192
  %v1146 = vld [vmem:[%s1145] sm:$0xff]
  %v1147 = vld [vmem:[%s1145 + $0x8] sm:$0xff]
  %v1148 = vld [vmem:[%s1145 + $0x10] sm:$0xff]
  %v1149 = vld [vmem:[%s1145 + $0x18] sm:$0xff]
  %v1150 = vld [vmem:[%s1145 + $0x20] sm:$0xff]
  %v1151 = vld [vmem:[%s1145 + $0x28] sm:$0xff]
  %v1152 = vld [vmem:[%s1145 + $0x30] sm:$0xff]
  %v1153 = vld [vmem:[%s1145 + $0x38] sm:$0xff]
  %v1155 = vsel %vm339, %v1146, 0
  %v1158 = vsel %vm339, %v1147, 0
  %v1161 = vsel %vm339, %v1148, 0
  %v1164 = vsel %vm339, %v1149, 0
  %v1167 = vsel %vm339, %v1150, 0
  %v1170 = vsel %vm339, %v1151, 0
  %v1173 = vsel %vm339, %v1152, 0
  %v1176 = vsel %vm339, %v1153, 0
  %1178 = vmatprep.subr.mxu0 0.0
  %1179 = vmatpush1.msra.mxu0 %v323
  %1180 = vmatprep.subr.mxu0 0.0
  %1181 = vmatpush1.msra.mxu0 %v324
  %1182 = vmatprep.subr.mxu0 0.0
  %1183 = vmatpush1.msra.mxu0 %v325
  %1184 = vmatprep.subr.mxu0 0.0
  %1185 = vmatpush1.msra.mxu0 %v326
  %1186 = vmatprep.subr.mxu0 0.0
  %1187 = vmatpush1.msra.mxu0 %v327
  %1188 = vmatprep.subr.mxu0 0.0
  %1189 = vmatpush1.msra.mxu0 %v328
  %1190 = vmatprep.subr.mxu0 0.0
  %1191 = vmatpush1.msra.mxu0 %v329
  %1192 = vmatprep.subr.mxu0 0.0
  %1193 = vmatpush1.msra.mxu0 %v330
  %1194 = vmatprep.subr.mxu0 0.0
  %1195 = vmatpush1.msra.mxu0 0.0
  %1196 = vmatprep.subr.mxu0 0.0
  %1197 = vmatpush1.msra.mxu0 0.0
  %1198 = vmatprep.subr.mxu0 0.0
  %1199 = vmatpush1.msra.mxu0 0.0
  %1200 = vmatprep.subr.mxu0 0.0
  %1201 = vmatpush1.msra.mxu0 0.0
  %1202 = vmatprep.subr.mxu0 0.0
  %1203 = vmatpush1.msra.mxu0 0.0
  %1204 = vmatprep.subr.mxu0 0.0
  %1205 = vmatpush1.msra.mxu0 0.0
  %1206 = vmatprep.subr.mxu0 0.0
  %1207 = vmatpush1.msra.mxu0 0.0
  %1208 = vmatprep.subr.mxu0 0.0
  %1209 = vmatpush1.msra.mxu0 0.0
  %1210 = vmatprep.subr.mxu0 0.0
  %1211 = vmatpush1.msra.mxu0 0.0
  %1212 = vmatprep.subr.mxu0 0.0
  %1213 = vmatpush1.msra.mxu0 0.0
  %1214 = vmatprep.subr.mxu0 0.0
  %1215 = vmatpush1.msra.mxu0 0.0
  %1216 = vmatprep.subr.mxu0 0.0
  %1217 = vmatpush1.msra.mxu0 0.0
  %1218 = vmatprep.subr.mxu0 0.0
  %1219 = vmatpush1.msra.mxu0 0.0
  %1220 = vmatprep.subr.mxu0 0.0
  %1221 = vmatpush1.msra.mxu0 0.0
  %1222 = vmatprep.subr.mxu0 0.0
  %1223 = vmatpush1.msra.mxu0 0.0
  %1224 = vmatprep.subr.mxu0 0.0
  %1225 = vmatpush1.msra.mxu0 0.0
  %1226 = vmatprep.subr.mxu0 0.0
  %1227 = vmatpush1.msra.mxu0 0.0
  %1228 = vmatprep.subr.mxu0 0.0
  %1229 = vmatpush1.msra.mxu0 0.0
  %1230 = vmatprep.subr.mxu0 0.0
  %1231 = vmatpush1.msra.mxu0 0.0
  %1232 = vmatprep.subr.mxu0 0.0
  %1233 = vmatpush1.msra.mxu0 0.0
  %1234 = vmatprep.subr.mxu0 0.0
  %1235 = vmatpush1.msra.mxu0 0.0
  %1236 = vmatprep.subr.mxu0 0.0
  %1237 = vmatpush1.msra.mxu0 0.0
  %1238 = vmatprep.subr.mxu0 0.0
  %1239 = vmatpush1.msra.mxu0 0.0
  %1240 = vmatprep.subr.mxu0 0.0
  %1241 = vmatpush1.msra.mxu0 0.0
  %1242 = vmatprep.mubr.f32.mxu0 0.0
  %1243 = vmatmul.mubr.f32.gmra.mrb[0].mxu0 %v1155
  %v1244 = vpop.f32.mrb[0].mxu0
  %v1245 = vadd.f32 0.0, %v1244
  %v1246 = vpop.f32.mrb[0].mxu0
  %1247 = vmatprep.mubr.f32.mxu0 0.0
  %1248 = vmatmul.mubr.f32.gmra.mrb[0].mxu0 %v1158
  %v1249 = vpop.f32.mrb[0].mxu0
  %v1250 = vadd.f32 0.0, %v1249
  %v1251 = vpop.f32.mrb[0].mxu0
  %1252 = vmatprep.mubr.f32.mxu0 0.0
  %1253 = vmatmul.mubr.f32.gmra.mrb[0].mxu0 %v1161
  %v1254 = vpop.f32.mrb[0].mxu0
  %v1255 = vadd.f32 0.0, %v1254
  %v1256 = vpop.f32.mrb[0].mxu0
  %1257 = vmatprep.mubr.f32.mxu0 0.0
  %1258 = vmatmul.mubr.f32.gmra.mrb[0].mxu0 %v1164
  %v1259 = vpop.f32.mrb[0].mxu0
  %v1260 = vadd.f32 0.0, %v1259
  %v1261 = vpop.f32.mrb[0].mxu0
  %1262 = vmatprep.mubr.f32.mxu0 0.0
  %1263 = vmatmul.mubr.f32.gmra.mrb[0].mxu0 %v1167
  %v1264 = vpop.f32.mrb[0].mxu0
  %v1265 = vadd.f32 0.0, %v1264
  %v1266 = vpop.f32.mrb[0].mxu0
  %1267 = vmatprep.mubr.f32.mxu0 0.0
  %1268 = vmatmul.mubr.f32.gmra.mrb[0].mxu0 %v1170
  %v1269 = vpop.f32.mrb[0].mxu0
  %v1270 = vadd.f32 0.0, %v1269
  %v1271 = vpop.f32.mrb[0].mxu0
  %1272 = vmatprep.mubr.f32.mxu0 0.0
  %1273 = vmatmul.mubr.f32.gmra.mrb[0].mxu0 %v1173
  %v1274 = vpop.f32.mrb[0].mxu0
  %v1275 = vadd.f32 0.0, %v1274
  %v1276 = vpop.f32.mrb[0].mxu0
  %1277 = vmatprep.mubr.f32.mxu0 0.0
  %1278 = vmatmul.mubr.f32.gmra.mrb[0].mxu0 %v1176
  %v1279 = vpop.f32.mrb[0].mxu0
  %v1280 = vadd.f32 0.0, %v1279
  %v1281 = vpop.f32.mrb[0].mxu0
  %1282 = vdwg.mxu0
  %s1283 = scalar_lea.vmem %s5, 24
  %v1284 = vld [vmem:[%s1283] sm:$0xff]
  %v1286 = vsel %vm221, %v1245, 0
  %v1289 = vsel %vm221, %v1250, 0
  %v1292 = vsel %vm221, %v1255, 0
  %v1295 = vsel %vm221, %v1260, 0
  %v1298 = vsel %vm221, %v1265, 0
  %v1301 = vsel %vm221, %v1270, 0
  %v1304 = vsel %vm221, %v1275, 0
  %v1307 = vsel %vm221, %v1280, 0
  %1309 = vmatprep.subr.mxu0 0.0
  %1310 = vmatpush1.msra.mxu0 %v1284
  %1311 = vmatprep.subr.mxu0 0.0
  %1312 = vmatpush1.msra.mxu0 0.0
  %1313 = vmatprep.subr.mxu0 0.0
  %1314 = vmatpush1.msra.mxu0 0.0
  %1315 = vmatprep.subr.mxu0 0.0
  %1316 = vmatpush1.msra.mxu0 0.0
  %1317 = vmatprep.subr.mxu0 0.0
  %1318 = vmatpush1.msra.mxu0 0.0
  %1319 = vmatprep.subr.mxu0 0.0
  %1320 = vmatpush1.msra.mxu0 0.0
  %1321 = vmatprep.subr.mxu0 0.0
  %1322 = vmatpush1.msra.mxu0 0.0
  %1323 = vmatprep.subr.mxu0 0.0
  %1324 = vmatpush1.msra.mxu0 0.0
  %1325 = vmatprep.subr.mxu0 0.0
  %1326 = vmatpush1.msra.mxu0 0.0
  %1327 = vmatprep.subr.mxu0 0.0
  %1328 = vmatpush1.msra.mxu0 0.0
  %1329 = vmatprep.subr.mxu0 0.0
  %1330 = vmatpush1.msra.mxu0 0.0
  %1331 = vmatprep.subr.mxu0 0.0
  %1332 = vmatpush1.msra.mxu0 0.0
  %1333 = vmatprep.subr.mxu0 0.0
  %1334 = vmatpush1.msra.mxu0 0.0
  %1335 = vmatprep.subr.mxu0 0.0
  %1336 = vmatpush1.msra.mxu0 0.0
  %1337 = vmatprep.subr.mxu0 0.0
  %1338 = vmatpush1.msra.mxu0 0.0
  %1339 = vmatprep.subr.mxu0 0.0
  %1340 = vmatpush1.msra.mxu0 0.0
  %1341 = vmatprep.subr.mxu0 0.0
  %1342 = vmatpush1.msra.mxu0 0.0
  %1343 = vmatprep.subr.mxu0 0.0
  %1344 = vmatpush1.msra.mxu0 0.0
  %1345 = vmatprep.subr.mxu0 0.0
  %1346 = vmatpush1.msra.mxu0 0.0
  %1347 = vmatprep.subr.mxu0 0.0
  %1348 = vmatpush1.msra.mxu0 0.0
  %1349 = vmatprep.subr.mxu0 0.0
  %1350 = vmatpush1.msra.mxu0 0.0
  %1351 = vmatprep.subr.mxu0 0.0
  %1352 = vmatpush1.msra.mxu0 0.0
  %1353 = vmatprep.subr.mxu0 0.0
  %1354 = vmatpush1.msra.mxu0 0.0
  %1355 = vmatprep.subr.mxu0 0.0
  %1356 = vmatpush1.msra.mxu0 0.0
  %1357 = vmatprep.subr.mxu0 0.0
  %1358 = vmatpush1.msra.mxu0 0.0
  %1359 = vmatprep.subr.mxu0 0.0
  %1360 = vmatpush1.msra.mxu0 0.0
  %1361 = vmatprep.subr.mxu0 0.0
  %1362 = vmatpush1.msra.mxu0 0.0
  %1363 = vmatprep.subr.mxu0 0.0
  %1364 = vmatpush1.msra.mxu0 0.0
  %1365 = vmatprep.subr.mxu0 0.0
  %1366 = vmatpush1.msra.mxu0 0.0
  %1367 = vmatprep.subr.mxu0 0.0
  %1368 = vmatpush1.msra.mxu0 0.0
  %1369 = vmatprep.subr.mxu0 0.0
  %1370 = vmatpush1.msra.mxu0 0.0
  %1371 = vmatprep.subr.mxu0 0.0
  %1372 = vmatpush1.msra.mxu0 0.0
  %1373 = vmatprep.mubr.f32.mxu0 0.0
  %1374 = vmatmul.mubr.f32.gmra.mrb[0].mxu0 %v1286
  %v1375 = vpop.f32.mrb[0].mxu0
  %v1376 = vadd.f32 0.0, %v1375
  %v1377 = vpop.f32.mrb[0].mxu0
  %1378 = vmatprep.mubr.f32.mxu0 0.0
  %1379 = vmatmul.mubr.f32.gmra.mrb[0].mxu0 %v1289
  %v1380 = vpop.f32.mrb[0].mxu0
  %v1381 = vadd.f32 0.0, %v1380
  %v1382 = vpop.f32.mrb[0].mxu0
  %1383 = vmatprep.mubr.f32.mxu0 0.0
  %1384 = vmatmul.mubr.f32.gmra.mrb[0].mxu0 %v1292
  %v1385 = vpop.f32.mrb[0].mxu0
  %v1386 = vadd.f32 0.0, %v1385
  %v1387 = vpop.f32.mrb[0].mxu0
  %1388 = vmatprep.mubr.f32.mxu0 0.0
  %1389 = vmatmul.mubr.f32.gmra.mrb[0].mxu0 %v1295
  %v1390 = vpop.f32.mrb[0].mxu0
  %v1391 = vadd.f32 0.0, %v1390
  %v1392 = vpop.f32.mrb[0].mxu0
  %1393 = vmatprep.mubr.f32.mxu0 0.0
  %1394 = vmatmul.mubr.f32.gmra.mrb[0].mxu0 %v1298
  %v1395 = vpop.f32.mrb[0].mxu0
  %v1396 = vadd.f32 0.0, %v1395
  %v1397 = vpop.f32.mrb[0].mxu0
  %1398 = vmatprep.mubr.f32.mxu0 0.0
  %1399 = vmatmul.mubr.f32.gmra.mrb[0].mxu0 %v1301
  %v1400 = vpop.f32.mrb[0].mxu0
  %v1401 = vadd.f32 0.0, %v1400
  %v1402 = vpop.f32.mrb[0].mxu0
  %1403 = vmatprep.mubr.f32.mxu0 0.0
  %1404 = vmatmul.mubr.f32.gmra.mrb[0].mxu0 %v1304
  %v1405 = vpop.f32.mrb[0].mxu0
  %v1406 = vadd.f32 0.0, %v1405
  %v1407 = vpop.f32.mrb[0].mxu0
  %1408 = vmatprep.mubr.f32.mxu0 0.0
  %1409 = vmatmul.mubr.f32.gmra.mrb[0].mxu0 %v1307
  %v1410 = vpop.f32.mrb[0].mxu0
  %v1411 = vadd.f32 0.0, %v1410
  %v1412 = vpop.f32.mrb[0].mxu0
  %1413 = vdwg.mxu0
  %v1414 = vadd.f32 %v1137, %v1376
  %v1415 = vadd.f32 %v1138, %v1381
  %v1416 = vadd.f32 %v1139, %v1386
  %v1417 = vadd.f32 %v1140, %v1391
  %v1418 = vadd.f32 %v1141, %v1396
  %v1419 = vadd.f32 %v1142, %v1401
  %v1420 = vadd.f32 %v1143, %v1406
  %v1421 = vadd.f32 %v1144, %v1411
  %s1422 = scalar_lea.vmem %s4, 256
  %v1423 = vld [vmem:[%s1422] sm:$0xff]
  %v1424 = vld [vmem:[%s1422 + $0x8] sm:$0xff]
  %v1425 = vld [vmem:[%s1422 + $0x10] sm:$0xff]
  %v1426 = vld [vmem:[%s1422 + $0x18] sm:$0xff]
  %v1427 = vld [vmem:[%s1422 + $0x20] sm:$0xff]
  %v1428 = vld [vmem:[%s1422 + $0x28] sm:$0xff]
  %v1429 = vld [vmem:[%s1422 + $0x30] sm:$0xff]
  %v1430 = vld [vmem:[%s1422 + $0x38] sm:$0xff]
  %v1432 = vsel %vm339, %v1423, 0
  %v1435 = vsel %vm339, %v1424, 0
  %v1438 = vsel %vm339, %v1425, 0
  %v1441 = vsel %vm339, %v1426, 0
  %v1444 = vsel %vm339, %v1427, 0
  %v1447 = vsel %vm339, %v1428, 0
  %v1450 = vsel %vm339, %v1429, 0
  %v1453 = vsel %vm339, %v1430, 0
  %1455 = vmatprep.subr.mxu0 0.0
  %1456 = vmatpush1.msra.mxu0 %v323
  %1457 = vmatprep.subr.mxu0 0.0
  %1458 = vmatpush1.msra.mxu0 %v324
  %1459 = vmatprep.subr.mxu0 0.0
  %1460 = vmatpush1.msra.mxu0 %v325
  %1461 = vmatprep.subr.mxu0 0.0
  %1462 = vmatpush1.msra.mxu0 %v326
  %1463 = vmatprep.subr.mxu0 0.0
  %1464 = vmatpush1.msra.mxu0 %v327
  %1465 = vmatprep.subr.mxu0 0.0
  %1466 = vmatpush1.msra.mxu0 %v328
  %1467 = vmatprep.subr.mxu0 0.0
  %1468 = vmatpush1.msra.mxu0 %v329
  %1469 = vmatprep.subr.mxu0 0.0
  %1470 = vmatpush1.msra.mxu0 %v330
  %1471 = vmatprep.subr.mxu0 0.0
  %1472 = vmatpush1.msra.mxu0 0.0
  %1473 = vmatprep.subr.mxu0 0.0
  %1474 = vmatpush1.msra.mxu0 0.0
  %1475 = vmatprep.subr.mxu0 0.0
  %1476 = vmatpush1.msra.mxu0 0.0
  %1477 = vmatprep.subr.mxu0 0.0
  %1478 = vmatpush1.msra.mxu0 0.0
  %1479 = vmatprep.subr.mxu0 0.0
  %1480 = vmatpush1.msra.mxu0 0.0
  %1481 = vmatprep.subr.mxu0 0.0
  %1482 = vmatpush1.msra.mxu0 0.0
  %1483 = vmatprep.subr.mxu0 0.0
  %1484 = vmatpush1.msra.mxu0 0.0
  %1485 = vmatprep.subr.mxu0 0.0
  %1486 = vmatpush1.msra.mxu0 0.0
  %1487 = vmatprep.subr.mxu0 0.0
  %1488 = vmatpush1.msra.mxu0 0.0
  %1489 = vmatprep.subr.mxu0 0.0
  %1490 = vmatpush1.msra.mxu0 0.0
  %1491 = vmatprep.subr.mxu0 0.0
  %1492 = vmatpush1.msra.mxu0 0.0
  %1493 = vmatprep.subr.mxu0 0.0
  %1494 = vmatpush1.msra.mxu0 0.0
  %1495 = vmatprep.subr.mxu0 0.0
  %1496 = vmatpush1.msra.mxu0 0.0
  %1497 = vmatprep.subr.mxu0 0.0
  %1498 = vmatpush1.msra.mxu0 0.0
  %1499 = vmatprep.subr.mxu0 0.0
  %1500 = vmatpush1.msra.mxu0 0.0
  %1501 = vmatprep.subr.mxu0 0.0
  %1502 = vmatpush1.msra.mxu0 0.0
  %1503 = vmatprep.subr.mxu0 0.0
  %1504 = vmatpush1.msra.mxu0 0.0
  %1505 = vmatprep.subr.mxu0 0.0
  %1506 = vmatpush1.msra.mxu0 0.0
  %1507 = vmatprep.subr.mxu0 0.0
  %1508 = vmatpush1.msra.mxu0 0.0
  %1509 = vmatprep.subr.mxu0 0.0
  %1510 = vmatpush1.msra.mxu0 0.0
  %1511 = vmatprep.subr.mxu0 0.0
  %1512 = vmatpush1.msra.mxu0 0.0
  %1513 = vmatprep.subr.mxu0 0.0
  %1514 = vmatpush1.msra.mxu0 0.0
  %1515 = vmatprep.subr.mxu0 0.0
  %1516 = vmatpush1.msra.mxu0 0.0
  %1517 = vmatprep.subr.mxu0 0.0
  %1518 = vmatpush1.msra.mxu0 0.0
  %1519 = vmatprep.mubr.f32.mxu0 0.0
  %1520 = vmatmul.mubr.f32.gmra.mrb[0].mxu0 %v1432
  %v1521 = vpop.f32.mrb[0].mxu0
  %v1522 = vadd.f32 0.0, %v1521
  %v1523 = vpop.f32.mrb[0].mxu0
  %1524 = vmatprep.mubr.f32.mxu0 0.0
  %1525 = vmatmul.mubr.f32.gmra.mrb[0].mxu0 %v1435
  %v1526 = vpop.f32.mrb[0].mxu0
  %v1527 = vadd.f32 0.0, %v1526
  %v1528 = vpop.f32.mrb[0].mxu0
  %1529 = vmatprep.mubr.f32.mxu0 0.0
  %1530 = vmatmul.mubr.f32.gmra.mrb[0].mxu0 %v1438
  %v1531 = vpop.f32.mrb[0].mxu0
  %v1532 = vadd.f32 0.0, %v1531
  %v1533 = vpop.f32.mrb[0].mxu0
  %1534 = vmatprep.mubr.f32.mxu0 0.0
  %1535 = vmatmul.mubr.f32.gmra.mrb[0].mxu0 %v1441
  %v1536 = vpop.f32.mrb[0].mxu0
  %v1537 = vadd.f32 0.0, %v1536
  %v1538 = vpop.f32.mrb[0].mxu0
  %1539 = vmatprep.mubr.f32.mxu0 0.0
  %1540 = vmatmul.mubr.f32.gmra.mrb[0].mxu0 %v1444
  %v1541 = vpop.f32.mrb[0].mxu0
  %v1542 = vadd.f32 0.0, %v1541
  %v1543 = vpop.f32.mrb[0].mxu0
  %1544 = vmatprep.mubr.f32.mxu0 0.0
  %1545 = vmatmul.mubr.f32.gmra.mrb[0].mxu0 %v1447
  %v1546 = vpop.f32.mrb[0].mxu0
  %v1547 = vadd.f32 0.0, %v1546
  %v1548 = vpop.f32.mrb[0].mxu0
  %1549 = vmatprep.mubr.f32.mxu0 0.0
  %1550 = vmatmul.mubr.f32.gmra.mrb[0].mxu0 %v1450
  %v1551 = vpop.f32.mrb[0].mxu0
  %v1552 = vadd.f32 0.0, %v1551
  %v1553 = vpop.f32.mrb[0].mxu0
  %1554 = vmatprep.mubr.f32.mxu0 0.0
  %1555 = vmatmul.mubr.f32.gmra.mrb[0].mxu0 %v1453
  %v1556 = vpop.f32.mrb[0].mxu0
  %v1557 = vadd.f32 0.0, %v1556
  %v1558 = vpop.f32.mrb[0].mxu0
  %1559 = vdwg.mxu0
  %s1560 = scalar_lea.vmem %s5, 32
  %v1561 = vld [vmem:[%s1560] sm:$0xff]
  %v1563 = vsel %vm221, %v1522, 0
  %v1566 = vsel %vm221, %v1527, 0
  %v1569 = vsel %vm221, %v1532, 0
  %v1572 = vsel %vm221, %v1537, 0
  %v1575 = vsel %vm221, %v1542, 0
  %v1578 = vsel %vm221, %v1547, 0
  %v1581 = vsel %vm221, %v1552, 0
  %v1584 = vsel %vm221, %v1557, 0
  %1586 = vmatprep.subr.mxu0 0.0
  %1587 = vmatpush1.msra.mxu0 %v1561
  %1588 = vmatprep.subr.mxu0 0.0
  %1589 = vmatpush1.msra.mxu0 0.0
  %1590 = vmatprep.subr.mxu0 0.0
  %1591 = vmatpush1.msra.mxu0 0.0
  %1592 = vmatprep.subr.mxu0 0.0
  %1593 = vmatpush1.msra.mxu0 0.0
  %1594 = vmatprep.subr.mxu0 0.0
  %1595 = vmatpush1.msra.mxu0 0.0
  %1596 = vmatprep.subr.mxu0 0.0
  %1597 = vmatpush1.msra.mxu0 0.0
  %1598 = vmatprep.subr.mxu0 0.0
  %1599 = vmatpush1.msra.mxu0 0.0
  %1600 = vmatprep.subr.mxu0 0.0
  %1601 = vmatpush1.msra.mxu0 0.0
  %1602 = vmatprep.subr.mxu0 0.0
  %1603 = vmatpush1.msra.mxu0 0.0
  %1604 = vmatprep.subr.mxu0 0.0
  %1605 = vmatpush1.msra.mxu0 0.0
  %1606 = vmatprep.subr.mxu0 0.0
  %1607 = vmatpush1.msra.mxu0 0.0
  %1608 = vmatprep.subr.mxu0 0.0
  %1609 = vmatpush1.msra.mxu0 0.0
  %1610 = vmatprep.subr.mxu0 0.0
  %1611 = vmatpush1.msra.mxu0 0.0
  %1612 = vmatprep.subr.mxu0 0.0
  %1613 = vmatpush1.msra.mxu0 0.0
  %1614 = vmatprep.subr.mxu0 0.0
  %1615 = vmatpush1.msra.mxu0 0.0
  %1616 = vmatprep.subr.mxu0 0.0
  %1617 = vmatpush1.msra.mxu0 0.0
  %1618 = vmatprep.subr.mxu0 0.0
  %1619 = vmatpush1.msra.mxu0 0.0
  %1620 = vmatprep.subr.mxu0 0.0
  %1621 = vmatpush1.msra.mxu0 0.0
  %1622 = vmatprep.subr.mxu0 0.0
  %1623 = vmatpush1.msra.mxu0 0.0
  %1624 = vmatprep.subr.mxu0 0.0
  %1625 = vmatpush1.msra.mxu0 0.0
  %1626 = vmatprep.subr.mxu0 0.0
  %1627 = vmatpush1.msra.mxu0 0.0
  %1628 = vmatprep.subr.mxu0 0.0
  %1629 = vmatpush1.msra.mxu0 0.0
  %1630 = vmatprep.subr.mxu0 0.0
  %1631 = vmatpush1.msra.mxu0 0.0
  %1632 = vmatprep.subr.mxu0 0.0
  %1633 = vmatpush1.msra.mxu0 0.0
  %1634 = vmatprep.subr.mxu0 0.0
  %1635 = vmatpush1.msra.mxu0 0.0
  %1636 = vmatprep.subr.mxu0 0.0
  %1637 = vmatpush1.msra.mxu0 0.0
  %1638 = vmatprep.subr.mxu0 0.0
  %1639 = vmatpush1.msra.mxu0 0.0
  %1640 = vmatprep.subr.mxu0 0.0
  %1641 = vmatpush1.msra.mxu0 0.0
  %1642 = vmatprep.subr.mxu0 0.0
  %1643 = vmatpush1.msra.mxu0 0.0
  %1644 = vmatprep.subr.mxu0 0.0
  %1645 = vmatpush1.msra.mxu0 0.0
  %1646 = vmatprep.subr.mxu0 0.0
  %1647 = vmatpush1.msra.mxu0 0.0
  %1648 = vmatprep.subr.mxu0 0.0
  %1649 = vmatpush1.msra.mxu0 0.0
  %1650 = vmatprep.mubr.f32.mxu0 0.0
  %1651 = vmatmul.mubr.f32.gmra.mrb[0].mxu0 %v1563
  %v1652 = vpop.f32.mrb[0].mxu0
  %v1653 = vadd.f32 0.0, %v1652
  %v1654 = vpop.f32.mrb[0].mxu0
  %1655 = vmatprep.mubr.f32.mxu0 0.0
  %1656 = vmatmul.mubr.f32.gmra.mrb[0].mxu0 %v1566
  %v1657 = vpop.f32.mrb[0].mxu0
  %v1658 = vadd.f32 0.0, %v1657
  %v1659 = vpop.f32.mrb[0].mxu0
  %1660 = vmatprep.mubr.f32.mxu0 0.0
  %1661 = vmatmul.mubr.f32.gmra.mrb[0].mxu0 %v1569
  %v1662 = vpop.f32.mrb[0].mxu0
  %v1663 = vadd.f32 0.0, %v1662
  %v1664 = vpop.f32.mrb[0].mxu0
  %1665 = vmatprep.mubr.f32.mxu0 0.0
  %1666 = vmatmul.mubr.f32.gmra.mrb[0].mxu0 %v1572
  %v1667 = vpop.f32.mrb[0].mxu0
  %v1668 = vadd.f32 0.0, %v1667
  %v1669 = vpop.f32.mrb[0].mxu0
  %1670 = vmatprep.mubr.f32.mxu0 0.0
  %1671 = vmatmul.mubr.f32.gmra.mrb[0].mxu0 %v1575
  %v1672 = vpop.f32.mrb[0].mxu0
  %v1673 = vadd.f32 0.0, %v1672
  %v1674 = vpop.f32.mrb[0].mxu0
  %1675 = vmatprep.mubr.f32.mxu0 0.0
  %1676 = vmatmul.mubr.f32.gmra.mrb[0].mxu0 %v1578
  %v1677 = vpop.f32.mrb[0].mxu0
  %v1678 = vadd.f32 0.0, %v1677
  %v1679 = vpop.f32.mrb[0].mxu0
  %1680 = vmatprep.mubr.f32.mxu0 0.0
  %1681 = vmatmul.mubr.f32.gmra.mrb[0].mxu0 %v1581
  %v1682 = vpop.f32.mrb[0].mxu0
  %v1683 = vadd.f32 0.0, %v1682
  %v1684 = vpop.f32.mrb[0].mxu0
  %1685 = vmatprep.mubr.f32.mxu0 0.0
  %1686 = vmatmul.mubr.f32.gmra.mrb[0].mxu0 %v1584
  %v1687 = vpop.f32.mrb[0].mxu0
  %v1688 = vadd.f32 0.0, %v1687
  %v1689 = vpop.f32.mrb[0].mxu0
  %1690 = vdwg.mxu0
  %v1691 = vadd.f32 %v1414, %v1653
  %v1692 = vadd.f32 %v1415, %v1658
  %v1693 = vadd.f32 %v1416, %v1663
  %v1694 = vadd.f32 %v1417, %v1668
  %v1695 = vadd.f32 %v1418, %v1673
  %v1696 = vadd.f32 %v1419, %v1678
  %v1697 = vadd.f32 %v1420, %v1683
  %v1698 = vadd.f32 %v1421, %v1688
  %s1699 = scalar_lea.vmem %s4, 320
  %v1700 = vld [vmem:[%s1699] sm:$0xff]
  %v1701 = vld [vmem:[%s1699 + $0x8] sm:$0xff]
  %v1702 = vld [vmem:[%s1699 + $0x10] sm:$0xff]
  %v1703 = vld [vmem:[%s1699 + $0x18] sm:$0xff]
  %v1704 = vld [vmem:[%s1699 + $0x20] sm:$0xff]
  %v1705 = vld [vmem:[%s1699 + $0x28] sm:$0xff]
  %v1706 = vld [vmem:[%s1699 + $0x30] sm:$0xff]
  %v1707 = vld [vmem:[%s1699 + $0x38] sm:$0xff]
  %v1709 = vsel %vm339, %v1700, 0
  %v1712 = vsel %vm339, %v1701, 0
  %v1715 = vsel %vm339, %v1702, 0
  %v1718 = vsel %vm339, %v1703, 0
  %v1721 = vsel %vm339, %v1704, 0
  %v1724 = vsel %vm339, %v1705, 0
  %v1727 = vsel %vm339, %v1706, 0
  %v1730 = vsel %vm339, %v1707, 0
  %1732 = vmatprep.subr.mxu0 0.0
  %1733 = vmatpush1.msra.mxu0 %v323
  %1734 = vmatprep.subr.mxu0 0.0
  %1735 = vmatpush1.msra.mxu0 %v324
  %1736 = vmatprep.subr.mxu0 0.0
  %1737 = vmatpush1.msra.mxu0 %v325
  %1738 = vmatprep.subr.mxu0 0.0
  %1739 = vmatpush1.msra.mxu0 %v326
  %1740 = vmatprep.subr.mxu0 0.0
  %1741 = vmatpush1.msra.mxu0 %v327
  %1742 = vmatprep.subr.mxu0 0.0
  %1743 = vmatpush1.msra.mxu0 %v328
  %1744 = vmatprep.subr.mxu0 0.0
  %1745 = vmatpush1.msra.mxu0 %v329
  %1746 = vmatprep.subr.mxu0 0.0
  %1747 = vmatpush1.msra.mxu0 %v330
  %1748 = vmatprep.subr.mxu0 0.0
  %1749 = vmatpush1.msra.mxu0 0.0
  %1750 = vmatprep.subr.mxu0 0.0
  %1751 = vmatpush1.msra.mxu0 0.0
  %1752 = vmatprep.subr.mxu0 0.0
  %1753 = vmatpush1.msra.mxu0 0.0
  %1754 = vmatprep.subr.mxu0 0.0
  %1755 = vmatpush1.msra.mxu0 0.0
  %1756 = vmatprep.subr.mxu0 0.0
  %1757 = vmatpush1.msra.mxu0 0.0
  %1758 = vmatprep.subr.mxu0 0.0
  %1759 = vmatpush1.msra.mxu0 0.0
  %1760 = vmatprep.subr.mxu0 0.0
  %1761 = vmatpush1.msra.mxu0 0.0
  %1762 = vmatprep.subr.mxu0 0.0
  %1763 = vmatpush1.msra.mxu0 0.0
  %1764 = vmatprep.subr.mxu0 0.0
  %1765 = vmatpush1.msra.mxu0 0.0
  %1766 = vmatprep.subr.mxu0 0.0
  %1767 = vmatpush1.msra.mxu0 0.0
  %1768 = vmatprep.subr.mxu0 0.0
  %1769 = vmatpush1.msra.mxu0 0.0
  %1770 = vmatprep.subr.mxu0 0.0
  %1771 = vmatpush1.msra.mxu0 0.0
  %1772 = vmatprep.subr.mxu0 0.0
  %1773 = vmatpush1.msra.mxu0 0.0
  %1774 = vmatprep.subr.mxu0 0.0
  %1775 = vmatpush1.msra.mxu0 0.0
  %1776 = vmatprep.subr.mxu0 0.0
  %1777 = vmatpush1.msra.mxu0 0.0
  %1778 = vmatprep.subr.mxu0 0.0
  %1779 = vmatpush1.msra.mxu0 0.0
  %1780 = vmatprep.subr.mxu0 0.0
  %1781 = vmatpush1.msra.mxu0 0.0
  %1782 = vmatprep.subr.mxu0 0.0
  %1783 = vmatpush1.msra.mxu0 0.0
  %1784 = vmatprep.subr.mxu0 0.0
  %1785 = vmatpush1.msra.mxu0 0.0
  %1786 = vmatprep.subr.mxu0 0.0
  %1787 = vmatpush1.msra.mxu0 0.0
  %1788 = vmatprep.subr.mxu0 0.0
  %1789 = vmatpush1.msra.mxu0 0.0
  %1790 = vmatprep.subr.mxu0 0.0
  %1791 = vmatpush1.msra.mxu0 0.0
  %1792 = vmatprep.subr.mxu0 0.0
  %1793 = vmatpush1.msra.mxu0 0.0
  %1794 = vmatprep.subr.mxu0 0.0
  %1795 = vmatpush1.msra.mxu0 0.0
  %1796 = vmatprep.mubr.f32.mxu0 0.0
  %1797 = vmatmul.mubr.f32.gmra.mrb[0].mxu0 %v1709
  %v1798 = vpop.f32.mrb[0].mxu0
  %v1799 = vadd.f32 0.0, %v1798
  %v1800 = vpop.f32.mrb[0].mxu0
  %1801 = vmatprep.mubr.f32.mxu0 0.0
  %1802 = vmatmul.mubr.f32.gmra.mrb[0].mxu0 %v1712
  %v1803 = vpop.f32.mrb[0].mxu0
  %v1804 = vadd.f32 0.0, %v1803
  %v1805 = vpop.f32.mrb[0].mxu0
  %1806 = vmatprep.mubr.f32.mxu0 0.0
  %1807 = vmatmul.mubr.f32.gmra.mrb[0].mxu0 %v1715
  %v1808 = vpop.f32.mrb[0].mxu0
  %v1809 = vadd.f32 0.0, %v1808
  %v1810 = vpop.f32.mrb[0].mxu0
  %1811 = vmatprep.mubr.f32.mxu0 0.0
  %1812 = vmatmul.mubr.f32.gmra.mrb[0].mxu0 %v1718
  %v1813 = vpop.f32.mrb[0].mxu0
  %v1814 = vadd.f32 0.0, %v1813
  %v1815 = vpop.f32.mrb[0].mxu0
  %1816 = vmatprep.mubr.f32.mxu0 0.0
  %1817 = vmatmul.mubr.f32.gmra.mrb[0].mxu0 %v1721
  %v1818 = vpop.f32.mrb[0].mxu0
  %v1819 = vadd.f32 0.0, %v1818
  %v1820 = vpop.f32.mrb[0].mxu0
  %1821 = vmatprep.mubr.f32.mxu0 0.0
  %1822 = vmatmul.mubr.f32.gmra.mrb[0].mxu0 %v1724
  %v1823 = vpop.f32.mrb[0].mxu0
  %v1824 = vadd.f32 0.0, %v1823
  %v1825 = vpop.f32.mrb[0].mxu0
  %1826 = vmatprep.mubr.f32.mxu0 0.0
  %1827 = vmatmul.mubr.f32.gmra.mrb[0].mxu0 %v1727
  %v1828 = vpop.f32.mrb[0].mxu0
  %v1829 = vadd.f32 0.0, %v1828
  %v1830 = vpop.f32.mrb[0].mxu0
  %1831 = vmatprep.mubr.f32.mxu0 0.0
  %1832 = vmatmul.mubr.f32.gmra.mrb[0].mxu0 %v1730
  %v1833 = vpop.f32.mrb[0].mxu0
  %v1834 = vadd.f32 0.0, %v1833
  %v1835 = vpop.f32.mrb[0].mxu0
  %1836 = vdwg.mxu0
  %s1837 = scalar_lea.vmem %s5, 40
  %v1838 = vld [vmem:[%s1837] sm:$0xff]
  %v1840 = vsel %vm221, %v1799, 0
  %v1843 = vsel %vm221, %v1804, 0
  %v1846 = vsel %vm221, %v1809, 0
  %v1849 = vsel %vm221, %v1814, 0
  %v1852 = vsel %vm221, %v1819, 0
  %v1855 = vsel %vm221, %v1824, 0
  %v1858 = vsel %vm221, %v1829, 0
  %v1861 = vsel %vm221, %v1834, 0
  %1863 = vmatprep.subr.mxu0 0.0
  %1864 = vmatpush1.msra.mxu0 %v1838
  %1865 = vmatprep.subr.mxu0 0.0
  %1866 = vmatpush1.msra.mxu0 0.0
  %1867 = vmatprep.subr.mxu0 0.0
  %1868 = vmatpush1.msra.mxu0 0.0
  %1869 = vmatprep.subr.mxu0 0.0
  %1870 = vmatpush1.msra.mxu0 0.0
  %1871 = vmatprep.subr.mxu0 0.0
  %1872 = vmatpush1.msra.mxu0 0.0
  %1873 = vmatprep.subr.mxu0 0.0
  %1874 = vmatpush1.msra.mxu0 0.0
  %1875 = vmatprep.subr.mxu0 0.0
  %1876 = vmatpush1.msra.mxu0 0.0
  %1877 = vmatprep.subr.mxu0 0.0
  %1878 = vmatpush1.msra.mxu0 0.0
  %1879 = vmatprep.subr.mxu0 0.0
  %1880 = vmatpush1.msra.mxu0 0.0
  %1881 = vmatprep.subr.mxu0 0.0
  %1882 = vmatpush1.msra.mxu0 0.0
  %1883 = vmatprep.subr.mxu0 0.0
  %1884 = vmatpush1.msra.mxu0 0.0
  %1885 = vmatprep.subr.mxu0 0.0
  %1886 = vmatpush1.msra.mxu0 0.0
  %1887 = vmatprep.subr.mxu0 0.0
  %1888 = vmatpush1.msra.mxu0 0.0
  %1889 = vmatprep.subr.mxu0 0.0
  %1890 = vmatpush1.msra.mxu0 0.0
  %1891 = vmatprep.subr.mxu0 0.0
  %1892 = vmatpush1.msra.mxu0 0.0
  %1893 = vmatprep.subr.mxu0 0.0
  %1894 = vmatpush1.msra.mxu0 0.0
  %1895 = vmatprep.subr.mxu0 0.0
  %1896 = vmatpush1.msra.mxu0 0.0
  %1897 = vmatprep.subr.mxu0 0.0
  %1898 = vmatpush1.msra.mxu0 0.0
  %1899 = vmatprep.subr.mxu0 0.0
  %1900 = vmatpush1.msra.mxu0 0.0
  %1901 = vmatprep.subr.mxu0 0.0
  %1902 = vmatpush1.msra.mxu0 0.0
  %1903 = vmatprep.subr.mxu0 0.0
  %1904 = vmatpush1.msra.mxu0 0.0
  %1905 = vmatprep.subr.mxu0 0.0
  %1906 = vmatpush1.msra.mxu0 0.0
  %1907 = vmatprep.subr.mxu0 0.0
  %1908 = vmatpush1.msra.mxu0 0.0
  %1909 = vmatprep.subr.mxu0 0.0
  %1910 = vmatpush1.msra.mxu0 0.0
  %1911 = vmatprep.subr.mxu0 0.0
  %1912 = vmatpush1.msra.mxu0 0.0
  %1913 = vmatprep.subr.mxu0 0.0
  %1914 = vmatpush1.msra.mxu0 0.0
  %1915 = vmatprep.subr.mxu0 0.0
  %1916 = vmatpush1.msra.mxu0 0.0
  %1917 = vmatprep.subr.mxu0 0.0
  %1918 = vmatpush1.msra.mxu0 0.0
  %1919 = vmatprep.subr.mxu0 0.0
  %1920 = vmatpush1.msra.mxu0 0.0
  %1921 = vmatprep.subr.mxu0 0.0
  %1922 = vmatpush1.msra.mxu0 0.0
  %1923 = vmatprep.subr.mxu0 0.0
  %1924 = vmatpush1.msra.mxu0 0.0
  %1925 = vmatprep.subr.mxu0 0.0
  %1926 = vmatpush1.msra.mxu0 0.0
  %1927 = vmatprep.mubr.f32.mxu0 0.0
  %1928 = vmatmul.mubr.f32.gmra.mrb[0].mxu0 %v1840
  %v1929 = vpop.f32.mrb[0].mxu0
  %v1930 = vadd.f32 0.0, %v1929
  %v1931 = vpop.f32.mrb[0].mxu0
  %1932 = vmatprep.mubr.f32.mxu0 0.0
  %1933 = vmatmul.mubr.f32.gmra.mrb[0].mxu0 %v1843
  %v1934 = vpop.f32.mrb[0].mxu0
  %v1935 = vadd.f32 0.0, %v1934
  %v1936 = vpop.f32.mrb[0].mxu0
  %1937 = vmatprep.mubr.f32.mxu0 0.0
  %1938 = vmatmul.mubr.f32.gmra.mrb[0].mxu0 %v1846
  %v1939 = vpop.f32.mrb[0].mxu0
  %v1940 = vadd.f32 0.0, %v1939
  %v1941 = vpop.f32.mrb[0].mxu0
  %1942 = vmatprep.mubr.f32.mxu0 0.0
  %1943 = vmatmul.mubr.f32.gmra.mrb[0].mxu0 %v1849
  %v1944 = vpop.f32.mrb[0].mxu0
  %v1945 = vadd.f32 0.0, %v1944
  %v1946 = vpop.f32.mrb[0].mxu0
  %1947 = vmatprep.mubr.f32.mxu0 0.0
  %1948 = vmatmul.mubr.f32.gmra.mrb[0].mxu0 %v1852
  %v1949 = vpop.f32.mrb[0].mxu0
  %v1950 = vadd.f32 0.0, %v1949
  %v1951 = vpop.f32.mrb[0].mxu0
  %1952 = vmatprep.mubr.f32.mxu0 0.0
  %1953 = vmatmul.mubr.f32.gmra.mrb[0].mxu0 %v1855
  %v1954 = vpop.f32.mrb[0].mxu0
  %v1955 = vadd.f32 0.0, %v1954
  %v1956 = vpop.f32.mrb[0].mxu0
  %1957 = vmatprep.mubr.f32.mxu0 0.0
  %1958 = vmatmul.mubr.f32.gmra.mrb[0].mxu0 %v1858
  %v1959 = vpop.f32.mrb[0].mxu0
  %v1960 = vadd.f32 0.0, %v1959
  %v1961 = vpop.f32.mrb[0].mxu0
  %1962 = vmatprep.mubr.f32.mxu0 0.0
  %1963 = vmatmul.mubr.f32.gmra.mrb[0].mxu0 %v1861
  %v1964 = vpop.f32.mrb[0].mxu0
  %v1965 = vadd.f32 0.0, %v1964
  %v1966 = vpop.f32.mrb[0].mxu0
  %1967 = vdwg.mxu0
  %v1968 = vadd.f32 %v1691, %v1930
  %v1969 = vadd.f32 %v1692, %v1935
  %v1970 = vadd.f32 %v1693, %v1940
  %v1971 = vadd.f32 %v1694, %v1945
  %v1972 = vadd.f32 %v1695, %v1950
  %v1973 = vadd.f32 %v1696, %v1955
  %v1974 = vadd.f32 %v1697, %v1960
  %v1975 = vadd.f32 %v1698, %v1965
  %s1976 = scalar_lea.vmem %s4, 384
  %v1977 = vld [vmem:[%s1976] sm:$0xff]
  %v1978 = vld [vmem:[%s1976 + $0x8] sm:$0xff]
  %v1979 = vld [vmem:[%s1976 + $0x10] sm:$0xff]
  %v1980 = vld [vmem:[%s1976 + $0x18] sm:$0xff]
  %v1981 = vld [vmem:[%s1976 + $0x20] sm:$0xff]
  %v1982 = vld [vmem:[%s1976 + $0x28] sm:$0xff]
  %v1983 = vld [vmem:[%s1976 + $0x30] sm:$0xff]
  %v1984 = vld [vmem:[%s1976 + $0x38] sm:$0xff]
  %v1986 = vsel %vm339, %v1977, 0
  %v1989 = vsel %vm339, %v1978, 0
  %v1992 = vsel %vm339, %v1979, 0
  %v1995 = vsel %vm339, %v1980, 0
  %v1998 = vsel %vm339, %v1981, 0
  %v2001 = vsel %vm339, %v1982, 0
  %v2004 = vsel %vm339, %v1983, 0
  %v2007 = vsel %vm339, %v1984, 0
  %2009 = vmatprep.subr.mxu0 0.0
  %2010 = vmatpush1.msra.mxu0 %v323
  %2011 = vmatprep.subr.mxu0 0.0
  %2012 = vmatpush1.msra.mxu0 %v324
  %2013 = vmatprep.subr.mxu0 0.0
  %2014 = vmatpush1.msra.mxu0 %v325
  %2015 = vmatprep.subr.mxu0 0.0
  %2016 = vmatpush1.msra.mxu0 %v326
  %2017 = vmatprep.subr.mxu0 0.0
  %2018 = vmatpush1.msra.mxu0 %v327
  %2019 = vmatprep.subr.mxu0 0.0
  %2020 = vmatpush1.msra.mxu0 %v328
  %2021 = vmatprep.subr.mxu0 0.0
  %2022 = vmatpush1.msra.mxu0 %v329
  %2023 = vmatprep.subr.mxu0 0.0
  %2024 = vmatpush1.msra.mxu0 %v330
  %2025 = vmatprep.subr.mxu0 0.0
  %2026 = vmatpush1.msra.mxu0 0.0
  %2027 = vmatprep.subr.mxu0 0.0
  %2028 = vmatpush1.msra.mxu0 0.0
  %2029 = vmatprep.subr.mxu0 0.0
  %2030 = vmatpush1.msra.mxu0 0.0
  %2031 = vmatprep.subr.mxu0 0.0
  %2032 = vmatpush1.msra.mxu0 0.0
  %2033 = vmatprep.subr.mxu0 0.0
  %2034 = vmatpush1.msra.mxu0 0.0
  %2035 = vmatprep.subr.mxu0 0.0
  %2036 = vmatpush1.msra.mxu0 0.0
  %2037 = vmatprep.subr.mxu0 0.0
  %2038 = vmatpush1.msra.mxu0 0.0
  %2039 = vmatprep.subr.mxu0 0.0
  %2040 = vmatpush1.msra.mxu0 0.0
  %2041 = vmatprep.subr.mxu0 0.0
  %2042 = vmatpush1.msra.mxu0 0.0
  %2043 = vmatprep.subr.mxu0 0.0
  %2044 = vmatpush1.msra.mxu0 0.0
  %2045 = vmatprep.subr.mxu0 0.0
  %2046 = vmatpush1.msra.mxu0 0.0
  %2047 = vmatprep.subr.mxu0 0.0
  %2048 = vmatpush1.msra.mxu0 0.0
  %2049 = vmatprep.subr.mxu0 0.0
  %2050 = vmatpush1.msra.mxu0 0.0
  %2051 = vmatprep.subr.mxu0 0.0
  %2052 = vmatpush1.msra.mxu0 0.0
  %2053 = vmatprep.subr.mxu0 0.0
  %2054 = vmatpush1.msra.mxu0 0.0
  %2055 = vmatprep.subr.mxu0 0.0
  %2056 = vmatpush1.msra.mxu0 0.0
  %2057 = vmatprep.subr.mxu0 0.0
  %2058 = vmatpush1.msra.mxu0 0.0
  %2059 = vmatprep.subr.mxu0 0.0
  %2060 = vmatpush1.msra.mxu0 0.0
  %2061 = vmatprep.subr.mxu0 0.0
  %2062 = vmatpush1.msra.mxu0 0.0
  %2063 = vmatprep.subr.mxu0 0.0
  %2064 = vmatpush1.msra.mxu0 0.0
  %2065 = vmatprep.subr.mxu0 0.0
  %2066 = vmatpush1.msra.mxu0 0.0
  %2067 = vmatprep.subr.mxu0 0.0
  %2068 = vmatpush1.msra.mxu0 0.0
  %2069 = vmatprep.subr.mxu0 0.0
  %2070 = vmatpush1.msra.mxu0 0.0
  %2071 = vmatprep.subr.mxu0 0.0
  %2072 = vmatpush1.msra.mxu0 0.0
  %2073 = vmatprep.mubr.f32.mxu0 0.0
  %2074 = vmatmul.mubr.f32.gmra.mrb[0].mxu0 %v1986
  %v2075 = vpop.f32.mrb[0].mxu0
  %v2076 = vadd.f32 0.0, %v2075
  %v2077 = vpop.f32.mrb[0].mxu0
  %2078 = vmatprep.mubr.f32.mxu0 0.0
  %2079 = vmatmul.mubr.f32.gmra.mrb[0].mxu0 %v1989
  %v2080 = vpop.f32.mrb[0].mxu0
  %v2081 = vadd.f32 0.0, %v2080
  %v2082 = vpop.f32.mrb[0].mxu0
  %2083 = vmatprep.mubr.f32.mxu0 0.0
  %2084 = vmatmul.mubr.f32.gmra.mrb[0].mxu0 %v1992
  %v2085 = vpop.f32.mrb[0].mxu0
  %v2086 = vadd.f32 0.0, %v2085
  %v2087 = vpop.f32.mrb[0].mxu0
  %2088 = vmatprep.mubr.f32.mxu0 0.0
  %2089 = vmatmul.mubr.f32.gmra.mrb[0].mxu0 %v1995
  %v2090 = vpop.f32.mrb[0].mxu0
  %v2091 = vadd.f32 0.0, %v2090
  %v2092 = vpop.f32.mrb[0].mxu0
  %2093 = vmatprep.mubr.f32.mxu0 0.0
  %2094 = vmatmul.mubr.f32.gmra.mrb[0].mxu0 %v1998
  %v2095 = vpop.f32.mrb[0].mxu0
  %v2096 = vadd.f32 0.0, %v2095
  %v2097 = vpop.f32.mrb[0].mxu0
  %2098 = vmatprep.mubr.f32.mxu0 0.0
  %2099 = vmatmul.mubr.f32.gmra.mrb[0].mxu0 %v2001
  %v2100 = vpop.f32.mrb[0].mxu0
  %v2101 = vadd.f32 0.0, %v2100
  %v2102 = vpop.f32.mrb[0].mxu0
  %2103 = vmatprep.mubr.f32.mxu0 0.0
  %2104 = vmatmul.mubr.f32.gmra.mrb[0].mxu0 %v2004
  %v2105 = vpop.f32.mrb[0].mxu0
  %v2106 = vadd.f32 0.0, %v2105
  %v2107 = vpop.f32.mrb[0].mxu0
  %2108 = vmatprep.mubr.f32.mxu0 0.0
  %2109 = vmatmul.mubr.f32.gmra.mrb[0].mxu0 %v2007
  %v2110 = vpop.f32.mrb[0].mxu0
  %v2111 = vadd.f32 0.0, %v2110
  %v2112 = vpop.f32.mrb[0].mxu0
  %2113 = vdwg.mxu0
  %s2114 = scalar_lea.vmem %s5, 48
  %v2115 = vld [vmem:[%s2114] sm:$0xff]
  %v2117 = vsel %vm221, %v2076, 0
  %v2120 = vsel %vm221, %v2081, 0
  %v2123 = vsel %vm221, %v2086, 0
  %v2126 = vsel %vm221, %v2091, 0
  %v2129 = vsel %vm221, %v2096, 0
  %v2132 = vsel %vm221, %v2101, 0
  %v2135 = vsel %vm221, %v2106, 0
  %v2138 = vsel %vm221, %v2111, 0
  %2140 = vmatprep.subr.mxu0 0.0
  %2141 = vmatpush1.msra.mxu0 %v2115
  %2142 = vmatprep.subr.mxu0 0.0
  %2143 = vmatpush1.msra.mxu0 0.0
  %2144 = vmatprep.subr.mxu0 0.0
  %2145 = vmatpush1.msra.mxu0 0.0
  %2146 = vmatprep.subr.mxu0 0.0
  %2147 = vmatpush1.msra.mxu0 0.0
  %2148 = vmatprep.subr.mxu0 0.0
  %2149 = vmatpush1.msra.mxu0 0.0
  %2150 = vmatprep.subr.mxu0 0.0
  %2151 = vmatpush1.msra.mxu0 0.0
  %2152 = vmatprep.subr.mxu0 0.0
  %2153 = vmatpush1.msra.mxu0 0.0
  %2154 = vmatprep.subr.mxu0 0.0
  %2155 = vmatpush1.msra.mxu0 0.0
  %2156 = vmatprep.subr.mxu0 0.0
  %2157 = vmatpush1.msra.mxu0 0.0
  %2158 = vmatprep.subr.mxu0 0.0
  %2159 = vmatpush1.msra.mxu0 0.0
  %2160 = vmatprep.subr.mxu0 0.0
  %2161 = vmatpush1.msra.mxu0 0.0
  %2162 = vmatprep.subr.mxu0 0.0
  %2163 = vmatpush1.msra.mxu0 0.0
  %2164 = vmatprep.subr.mxu0 0.0
  %2165 = vmatpush1.msra.mxu0 0.0
  %2166 = vmatprep.subr.mxu0 0.0
  %2167 = vmatpush1.msra.mxu0 0.0
  %2168 = vmatprep.subr.mxu0 0.0
  %2169 = vmatpush1.msra.mxu0 0.0
  %2170 = vmatprep.subr.mxu0 0.0
  %2171 = vmatpush1.msra.mxu0 0.0
  %2172 = vmatprep.subr.mxu0 0.0
  %2173 = vmatpush1.msra.mxu0 0.0
  %2174 = vmatprep.subr.mxu0 0.0
  %2175 = vmatpush1.msra.mxu0 0.0
  %2176 = vmatprep.subr.mxu0 0.0
  %2177 = vmatpush1.msra.mxu0 0.0
  %2178 = vmatprep.subr.mxu0 0.0
  %2179 = vmatpush1.msra.mxu0 0.0
  %2180 = vmatprep.subr.mxu0 0.0
  %2181 = vmatpush1.msra.mxu0 0.0
  %2182 = vmatprep.subr.mxu0 0.0
  %2183 = vmatpush1.msra.mxu0 0.0
  %2184 = vmatprep.subr.mxu0 0.0
  %2185 = vmatpush1.msra.mxu0 0.0
  %2186 = vmatprep.subr.mxu0 0.0
  %2187 = vmatpush1.msra.mxu0 0.0
  %2188 = vmatprep.subr.mxu0 0.0
  %2189 = vmatpush1.msra.mxu0 0.0
  %2190 = vmatprep.subr.mxu0 0.0
  %2191 = vmatpush1.msra.mxu0 0.0
  %2192 = vmatprep.subr.mxu0 0.0
  %2193 = vmatpush1.msra.mxu0 0.0
  %2194 = vmatprep.subr.mxu0 0.0
  %2195 = vmatpush1.msra.mxu0 0.0
  %2196 = vmatprep.subr.mxu0 0.0
  %2197 = vmatpush1.msra.mxu0 0.0
  %2198 = vmatprep.subr.mxu0 0.0
  %2199 = vmatpush1.msra.mxu0 0.0
  %2200 = vmatprep.subr.mxu0 0.0
  %2201 = vmatpush1.msra.mxu0 0.0
  %2202 = vmatprep.subr.mxu0 0.0
  %2203 = vmatpush1.msra.mxu0 0.0
  %2204 = vmatprep.mubr.f32.mxu0 0.0
  %2205 = vmatmul.mubr.f32.gmra.mrb[0].mxu0 %v2117
  %v2206 = vpop.f32.mrb[0].mxu0
  %v2207 = vadd.f32 0.0, %v2206
  %v2208 = vpop.f32.mrb[0].mxu0
  %2209 = vmatprep.mubr.f32.mxu0 0.0
  %2210 = vmatmul.mubr.f32.gmra.mrb[0].mxu0 %v2120
  %v2211 = vpop.f32.mrb[0].mxu0
  %v2212 = vadd.f32 0.0, %v2211
  %v2213 = vpop.f32.mrb[0].mxu0
  %2214 = vmatprep.mubr.f32.mxu0 0.0
  %2215 = vmatmul.mubr.f32.gmra.mrb[0].mxu0 %v2123
  %v2216 = vpop.f32.mrb[0].mxu0
  %v2217 = vadd.f32 0.0, %v2216
  %v2218 = vpop.f32.mrb[0].mxu0
  %2219 = vmatprep.mubr.f32.mxu0 0.0
  %2220 = vmatmul.mubr.f32.gmra.mrb[0].mxu0 %v2126
  %v2221 = vpop.f32.mrb[0].mxu0
  %v2222 = vadd.f32 0.0, %v2221
  %v2223 = vpop.f32.mrb[0].mxu0
  %2224 = vmatprep.mubr.f32.mxu0 0.0
  %2225 = vmatmul.mubr.f32.gmra.mrb[0].mxu0 %v2129
  %v2226 = vpop.f32.mrb[0].mxu0
  %v2227 = vadd.f32 0.0, %v2226
  %v2228 = vpop.f32.mrb[0].mxu0
  %2229 = vmatprep.mubr.f32.mxu0 0.0
  %2230 = vmatmul.mubr.f32.gmra.mrb[0].mxu0 %v2132
  %v2231 = vpop.f32.mrb[0].mxu0
  %v2232 = vadd.f32 0.0, %v2231
  %v2233 = vpop.f32.mrb[0].mxu0
  %2234 = vmatprep.mubr.f32.mxu0 0.0
  %2235 = vmatmul.mubr.f32.gmra.mrb[0].mxu0 %v2135
  %v2236 = vpop.f32.mrb[0].mxu0
  %v2237 = vadd.f32 0.0, %v2236
  %v2238 = vpop.f32.mrb[0].mxu0
  %2239 = vmatprep.mubr.f32.mxu0 0.0
  %2240 = vmatmul.mubr.f32.gmra.mrb[0].mxu0 %v2138
  %v2241 = vpop.f32.mrb[0].mxu0
  %v2242 = vadd.f32 0.0, %v2241
  %v2243 = vpop.f32.mrb[0].mxu0
  %2244 = vdwg.mxu0
  %v2245 = vadd.f32 %v1968, %v2207
  %v2246 = vadd.f32 %v1969, %v2212
  %v2247 = vadd.f32 %v1970, %v2217
  %v2248 = vadd.f32 %v1971, %v2222
  %v2249 = vadd.f32 %v1972, %v2227
  %v2250 = vadd.f32 %v1973, %v2232
  %v2251 = vadd.f32 %v1974, %v2237
  %v2252 = vadd.f32 %v1975, %v2242
  %s2253 = scalar_lea.vmem %s4, 448
  %v2254 = vld [vmem:[%s2253] sm:$0xff]
  %v2255 = vld [vmem:[%s2253 + $0x8] sm:$0xff]
  %v2256 = vld [vmem:[%s2253 + $0x10] sm:$0xff]
  %v2257 = vld [vmem:[%s2253 + $0x18] sm:$0xff]
  %v2258 = vld [vmem:[%s2253 + $0x20] sm:$0xff]
  %v2259 = vld [vmem:[%s2253 + $0x28] sm:$0xff]
  %v2260 = vld [vmem:[%s2253 + $0x30] sm:$0xff]
  %v2261 = vld [vmem:[%s2253 + $0x38] sm:$0xff]
  %v2263 = vsel %vm339, %v2254, 0
  %v2266 = vsel %vm339, %v2255, 0
  %v2269 = vsel %vm339, %v2256, 0
  %v2272 = vsel %vm339, %v2257, 0
  %v2275 = vsel %vm339, %v2258, 0
  %v2278 = vsel %vm339, %v2259, 0
  %v2281 = vsel %vm339, %v2260, 0
  %v2284 = vsel %vm339, %v2261, 0
  %2286 = vmatprep.subr.mxu0 0.0
  %2287 = vmatpush1.msra.mxu0 %v323
  %2288 = vmatprep.subr.mxu0 0.0
  %2289 = vmatpush1.msra.mxu0 %v324
  %2290 = vmatprep.subr.mxu0 0.0
  %2291 = vmatpush1.msra.mxu0 %v325
  %2292 = vmatprep.subr.mxu0 0.0
  %2293 = vmatpush1.msra.mxu0 %v326
  %2294 = vmatprep.subr.mxu0 0.0
  %2295 = vmatpush1.msra.mxu0 %v327
  %2296 = vmatprep.subr.mxu0 0.0
  %2297 = vmatpush1.msra.mxu0 %v328
  %2298 = vmatprep.subr.mxu0 0.0
  %2299 = vmatpush1.msra.mxu0 %v329
  %2300 = vmatprep.subr.mxu0 0.0
  %2301 = vmatpush1.msra.mxu0 %v330
  %2302 = vmatprep.subr.mxu0 0.0
  %2303 = vmatpush1.msra.mxu0 0.0
  %2304 = vmatprep.subr.mxu0 0.0
  %2305 = vmatpush1.msra.mxu0 0.0
  %2306 = vmatprep.subr.mxu0 0.0
  %2307 = vmatpush1.msra.mxu0 0.0
  %2308 = vmatprep.subr.mxu0 0.0
  %2309 = vmatpush1.msra.mxu0 0.0
  %2310 = vmatprep.subr.mxu0 0.0
  %2311 = vmatpush1.msra.mxu0 0.0
  %2312 = vmatprep.subr.mxu0 0.0
  %2313 = vmatpush1.msra.mxu0 0.0
  %2314 = vmatprep.subr.mxu0 0.0
  %2315 = vmatpush1.msra.mxu0 0.0
  %2316 = vmatprep.subr.mxu0 0.0
  %2317 = vmatpush1.msra.mxu0 0.0
  %2318 = vmatprep.subr.mxu0 0.0
  %2319 = vmatpush1.msra.mxu0 0.0
  %2320 = vmatprep.subr.mxu0 0.0
  %2321 = vmatpush1.msra.mxu0 0.0
  %2322 = vmatprep.subr.mxu0 0.0
  %2323 = vmatpush1.msra.mxu0 0.0
  %2324 = vmatprep.subr.mxu0 0.0
  %2325 = vmatpush1.msra.mxu0 0.0
  %2326 = vmatprep.subr.mxu0 0.0
  %2327 = vmatpush1.msra.mxu0 0.0
  %2328 = vmatprep.subr.mxu0 0.0
  %2329 = vmatpush1.msra.mxu0 0.0
  %2330 = vmatprep.subr.mxu0 0.0
  %2331 = vmatpush1.msra.mxu0 0.0
  %2332 = vmatprep.subr.mxu0 0.0
  %2333 = vmatpush1.msra.mxu0 0.0
  %2334 = vmatprep.subr.mxu0 0.0
  %2335 = vmatpush1.msra.mxu0 0.0
  %2336 = vmatprep.subr.mxu0 0.0
  %2337 = vmatpush1.msra.mxu0 0.0
  %2338 = vmatprep.subr.mxu0 0.0
  %2339 = vmatpush1.msra.mxu0 0.0
  %2340 = vmatprep.subr.mxu0 0.0
  %2341 = vmatpush1.msra.mxu0 0.0
  %2342 = vmatprep.subr.mxu0 0.0
  %2343 = vmatpush1.msra.mxu0 0.0
  %2344 = vmatprep.subr.mxu0 0.0
  %2345 = vmatpush1.msra.mxu0 0.0
  %2346 = vmatprep.subr.mxu0 0.0
  %2347 = vmatpush1.msra.mxu0 0.0
  %2348 = vmatprep.subr.mxu0 0.0
  %2349 = vmatpush1.msra.mxu0 0.0
  %2350 = vmatprep.mubr.f32.mxu0 0.0
  %2351 = vmatmul.mubr.f32.gmra.mrb[0].mxu0 %v2263
  %v2352 = vpop.f32.mrb[0].mxu0
  %v2353 = vadd.f32 0.0, %v2352
  %v2354 = vpop.f32.mrb[0].mxu0
  %2355 = vmatprep.mubr.f32.mxu0 0.0
  %2356 = vmatmul.mubr.f32.gmra.mrb[0].mxu0 %v2266
  %v2357 = vpop.f32.mrb[0].mxu0
  %v2358 = vadd.f32 0.0, %v2357
  %v2359 = vpop.f32.mrb[0].mxu0
  %2360 = vmatprep.mubr.f32.mxu0 0.0
  %2361 = vmatmul.mubr.f32.gmra.mrb[0].mxu0 %v2269
  %v2362 = vpop.f32.mrb[0].mxu0
  %v2363 = vadd.f32 0.0, %v2362
  %v2364 = vpop.f32.mrb[0].mxu0
  %2365 = vmatprep.mubr.f32.mxu0 0.0
  %2366 = vmatmul.mubr.f32.gmra.mrb[0].mxu0 %v2272
  %v2367 = vpop.f32.mrb[0].mxu0
  %v2368 = vadd.f32 0.0, %v2367
  %v2369 = vpop.f32.mrb[0].mxu0
  %2370 = vmatprep.mubr.f32.mxu0 0.0
  %2371 = vmatmul.mubr.f32.gmra.mrb[0].mxu0 %v2275
  %v2372 = vpop.f32.mrb[0].mxu0
  %v2373 = vadd.f32 0.0, %v2372
  %v2374 = vpop.f32.mrb[0].mxu0
  %2375 = vmatprep.mubr.f32.mxu0 0.0
  %2376 = vmatmul.mubr.f32.gmra.mrb[0].mxu0 %v2278
  %v2377 = vpop.f32.mrb[0].mxu0
  %v2378 = vadd.f32 0.0, %v2377
  %v2379 = vpop.f32.mrb[0].mxu0
  %2380 = vmatprep.mubr.f32.mxu0 0.0
  %2381 = vmatmul.mubr.f32.gmra.mrb[0].mxu0 %v2281
  %v2382 = vpop.f32.mrb[0].mxu0
  %v2383 = vadd.f32 0.0, %v2382
  %v2384 = vpop.f32.mrb[0].mxu0
  %2385 = vmatprep.mubr.f32.mxu0 0.0
  %2386 = vmatmul.mubr.f32.gmra.mrb[0].mxu0 %v2284
  %v2387 = vpop.f32.mrb[0].mxu0
  %v2388 = vadd.f32 0.0, %v2387
  %v2389 = vpop.f32.mrb[0].mxu0
  %2390 = vdwg.mxu0
  %s2391 = scalar_lea.vmem %s5, 56
  %v2392 = vld [vmem:[%s2391] sm:$0xff]
  %v2394 = vsel %vm221, %v2353, 0
  %v2397 = vsel %vm221, %v2358, 0
  %v2400 = vsel %vm221, %v2363, 0
  %v2403 = vsel %vm221, %v2368, 0
  %v2406 = vsel %vm221, %v2373, 0
  %v2409 = vsel %vm221, %v2378, 0
  %v2412 = vsel %vm221, %v2383, 0
  %v2415 = vsel %vm221, %v2388, 0
  %2417 = vmatprep.subr.mxu0 0.0
  %2418 = vmatpush1.msra.mxu0 %v2392
  %2419 = vmatprep.subr.mxu0 0.0
  %2420 = vmatpush1.msra.mxu0 0.0
  %2421 = vmatprep.subr.mxu0 0.0
  %2422 = vmatpush1.msra.mxu0 0.0
  %2423 = vmatprep.subr.mxu0 0.0
  %2424 = vmatpush1.msra.mxu0 0.0
  %2425 = vmatprep.subr.mxu0 0.0
  %2426 = vmatpush1.msra.mxu0 0.0
  %2427 = vmatprep.subr.mxu0 0.0
  %2428 = vmatpush1.msra.mxu0 0.0
  %2429 = vmatprep.subr.mxu0 0.0
  %2430 = vmatpush1.msra.mxu0 0.0
  %2431 = vmatprep.subr.mxu0 0.0
  %2432 = vmatpush1.msra.mxu0 0.0
  %2433 = vmatprep.subr.mxu0 0.0
  %2434 = vmatpush1.msra.mxu0 0.0
  %2435 = vmatprep.subr.mxu0 0.0
  %2436 = vmatpush1.msra.mxu0 0.0
  %2437 = vmatprep.subr.mxu0 0.0
  %2438 = vmatpush1.msra.mxu0 0.0
  %2439 = vmatprep.subr.mxu0 0.0
  %2440 = vmatpush1.msra.mxu0 0.0
  %2441 = vmatprep.subr.mxu0 0.0
  %2442 = vmatpush1.msra.mxu0 0.0
  %2443 = vmatprep.subr.mxu0 0.0
  %2444 = vmatpush1.msra.mxu0 0.0
  %2445 = vmatprep.subr.mxu0 0.0
  %2446 = vmatpush1.msra.mxu0 0.0
  %2447 = vmatprep.subr.mxu0 0.0
  %2448 = vmatpush1.msra.mxu0 0.0
  %2449 = vmatprep.subr.mxu0 0.0
  %2450 = vmatpush1.msra.mxu0 0.0
  %2451 = vmatprep.subr.mxu0 0.0
  %2452 = vmatpush1.msra.mxu0 0.0
  %2453 = vmatprep.subr.mxu0 0.0
  %2454 = vmatpush1.msra.mxu0 0.0
  %2455 = vmatprep.subr.mxu0 0.0
  %2456 = vmatpush1.msra.mxu0 0.0
  %2457 = vmatprep.subr.mxu0 0.0
  %2458 = vmatpush1.msra.mxu0 0.0
  %2459 = vmatprep.subr.mxu0 0.0
  %2460 = vmatpush1.msra.mxu0 0.0
  %2461 = vmatprep.subr.mxu0 0.0
  %2462 = vmatpush1.msra.mxu0 0.0
  %2463 = vmatprep.subr.mxu0 0.0
  %2464 = vmatpush1.msra.mxu0 0.0
  %2465 = vmatprep.subr.mxu0 0.0
  %2466 = vmatpush1.msra.mxu0 0.0
  %2467 = vmatprep.subr.mxu0 0.0
  %2468 = vmatpush1.msra.mxu0 0.0
  %2469 = vmatprep.subr.mxu0 0.0
  %2470 = vmatpush1.msra.mxu0 0.0
  %2471 = vmatprep.subr.mxu0 0.0
  %2472 = vmatpush1.msra.mxu0 0.0
  %2473 = vmatprep.subr.mxu0 0.0
  %2474 = vmatpush1.msra.mxu0 0.0
  %2475 = vmatprep.subr.mxu0 0.0
  %2476 = vmatpush1.msra.mxu0 0.0
  %2477 = vmatprep.subr.mxu0 0.0
  %2478 = vmatpush1.msra.mxu0 0.0
  %2479 = vmatprep.subr.mxu0 0.0
  %2480 = vmatpush1.msra.mxu0 0.0
  %2481 = vmatprep.mubr.f32.mxu0 0.0
  %2482 = vmatmul.mubr.f32.gmra.mrb[0].mxu0 %v2394
  %v2483 = vpop.f32.mrb[0].mxu0
  %v2484 = vadd.f32 0.0, %v2483
  %v2485 = vpop.f32.mrb[0].mxu0
  %2486 = vmatprep.mubr.f32.mxu0 0.0
  %2487 = vmatmul.mubr.f32.gmra.mrb[0].mxu0 %v2397
  %v2488 = vpop.f32.mrb[0].mxu0
  %v2489 = vadd.f32 0.0, %v2488
  %v2490 = vpop.f32.mrb[0].mxu0
  %2491 = vmatprep.mubr.f32.mxu0 0.0
  %2492 = vmatmul.mubr.f32.gmra.mrb[0].mxu0 %v2400
  %v2493 = vpop.f32.mrb[0].mxu0
  %v2494 = vadd.f32 0.0, %v2493
  %v2495 = vpop.f32.mrb[0].mxu0
  %2496 = vmatprep.mubr.f32.mxu0 0.0
  %2497 = vmatmul.mubr.f32.gmra.mrb[0].mxu0 %v2403
  %v2498 = vpop.f32.mrb[0].mxu0
  %v2499 = vadd.f32 0.0, %v2498
  %v2500 = vpop.f32.mrb[0].mxu0
  %2501 = vmatprep.mubr.f32.mxu0 0.0
  %2502 = vmatmul.mubr.f32.gmra.mrb[0].mxu0 %v2406
  %v2503 = vpop.f32.mrb[0].mxu0
  %v2504 = vadd.f32 0.0, %v2503
  %v2505 = vpop.f32.mrb[0].mxu0
  %2506 = vmatprep.mubr.f32.mxu0 0.0
  %2507 = vmatmul.mubr.f32.gmra.mrb[0].mxu0 %v2409
  %v2508 = vpop.f32.mrb[0].mxu0
  %v2509 = vadd.f32 0.0, %v2508
  %v2510 = vpop.f32.mrb[0].mxu0
  %2511 = vmatprep.mubr.f32.mxu0 0.0
  %2512 = vmatmul.mubr.f32.gmra.mrb[0].mxu0 %v2412
  %v2513 = vpop.f32.mrb[0].mxu0
  %v2514 = vadd.f32 0.0, %v2513
  %v2515 = vpop.f32.mrb[0].mxu0
  %2516 = vmatprep.mubr.f32.mxu0 0.0
  %2517 = vmatmul.mubr.f32.gmra.mrb[0].mxu0 %v2415
  %v2518 = vpop.f32.mrb[0].mxu0
  %v2519 = vadd.f32 0.0, %v2518
  %v2520 = vpop.f32.mrb[0].mxu0
  %2521 = vdwg.mxu0
  %v2522 = vadd.f32 %v2245, %v2484
  %v2523 = vadd.f32 %v2246, %v2489
  %v2524 = vadd.f32 %v2247, %v2494
  %v2525 = vadd.f32 %v2248, %v2499
  %v2526 = vadd.f32 %v2249, %v2504
  %v2527 = vadd.f32 %v2250, %v2509
  %v2528 = vadd.f32 %v2251, %v2514
  %v2529 = vadd.f32 %v2252, %v2519
  %s2530 = scalar_lea.vmem %s4, 512
  %v2531 = vld [vmem:[%s2530] sm:$0xff]
  %v2532 = vld [vmem:[%s2530 + $0x8] sm:$0xff]
  %v2533 = vld [vmem:[%s2530 + $0x10] sm:$0xff]
  %v2534 = vld [vmem:[%s2530 + $0x18] sm:$0xff]
  %v2535 = vld [vmem:[%s2530 + $0x20] sm:$0xff]
  %v2536 = vld [vmem:[%s2530 + $0x28] sm:$0xff]
  %v2537 = vld [vmem:[%s2530 + $0x30] sm:$0xff]
  %v2538 = vld [vmem:[%s2530 + $0x38] sm:$0xff]
  %v2540 = vsel %vm339, %v2531, 0
  %v2543 = vsel %vm339, %v2532, 0
  %v2546 = vsel %vm339, %v2533, 0
  %v2549 = vsel %vm339, %v2534, 0
  %v2552 = vsel %vm339, %v2535, 0
  %v2555 = vsel %vm339, %v2536, 0
  %v2558 = vsel %vm339, %v2537, 0
  %v2561 = vsel %vm339, %v2538, 0
  %2563 = vmatprep.subr.mxu0 0.0
  %2564 = vmatpush1.msra.mxu0 %v323
  %2565 = vmatprep.subr.mxu0 0.0
  %2566 = vmatpush1.msra.mxu0 %v324
  %2567 = vmatprep.subr.mxu0 0.0
  %2568 = vmatpush1.msra.mxu0 %v325
  %2569 = vmatprep.subr.mxu0 0.0
  %2570 = vmatpush1.msra.mxu0 %v326
  %2571 = vmatprep.subr.mxu0 0.0
  %2572 = vmatpush1.msra.mxu0 %v327
  %2573 = vmatprep.subr.mxu0 0.0
  %2574 = vmatpush1.msra.mxu0 %v328
  %2575 = vmatprep.subr.mxu0 0.0
  %2576 = vmatpush1.msra.mxu0 %v329
  %2577 = vmatprep.subr.mxu0 0.0
  %2578 = vmatpush1.msra.mxu0 %v330
  %2579 = vmatprep.subr.mxu0 0.0
  %2580 = vmatpush1.msra.mxu0 0.0
  %2581 = vmatprep.subr.mxu0 0.0
  %2582 = vmatpush1.msra.mxu0 0.0
  %2583 = vmatprep.subr.mxu0 0.0
  %2584 = vmatpush1.msra.mxu0 0.0
  %2585 = vmatprep.subr.mxu0 0.0
  %2586 = vmatpush1.msra.mxu0 0.0
  %2587 = vmatprep.subr.mxu0 0.0
  %2588 = vmatpush1.msra.mxu0 0.0
  %2589 = vmatprep.subr.mxu0 0.0
  %2590 = vmatpush1.msra.mxu0 0.0
  %2591 = vmatprep.subr.mxu0 0.0
  %2592 = vmatpush1.msra.mxu0 0.0
  %2593 = vmatprep.subr.mxu0 0.0
  %2594 = vmatpush1.msra.mxu0 0.0
  %2595 = vmatprep.subr.mxu0 0.0
  %2596 = vmatpush1.msra.mxu0 0.0
  %2597 = vmatprep.subr.mxu0 0.0
  %2598 = vmatpush1.msra.mxu0 0.0
  %2599 = vmatprep.subr.mxu0 0.0
  %2600 = vmatpush1.msra.mxu0 0.0
  %2601 = vmatprep.subr.mxu0 0.0
  %2602 = vmatpush1.msra.mxu0 0.0
  %2603 = vmatprep.subr.mxu0 0.0
  %2604 = vmatpush1.msra.mxu0 0.0
  %2605 = vmatprep.subr.mxu0 0.0
  %2606 = vmatpush1.msra.mxu0 0.0
  %2607 = vmatprep.subr.mxu0 0.0
  %2608 = vmatpush1.msra.mxu0 0.0
  %2609 = vmatprep.subr.mxu0 0.0
  %2610 = vmatpush1.msra.mxu0 0.0
  %2611 = vmatprep.subr.mxu0 0.0
  %2612 = vmatpush1.msra.mxu0 0.0
  %2613 = vmatprep.subr.mxu0 0.0
  %2614 = vmatpush1.msra.mxu0 0.0
  %2615 = vmatprep.subr.mxu0 0.0
  %2616 = vmatpush1.msra.mxu0 0.0
  %2617 = vmatprep.subr.mxu0 0.0
  %2618 = vmatpush1.msra.mxu0 0.0
  %2619 = vmatprep.subr.mxu0 0.0
  %2620 = vmatpush1.msra.mxu0 0.0
  %2621 = vmatprep.subr.mxu0 0.0
  %2622 = vmatpush1.msra.mxu0 0.0
  %2623 = vmatprep.subr.mxu0 0.0
  %2624 = vmatpush1.msra.mxu0 0.0
  %2625 = vmatprep.subr.mxu0 0.0
  %2626 = vmatpush1.msra.mxu0 0.0
  %2627 = vmatprep.mubr.f32.mxu0 0.0
  %2628 = vmatmul.mubr.f32.gmra.mrb[0].mxu0 %v2540
  %v2629 = vpop.f32.mrb[0].mxu0
  %v2630 = vadd.f32 0.0, %v2629
  %v2631 = vpop.f32.mrb[0].mxu0
  %2632 = vmatprep.mubr.f32.mxu0 0.0
  %2633 = vmatmul.mubr.f32.gmra.mrb[0].mxu0 %v2543
  %v2634 = vpop.f32.mrb[0].mxu0
  %v2635 = vadd.f32 0.0, %v2634
  %v2636 = vpop.f32.mrb[0].mxu0
  %2637 = vmatprep.mubr.f32.mxu0 0.0
  %2638 = vmatmul.mubr.f32.gmra.mrb[0].mxu0 %v2546
  %v2639 = vpop.f32.mrb[0].mxu0
  %v2640 = vadd.f32 0.0, %v2639
  %v2641 = vpop.f32.mrb[0].mxu0
  %2642 = vmatprep.mubr.f32.mxu0 0.0
  %2643 = vmatmul.mubr.f32.gmra.mrb[0].mxu0 %v2549
  %v2644 = vpop.f32.mrb[0].mxu0
  %v2645 = vadd.f32 0.0, %v2644
  %v2646 = vpop.f32.mrb[0].mxu0
  %2647 = vmatprep.mubr.f32.mxu0 0.0
  %2648 = vmatmul.mubr.f32.gmra.mrb[0].mxu0 %v2552
  %v2649 = vpop.f32.mrb[0].mxu0
  %v2650 = vadd.f32 0.0, %v2649
  %v2651 = vpop.f32.mrb[0].mxu0
  %2652 = vmatprep.mubr.f32.mxu0 0.0
  %2653 = vmatmul.mubr.f32.gmra.mrb[0].mxu0 %v2555
  %v2654 = vpop.f32.mrb[0].mxu0
  %v2655 = vadd.f32 0.0, %v2654
  %v2656 = vpop.f32.mrb[0].mxu0
  %2657 = vmatprep.mubr.f32.mxu0 0.0
  %2658 = vmatmul.mubr.f32.gmra.mrb[0].mxu0 %v2558
  %v2659 = vpop.f32.mrb[0].mxu0
  %v2660 = vadd.f32 0.0, %v2659
  %v2661 = vpop.f32.mrb[0].mxu0
  %2662 = vmatprep.mubr.f32.mxu0 0.0
  %2663 = vmatmul.mubr.f32.gmra.mrb[0].mxu0 %v2561
  %v2664 = vpop.f32.mrb[0].mxu0
  %v2665 = vadd.f32 0.0, %v2664
  %v2666 = vpop.f32.mrb[0].mxu0
  %2667 = vdwg.mxu0
  %s2668 = scalar_lea.vmem %s5, 64
  %v2669 = vld [vmem:[%s2668] sm:$0xff]
  %v2671 = vsel %vm221, %v2630, 0
  %v2674 = vsel %vm221, %v2635, 0
  %v2677 = vsel %vm221, %v2640, 0
  %v2680 = vsel %vm221, %v2645, 0
  %v2683 = vsel %vm221, %v2650, 0
  %v2686 = vsel %vm221, %v2655, 0
  %v2689 = vsel %vm221, %v2660, 0
  %v2692 = vsel %vm221, %v2665, 0
  %2694 = vmatprep.subr.mxu0 0.0
  %2695 = vmatpush1.msra.mxu0 %v2669
  %2696 = vmatprep.subr.mxu0 0.0
  %2697 = vmatpush1.msra.mxu0 0.0
  %2698 = vmatprep.subr.mxu0 0.0
  %2699 = vmatpush1.msra.mxu0 0.0
  %2700 = vmatprep.subr.mxu0 0.0
  %2701 = vmatpush1.msra.mxu0 0.0
  %2702 = vmatprep.subr.mxu0 0.0
  %2703 = vmatpush1.msra.mxu0 0.0
  %2704 = vmatprep.subr.mxu0 0.0
  %2705 = vmatpush1.msra.mxu0 0.0
  %2706 = vmatprep.subr.mxu0 0.0
  %2707 = vmatpush1.msra.mxu0 0.0
  %2708 = vmatprep.subr.mxu0 0.0
  %2709 = vmatpush1.msra.mxu0 0.0
  %2710 = vmatprep.subr.mxu0 0.0
  %2711 = vmatpush1.msra.mxu0 0.0
  %2712 = vmatprep.subr.mxu0 0.0
  %2713 = vmatpush1.msra.mxu0 0.0
  %2714 = vmatprep.subr.mxu0 0.0
  %2715 = vmatpush1.msra.mxu0 0.0
  %2716 = vmatprep.subr.mxu0 0.0
  %2717 = vmatpush1.msra.mxu0 0.0
  %2718 = vmatprep.subr.mxu0 0.0
  %2719 = vmatpush1.msra.mxu0 0.0
  %2720 = vmatprep.subr.mxu0 0.0
  %2721 = vmatpush1.msra.mxu0 0.0
  %2722 = vmatprep.subr.mxu0 0.0
  %2723 = vmatpush1.msra.mxu0 0.0
  %2724 = vmatprep.subr.mxu0 0.0
  %2725 = vmatpush1.msra.mxu0 0.0
  %2726 = vmatprep.subr.mxu0 0.0
  %2727 = vmatpush1.msra.mxu0 0.0
  %2728 = vmatprep.subr.mxu0 0.0
  %2729 = vmatpush1.msra.mxu0 0.0
  %2730 = vmatprep.subr.mxu0 0.0
  %2731 = vmatpush1.msra.mxu0 0.0
  %2732 = vmatprep.subr.mxu0 0.0
  %2733 = vmatpush1.msra.mxu0 0.0
  %2734 = vmatprep.subr.mxu0 0.0
  %2735 = vmatpush1.msra.mxu0 0.0
  %2736 = vmatprep.subr.mxu0 0.0
  %2737 = vmatpush1.msra.mxu0 0.0
  %2738 = vmatprep.subr.mxu0 0.0
  %2739 = vmatpush1.msra.mxu0 0.0
  %2740 = vmatprep.subr.mxu0 0.0
  %2741 = vmatpush1.msra.mxu0 0.0
  %2742 = vmatprep.subr.mxu0 0.0
  %2743 = vmatpush1.msra.mxu0 0.0
  %2744 = vmatprep.subr.mxu0 0.0
  %2745 = vmatpush1.msra.mxu0 0.0
  %2746 = vmatprep.subr.mxu0 0.0
  %2747 = vmatpush1.msra.mxu0 0.0
  %2748 = vmatprep.subr.mxu0 0.0
  %2749 = vmatpush1.msra.mxu0 0.0
  %2750 = vmatprep.subr.mxu0 0.0
  %2751 = vmatpush1.msra.mxu0 0.0
  %2752 = vmatprep.subr.mxu0 0.0
  %2753 = vmatpush1.msra.mxu0 0.0
  %2754 = vmatprep.subr.mxu0 0.0
  %2755 = vmatpush1.msra.mxu0 0.0
  %2756 = vmatprep.subr.mxu0 0.0
  %2757 = vmatpush1.msra.mxu0 0.0
  %2758 = vmatprep.mubr.f32.mxu0 0.0
  %2759 = vmatmul.mubr.f32.gmra.mrb[0].mxu0 %v2671
  %v2760 = vpop.f32.mrb[0].mxu0
  %v2761 = vadd.f32 0.0, %v2760
  %v2762 = vpop.f32.mrb[0].mxu0
  %2763 = vmatprep.mubr.f32.mxu0 0.0
  %2764 = vmatmul.mubr.f32.gmra.mrb[0].mxu0 %v2674
  %v2765 = vpop.f32.mrb[0].mxu0
  %v2766 = vadd.f32 0.0, %v2765
  %v2767 = vpop.f32.mrb[0].mxu0
  %2768 = vmatprep.mubr.f32.mxu0 0.0
  %2769 = vmatmul.mubr.f32.gmra.mrb[0].mxu0 %v2677
  %v2770 = vpop.f32.mrb[0].mxu0
  %v2771 = vadd.f32 0.0, %v2770
  %v2772 = vpop.f32.mrb[0].mxu0
  %2773 = vmatprep.mubr.f32.mxu0 0.0
  %2774 = vmatmul.mubr.f32.gmra.mrb[0].mxu0 %v2680
  %v2775 = vpop.f32.mrb[0].mxu0
  %v2776 = vadd.f32 0.0, %v2775
  %v2777 = vpop.f32.mrb[0].mxu0
  %2778 = vmatprep.mubr.f32.mxu0 0.0
  %2779 = vmatmul.mubr.f32.gmra.mrb[0].mxu0 %v2683
  %v2780 = vpop.f32.mrb[0].mxu0
  %v2781 = vadd.f32 0.0, %v2780
  %v2782 = vpop.f32.mrb[0].mxu0
  %2783 = vmatprep.mubr.f32.mxu0 0.0
  %2784 = vmatmul.mubr.f32.gmra.mrb[0].mxu0 %v2686
  %v2785 = vpop.f32.mrb[0].mxu0
  %v2786 = vadd.f32 0.0, %v2785
  %v2787 = vpop.f32.mrb[0].mxu0
  %2788 = vmatprep.mubr.f32.mxu0 0.0
  %2789 = vmatmul.mubr.f32.gmra.mrb[0].mxu0 %v2689
  %v2790 = vpop.f32.mrb[0].mxu0
  %v2791 = vadd.f32 0.0, %v2790
  %v2792 = vpop.f32.mrb[0].mxu0
  %2793 = vmatprep.mubr.f32.mxu0 0.0
  %2794 = vmatmul.mubr.f32.gmra.mrb[0].mxu0 %v2692
  %v2795 = vpop.f32.mrb[0].mxu0
  %v2796 = vadd.f32 0.0, %v2795
  %v2797 = vpop.f32.mrb[0].mxu0
  %2798 = vdwg.mxu0
  %v2799 = vadd.f32 %v2522, %v2761
  %v2800 = vadd.f32 %v2523, %v2766
  %v2801 = vadd.f32 %v2524, %v2771
  %v2802 = vadd.f32 %v2525, %v2776
  %v2803 = vadd.f32 %v2526, %v2781
  %v2804 = vadd.f32 %v2527, %v2786
  %v2805 = vadd.f32 %v2528, %v2791
  %v2806 = vadd.f32 %v2529, %v2796
  %v2807 = vmul.f32 %v2799, %v63
  %v2808 = vmul.f32 %v2800, %v64
  %v2809 = vmul.f32 %v2801, %v65
  %v2810 = vmul.f32 %v2802, %v66
  %v2811 = vmul.f32 %v2803, %v67
  %v2812 = vmul.f32 %v2804, %v68
  %v2813 = vmul.f32 %v2805, %v69
  %v2814 = vmul.f32 %v2806, %v70
  %v2815 = vadd.f32 %v2807, %v2808
  %v2816 = vadd.f32 %v2815, %v2809
  %v2817 = vadd.f32 %v2816, %v2810
  %v2818 = vadd.f32 %v2817, %v2811
  %v2819 = vadd.f32 %v2818, %v2812
  %v2820 = vadd.f32 %v2819, %v2813
  %v2821 = vadd.f32 %v2820, %v2814
  %v2822 = vrot.slane %v2821, 4
  %v2823 = vadd.f32 %v2821, %v2822
  %v2824 = vrot.slane %v2823, 2
  %v2825 = vadd.f32 %v2823, %v2824
  %v2826 = vrot.slane %v2825, 1
  %v2827 = vadd.f32 %v2825, %v2826
  %v2828 = vmul.f32 %v2827, 0.016666668
  %v2829 = vsub.f32 %v2799, %v2828
  %v2830 = vsub.f32 %v2800, %v2828
  %v2831 = vsub.f32 %v2801, %v2828
  %v2832 = vsub.f32 %v2802, %v2828
  %v2833 = vsub.f32 %v2803, %v2828
  %v2834 = vsub.f32 %v2804, %v2828
  %v2835 = vsub.f32 %v2805, %v2828
  %v2836 = vsub.f32 %v2806, %v2828
  %v2837 = vmul.f32 %v2829, %v63
  %v2838 = vmul.f32 %v2830, %v64
  %v2839 = vmul.f32 %v2831, %v65
  %v2840 = vmul.f32 %v2832, %v66
  %v2841 = vmul.f32 %v2833, %v67
  %v2842 = vmul.f32 %v2834, %v68
  %v2843 = vmul.f32 %v2835, %v69
  %v2844 = vmul.f32 %v2836, %v70
  %v2845 = vmul.f32 %v2837, %v2837
  %v2846 = vmul.f32 %v2838, %v2838
  %v2847 = vmul.f32 %v2839, %v2839
  %v2848 = vmul.f32 %v2840, %v2840
  %v2849 = vmul.f32 %v2841, %v2841
  %v2850 = vmul.f32 %v2842, %v2842
  %v2851 = vmul.f32 %v2843, %v2843
  %v2852 = vmul.f32 %v2844, %v2844
  %v2853 = vadd.f32 %v2845, %v2846
  %v2854 = vadd.f32 %v2853, %v2847
  %v2855 = vadd.f32 %v2854, %v2848
  %v2856 = vadd.f32 %v2855, %v2849
  %v2857 = vadd.f32 %v2856, %v2850
  %v2858 = vadd.f32 %v2857, %v2851
  %v2859 = vadd.f32 %v2858, %v2852
  %v2860 = vrot.slane %v2859, 4
  %v2861 = vadd.f32 %v2859, %v2860
  %v2862 = vrot.slane %v2861, 2
  %v2863 = vadd.f32 %v2861, %v2862
  %v2864 = vrot.slane %v2863, 1
  %v2865 = vadd.f32 %v2863, %v2864
  %v2866 = vmul.f32 %v2865, 0.016666668
  %v2867 = vld [vmem:[%s6] sm:$0x1]
  %v2868 = vadd.f32 %v2866, 1e-05
  %v2869 = vrsqrt.pop %v2868
  %v2870 = vmul.f32 %v2867, %v2869
  %v2872 = vlaneseq
  %v2873 = vshrl.u32 %v2872, 7
  %v2874 = vsub.s32 0, %v2873
  %v2875 = vrot.slane %v2870, %v2874
  %v2877 = vmul.f32 %v2829, %v2875
  %v2878 = vmul.f32 %v2830, %v2875
  %v2879 = vmul.f32 %v2831, %v2875
  %v2880 = vmul.f32 %v2832, %v2875
  %v2881 = vmul.f32 %v2833, %v2875
  %v2882 = vmul.f32 %v2834, %v2875
  %v2883 = vmul.f32 %v2835, %v2875
  %v2884 = vmul.f32 %v2836, %v2875
  %v2885 = vld [vmem:[%s7] sm:$0x1]
  %v2887 = vlaneseq
  %v2888 = vshrl.u32 %v2887, 7
  %v2889 = vsub.s32 0, %v2888
  %v2890 = vrot.slane %v2885, %v2889
  %v2892 = vadd.f32 %v2877, %v2890
  %v2893 = vadd.f32 %v2878, %v2890
  %v2894 = vadd.f32 %v2879, %v2890
  %v2895 = vadd.f32 %v2880, %v2890
  %v2896 = vadd.f32 %v2881, %v2890
  %v2897 = vadd.f32 %v2882, %v2890
  %v2898 = vadd.f32 %v2883, %v2890
  %v2899 = vadd.f32 %v2884, %v2890
  %v2900 = vld [vmem:[%s8] sm:$0xff]
  %v2901 = vld [vmem:[%s8 + $0x8] sm:$0xff]
  %v2902 = vld [vmem:[%s8 + $0x10] sm:$0xff]
  %v2903 = vld [vmem:[%s8 + $0x18] sm:$0xff]
  %v2904 = vld [vmem:[%s8 + $0x20] sm:$0xff]
  %v2905 = vld [vmem:[%s8 + $0x28] sm:$0xff]
  %v2906 = vld [vmem:[%s8 + $0x30] sm:$0xff]
  %v2907 = vld [vmem:[%s8 + $0x38] sm:$0xff]
  %v2908 = vld [vmem:[%s9] sm:$0xff]
  %v2909 = vld [vmem:[%s10] sm:$0x1]
  %v2911 = vlaneseq
  %v2912 = vshrl.u32 %v2911, 7
  %v2913 = vsub.s32 0, %v2912
  %v2914 = vrot.slane %v2909, %v2913
  %v2917 = vsel %vm221, %v2900, 0
  %v2920 = vsel %vm221, %v2901, 0
  %v2923 = vsel %vm221, %v2902, 0
  %v2926 = vsel %vm221, %v2903, 0
  %v2929 = vsel %vm221, %v2904, 0
  %v2932 = vsel %vm221, %v2905, 0
  %v2935 = vsel %vm221, %v2906, 0
  %v2938 = vsel %vm221, %v2907, 0
  %2940 = vmatprep.subr.mxu0 0.0
  %2941 = vmatpush1.msra.mxu0 %v2908
  %2942 = vmatprep.subr.mxu0 0.0
  %2943 = vmatpush1.msra.mxu0 0.0
  %2944 = vmatprep.subr.mxu0 0.0
  %2945 = vmatpush1.msra.mxu0 0.0
  %2946 = vmatprep.subr.mxu0 0.0
  %2947 = vmatpush1.msra.mxu0 0.0
  %2948 = vmatprep.subr.mxu0 0.0
  %2949 = vmatpush1.msra.mxu0 0.0
  %2950 = vmatprep.subr.mxu0 0.0
  %2951 = vmatpush1.msra.mxu0 0.0
  %2952 = vmatprep.subr.mxu0 0.0
  %2953 = vmatpush1.msra.mxu0 0.0
  %2954 = vmatprep.subr.mxu0 0.0
  %2955 = vmatpush1.msra.mxu0 0.0
  %2956 = vmatprep.subr.mxu0 0.0
  %2957 = vmatpush1.msra.mxu0 0.0
  %2958 = vmatprep.subr.mxu0 0.0
  %2959 = vmatpush1.msra.mxu0 0.0
  %2960 = vmatprep.subr.mxu0 0.0
  %2961 = vmatpush1.msra.mxu0 0.0
  %2962 = vmatprep.subr.mxu0 0.0
  %2963 = vmatpush1.msra.mxu0 0.0
  %2964 = vmatprep.subr.mxu0 0.0
  %2965 = vmatpush1.msra.mxu0 0.0
  %2966 = vmatprep.subr.mxu0 0.0
  %2967 = vmatpush1.msra.mxu0 0.0
  %2968 = vmatprep.subr.mxu0 0.0
  %2969 = vmatpush1.msra.mxu0 0.0
  %2970 = vmatprep.subr.mxu0 0.0
  %2971 = vmatpush1.msra.mxu0 0.0
  %2972 = vmatprep.subr.mxu0 0.0
  %2973 = vmatpush1.msra.mxu0 0.0
  %2974 = vmatprep.subr.mxu0 0.0
  %2975 = vmatpush1.msra.mxu0 0.0
  %2976 = vmatprep.subr.mxu0 0.0
  %2977 = vmatpush1.msra.mxu0 0.0
  %2978 = vmatprep.subr.mxu0 0.0
  %2979 = vmatpush1.msra.mxu0 0.0
  %2980 = vmatprep.subr.mxu0 0.0
  %2981 = vmatpush1.msra.mxu0 0.0
  %2982 = vmatprep.subr.mxu0 0.0
  %2983 = vmatpush1.msra.mxu0 0.0
  %2984 = vmatprep.subr.mxu0 0.0
  %2985 = vmatpush1.msra.mxu0 0.0
  %2986 = vmatprep.subr.mxu0 0.0
  %2987 = vmatpush1.msra.mxu0 0.0
  %2988 = vmatprep.subr.mxu0 0.0
  %2989 = vmatpush1.msra.mxu0 0.0
  %2990 = vmatprep.subr.mxu0 0.0
  %2991 = vmatpush1.msra.mxu0 0.0
  %2992 = vmatprep.subr.mxu0 0.0
  %2993 = vmatpush1.msra.mxu0 0.0
  %2994 = vmatprep.subr.mxu0 0.0
  %2995 = vmatpush1.msra.mxu0 0.0
  %2996 = vmatprep.subr.mxu0 0.0
  %2997 = vmatpush1.msra.mxu0 0.0
  %2998 = vmatprep.subr.mxu0 0.0
  %2999 = vmatpush1.msra.mxu0 0.0
  %3000 = vmatprep.subr.mxu0 0.0
  %3001 = vmatpush1.msra.mxu0 0.0
  %3002 = vmatprep.subr.mxu0 0.0
  %3003 = vmatpush1.msra.mxu0 0.0
  %3004 = vmatprep.mubr.f32.mxu0 0.0
  %3005 = vmatmul.mubr.f32.gmra.mrb[0].mxu0 %v2917
  %v3006 = vpop.f32.mrb[0].mxu0
  %v3007 = vadd.f32 %v2914, %v3006
  %v3008 = vpop.f32.mrb[0].mxu0
  %3009 = vmatprep.mubr.f32.mxu0 0.0
  %3010 = vmatmul.mubr.f32.gmra.mrb[0].mxu0 %v2920
  %v3011 = vpop.f32.mrb[0].mxu0
  %v3012 = vadd.f32 %v2914, %v3011
  %v3013 = vpop.f32.mrb[0].mxu0
  %3014 = vmatprep.mubr.f32.mxu0 0.0
  %3015 = vmatmul.mubr.f32.gmra.mrb[0].mxu0 %v2923
  %v3016 = vpop.f32.mrb[0].mxu0
  %v3017 = vadd.f32 %v2914, %v3016
  %v3018 = vpop.f32.mrb[0].mxu0
  %3019 = vmatprep.mubr.f32.mxu0 0.0
  %3020 = vmatmul.mubr.f32.gmra.mrb[0].mxu0 %v2926
  %v3021 = vpop.f32.mrb[0].mxu0
  %v3022 = vadd.f32 %v2914, %v3021
  %v3023 = vpop.f32.mrb[0].mxu0
  %3024 = vmatprep.mubr.f32.mxu0 0.0
  %3025 = vmatmul.mubr.f32.gmra.mrb[0].mxu0 %v2929
  %v3026 = vpop.f32.mrb[0].mxu0
  %v3027 = vadd.f32 %v2914, %v3026
  %v3028 = vpop.f32.mrb[0].mxu0
  %3029 = vmatprep.mubr.f32.mxu0 0.0
  %3030 = vmatmul.mubr.f32.gmra.mrb[0].mxu0 %v2932
  %v3031 = vpop.f32.mrb[0].mxu0
  %v3032 = vadd.f32 %v2914, %v3031
  %v3033 = vpop.f32.mrb[0].mxu0
  %3034 = vmatprep.mubr.f32.mxu0 0.0
  %3035 = vmatmul.mubr.f32.gmra.mrb[0].mxu0 %v2935
  %v3036 = vpop.f32.mrb[0].mxu0
  %v3037 = vadd.f32 %v2914, %v3036
  %v3038 = vpop.f32.mrb[0].mxu0
  %3039 = vmatprep.mubr.f32.mxu0 0.0
  %3040 = vmatmul.mubr.f32.gmra.mrb[0].mxu0 %v2938
  %v3041 = vpop.f32.mrb[0].mxu0
  %v3042 = vadd.f32 %v2914, %v3041
  %v3043 = vpop.f32.mrb[0].mxu0
  %3044 = vdwg.mxu0
  %v3045 = vadd.f32 %v2892, %v3007
  %v3046 = vadd.f32 %v2893, %v3012
  %v3047 = vadd.f32 %v2894, %v3017
  %v3048 = vadd.f32 %v2895, %v3022
  %v3049 = vadd.f32 %v2896, %v3027
  %v3050 = vadd.f32 %v2897, %v3032
  %v3051 = vadd.f32 %v2898, %v3037
  %v3052 = vadd.f32 %v2899, %v3042
  %v3053 = vmax.f32 %v3045, 0.0
  %v3054 = vmax.f32 %v3046, 0.0
  %v3055 = vmax.f32 %v3047, 0.0
  %v3056 = vmax.f32 %v3048, 0.0
  %v3057 = vmax.f32 %v3049, 0.0
  %v3058 = vmax.f32 %v3050, 0.0
  %v3059 = vmax.f32 %v3051, 0.0
  %v3060 = vmax.f32 %v3052, 0.0
  %3061 = vst [vmem:[%s11] sm:$0xff] %v3053
  %3062 = vst [vmem:[%s11 + $0x8] sm:$0xff] %v3054
  %3063 = vst [vmem:[%s11 + $0x10] sm:$0xff] %v3055
  %3064 = vst [vmem:[%s11 + $0x18] sm:$0xff] %v3056
  %3065 = vst [vmem:[%s11 + $0x20] sm:$0xff] %v3057
  %3066 = vst [vmem:[%s11 + $0x28] sm:$0xff] %v3058
  %3067 = vst [vmem:[%s11 + $0x30] sm:$0xff] %v3059
  %3068 = vst [vmem:[%s11 + $0x38] sm:$0xff] %v3060
  // Predicated region
  $region46: #{residual_forward.1} parent=0 // pred_check
    _
  $region47: #{residual_forward.1} parent=0 // pred_check_branch
    %3070 = sbr.rel (0) target = $region49
  $region48: #{residual_forward.1} parent=0 // pred_region
    _
  $region49: #{residual_forward.1} parent=0 // pred_fallthru
    _
  // Predicated region
  $region50: #{residual_forward.1} parent=0 // pred_check
    _
  $region51: #{residual_forward.1} parent=0 // pred_check_branch
    %3072 = sbr.rel (0) target = $region53
  $region52: #{residual_forward.1} parent=0 // pred_region
    _
  $region53: #{residual_forward.1} parent=0 // pred_fallthru
    _

</llo_original>
